<compile_context>
chip_gen: v5e
topology: v5e:2x2
jax: 0.10.0
libtpu: 0.0.40
codegen_flags: <defaults>
</compile_context>

<pallas_src>
import math

import jax
import jax.numpy as jnp
from jax.experimental import pallas as pl
from jax.experimental.pallas import tpu as pltpu

# ---- model config (small, consistent with MixerModel / Mamba defaults) ----
D_MODEL = 32
N_LAYER = 2
EXPAND = 2
D_INNER = EXPAND * D_MODEL            # 64
D_STATE = 16
D_CONV = 4
DT_RANK = math.ceil(D_MODEL / 16)     # 2
EPS = 1e-5
B, L = 2, 8

LANES = 128
assert B * D_INNER == LANES           # batch lane-packing fills a full vreg
# TODO(synk): kernel assumes B * D_INNER == 128; other batch sizes need a different packing.

# ---- W slab (bf16 MXU weights), rows per layer ----
#   [0, 32)   : in_proj fused (D, 2*Di)   = (32, 128)
#   [32, 96)  : out_proj      (Di, [D|0]) = (64, 128)
WO_IN = 0
WO_OUT = D_MODEL
W_LAYER_ROWS = D_MODEL + D_INNER      # 96
W_ROWS = N_LAYER * W_LAYER_ROWS       # 192

# ---- S slab (f32 scan / conv / norm / x_proj params), rows per layer ----
SO_XP = 0                        # (Di, [dt_fused 64 | B 16 | C 16 | pad]) f32 x_proj+dt_proj
SO_A = SO_XP + D_INNER           # (N, 128)  A = -exp(A_log).T, lane-replicated x2
SO_CONVW = SO_A + D_STATE        # (K, Di)
SO_CONVB = SO_CONVW + D_CONV     # (1, Di)
SO_DTB = SO_CONVB + 1            # (1, 128)  lane-replicated x2
SO_D = SO_DTB + 1                # (1, 128)  lane-replicated x2
SO_LNW = SO_D + 1                # (1, D)
SO_LNB = SO_LNW + 1              # (1, D)
S_LAYER_ROWS = 96                # 89 used, padded to a sublane multiple
S_FINAL = N_LAYER * S_LAYER_ROWS       # rows [S_FINAL, S_FINAL+2): final LayerNorm w, b
S_ROWS = S_FINAL + 8


# ---------------- shared math ----------------
def _layernorm(x, w, b):
    mean = jnp.mean(x, axis=-1, keepdims=True)
    var = jnp.mean((x - mean) ** 2, axis=-1, keepdims=True)
    return (x - mean) * jax.lax.rsqrt(var + EPS) * w + b


def _silu(x):
    return x * jax.nn.sigmoid(x)


def _pack_batch_lanes(a):
    """(B*L, W) batch-major rows -> (L, B*W): batch halves side by side on lanes."""
    return jnp.concatenate([a[b * L:(b + 1) * L, :] for b in range(B)], axis=1)


def _unpack_batch_lanes(a):
    """(L, B*W) -> (B*L, W) batch-major rows."""
    w = a.shape[1] // B
    return jnp.concatenate([a[:, b * w:(b + 1) * w] for b in range(B)], axis=0)


# ---------------- fused Pallas kernel ----------------
def mixer_kernel(x_ref, w_ref, s_ref, out_ref, conv_ref, state_ref):
    hs = x_ref[...]                              # (B*L, D) f32, batch-major rows
    res = jnp.zeros_like(hs)                     # residual=None in PyTorch for layer 0

    for li in range(N_LAYER):                    # whole model fused; hs/res never leave VMEM
        wo = li * W_LAYER_ROWS
        so = li * S_LAYER_ROWS
        in_w = w_ref[wo + WO_IN:wo + WO_IN + D_MODEL, :]                 # (32,128) bf16
        out_w = w_ref[wo + WO_OUT:wo + WO_OUT + D_INNER, :]              # (64,128) bf16
        xp_w = s_ref[so + SO_XP:so + SO_XP + D_INNER, :]                 # (64,128) f32
        A_rep = s_ref[so + SO_A:so + SO_A + D_STATE, :]                  # (16,128) replicated
        conv_w = s_ref[so + SO_CONVW:so + SO_CONVW + D_CONV, :D_INNER]   # (4,64)
        conv_b = s_ref[so + SO_CONVB:so + SO_CONVB + 1, :D_INNER]        # (1,64)
        dt_b = s_ref[so + SO_DTB:so + SO_DTB + 1, :]                     # (1,128) replicated
        D_rep = s_ref[so + SO_D:so + SO_D + 1, :]                        # (1,128) replicated
        ln_w = s_ref[so + SO_LNW:so + SO_LNW + 1, :D_MODEL]
        ln_b = s_ref[so + SO_LNB:so + SO_LNB + 1, :D_MODEL]

        # -- prenorm residual add + LayerNorm (whole batch, row-stacked) --
        residual = hs + res
        h = _layernorm(residual, ln_w, ln_b)

        # -- in_proj: one (B*L, 32) @ (32, 128) bf16 MXU matmul, split x / z --
        xz = jnp.dot(h.astype(jnp.bfloat16), in_w, preferred_element_type=jnp.float32)
        x = xz[:, :D_INNER]                                              # (B*L, Di)
        z = xz[:, D_INNER:]                                              # (B*L, Di)

        # -- causal depthwise conv: shifted windows of a zero-padded VMEM scratch --
        conv_ref[:, :D_CONV - 1, :] = jnp.zeros((B, D_CONV - 1, D_INNER), jnp.float32)
        conv_ref[:, D_CONV - 1:, :] = x.reshape(B, L, D_INNER)
        xc = conv_b + conv_ref[:, 0:L, :] * conv_w[0:1, :]
        for k in range(1, D_CONV):
            xc = xc + conv_ref[:, k:k + L, :] * conv_w[k:k + 1, :]
        x = _silu(xc).reshape(B * L, D_INNER)                            # (B*L, Di)

        # -- fused x_proj (+ folded dt_proj) kept in f32 (dt path is precision sensitive) --
        dbc = jnp.dot(x, xp_w, preferred_element_type=jnp.float32)       # (B*L, 128)
        Bm = dbc[:, D_INNER:D_INNER + D_STATE]                           # (B*L, N)
        Cm = dbc[:, D_INNER + D_STATE:D_INNER + 2 * D_STATE]             # (B*L, N)

        # -- lane-pack the batch: scan/EUP/VPU math runs on full 128-lane vregs --
        x_lp = _pack_batch_lanes(x)                                      # (L, 128)
        z_lp = _pack_batch_lanes(z)                                      # (L, 128)
        dt_lp = jax.nn.softplus(_pack_batch_lanes(dbc[:, :D_INNER]) + dt_b)
        dA_all = jnp.exp(dt_lp[:, None, :] * A_rep[None, :, :])          # (L, N, 128)
        B_exp = jnp.concatenate(
            [jnp.broadcast_to(Bm[b * L:(b + 1) * L, :, None], (L, D_STATE, D_INNER))
             for b in range(B)], axis=-1)                                # (L, N, 128)
        dBx_all = B_exp * (dt_lp * x_lp)[:, None, :]                     # (L, N, 128)

        # -- selective scan: only s = dA*s + dBx stays on the serial chain; states are
        #    staged into VMEM so the C-contraction happens after the loop (off-chain) --
        state = jnp.zeros((D_STATE, B * D_INNER), jnp.float32)
        for t in range(L):                                               # static unroll: L small
            state = dA_all[t] * state + dBx_all[t]
            state_ref[t] = state
        S_all = state_ref[...]                                           # (L, N, 128)
        C_exp = jnp.concatenate(
            [jnp.broadcast_to(Cm[b * L:(b + 1) * L, :, None], (L, D_STATE, D_INNER))
             for b in range(B)], axis=-1)                                # (L, N, 128)
        y_lp = jnp.sum(C_exp * S_all, axis=1) + D_rep * x_lp             # (L, 128)
        y_lp = y_lp * _silu(z_lp)

        # -- out_proj: full zero-padded (Di,128) bf16 weight, slice the result --
        y = _unpack_batch_lanes(y_lp)                                    # (B*L, Di)
        out_full = jnp.dot(y.astype(jnp.bfloat16), out_w,
                           preferred_element_type=jnp.float32)           # (B*L, 128)
        hs = out_full[:, :D_MODEL]
        res = residual
        # TODO(synk): drop_path / drop_out_in_block are identity at inference (eval / p=0);
        # training-mode stochastic drop is not implemented.

    fw = s_ref[S_FINAL:S_FINAL + 1, :D_MODEL]
    fb = s_ref[S_FINAL + 1:S_FINAL + 2, :D_MODEL]
    fin = _layernorm(hs + res, fw, fb)                                   # (B*L, D)
    # Lane-packed store (L, B*D) = (8, 64): widest safe store for this 512-element output.
    out_ref[...] = _pack_batch_lanes(fin)


@jax.jit
def mixer_model_forward(x, w_slab, s_slab):
    Bsz, Lq, D = x.shape
    x2 = x.reshape(Bsz * Lq, D)                  # batch-major row stacking
    out2 = pl.pallas_call(
        mixer_kernel,
        out_shape=jax.ShapeDtypeStruct((Lq, Bsz * D), jnp.float32),
        grid=(1,),                               # single step: whole batch in one invocation
        in_specs=[
            pl.BlockSpec((Bsz * Lq, D), lambda i: (0, 0)),
            pl.BlockSpec(w_slab.shape, lambda i: (0, 0)),
            pl.BlockSpec(s_slab.shape, lambda i: (0, 0)),
        ],
        out_specs=pl.BlockSpec((Lq, Bsz * D), lambda i: (0, 0)),
        scratch_shapes=[
            pltpu.VMEM((Bsz, Lq + D_CONV - 1, D_INNER), jnp.float32),    # conv pad buffer
            pltpu.VMEM((Lq, D_STATE, Bsz * D_INNER), jnp.float32),       # per-step scan states
        ],
        compiler_params=pltpu.CompilerParams(dimension_semantics=("arbitrary",)),
    )(x2, w_slab, s_slab)
    # un-pack the lane-packed output back to (B, L, D) outside the kernel
    return out2.reshape(Lq, Bsz, D).transpose(1, 0, 2)


# ---------------- pure-JAX reference (same math, same packed params, no Pallas) ----------
def extract_layer_params(w, s, li):
    wo = li * W_LAYER_ROWS
    so = li * S_LAYER_ROWS
    return {
        "in_w":   w[wo + WO_IN:wo + WO_IN + D_MODEL, :],
        "out_w":  w[wo + WO_OUT:wo + WO_OUT + D_INNER, :],
        "xp_w":   s[so + SO_XP:so + SO_XP + D_INNER, :],
        "A_T":    s[so + SO_A:so + SO_A + D_STATE, :D_INNER],
        "conv_w": s[so + SO_CONVW:so + SO_CONVW + D_CONV, :D_INNER],
        "conv_b": s[so + SO_CONVB:so + SO_CONVB + 1, :D_INNER],
        "dt_b":   s[so + SO_DTB:so + SO_DTB + 1, :D_INNER],
        "D_row":  s[so + SO_D:so + SO_D + 1, :D_INNER],
        "ln_w":   s[so + SO_LNW:so + SO_LNW + 1, :D_MODEL],
        "ln_b":   s[so + SO_LNB:so + SO_LNB + 1, :D_MODEL],
    }


def _ref_block(hs, res, p):
    Lq = hs.shape[0]
    residual = hs + res
    h = _layernorm(residual, p["ln_w"], p["ln_b"])
    xz = jnp.dot(h.astype(jnp.bfloat16), p["in_w"], preferred_element_type=jnp.float32)
    x = xz[:, :D_INNER]
    z = xz[:, D_INNER:]
    xpad = jnp.concatenate([jnp.zeros((D_CONV - 1, D_INNER), jnp.float32), x], axis=0)
    xc = p["conv_b"]
    for k in range(D_CONV):
        xc = xc + xpad[k:k + Lq, :] * p["conv_w"][k:k + 1, :]
    x = _silu(xc)
    dbc = jnp.dot(x, p["xp_w"], preferred_element_type=jnp.float32)
    dt = jax.nn.softplus(dbc[:, :D_INNER] + p["dt_b"])
    Bm = dbc[:, D_INNER:D_INNER + D_STATE]
    Cm = dbc[:, D_INNER + D_STATE:D_INNER + 2 * D_STATE]
    dA = jnp.exp(dt[:, None, :] * p["A_T"][None, :, :])
    dBx = Bm[:, :, None] * (dt * x)[:, None, :]
    s = jnp.zeros((D_STATE, D_INNER), jnp.float32)
    ys = []
    for t in range(Lq):
        s = dA[t] * s + dBx[t]
        ys.append(jnp.sum(Cm[t][:, None] * s, axis=0))
    y = jnp.stack(ys, axis=0) + p["D_row"] * x
    y = y * _silu(z)
    out_full = jnp.dot(y.astype(jnp.bfloat16), p["out_w"], preferred_element_type=jnp.float32)
    return out_full[:, :D_MODEL], residual


def reference_forward(x, w_slab, s_slab):
    outs = []
    for bidx in range(x.shape[0]):
        hs = x[bidx]
        res = jnp.zeros_like(hs)
        for li in range(N_LAYER):
            p = extract_layer_params(w_slab, s_slab, li)
            hs, res = _ref_block(hs, res, p)
        fw = s_slab[S_FINAL:S_FINAL + 1, :D_MODEL]
        fb = s_slab[S_FINAL + 1:S_FINAL + 2, :D_MODEL]
        outs.append(_layernorm(hs + res, fw, fb))
    return jnp.stack(outs, axis=0)


# ---------------- deterministic parameter init + slab packing ----------------
def init_layer_raw(key):
    ks = jax.random.split(key, 7)

    def uniform(k, shape, scale):
        return jax.random.uniform(k, shape, jnp.float32, -scale, scale)

    in_proj = uniform(ks[0], (2 * D_INNER, D_MODEL), 1.0 / math.sqrt(D_MODEL))
    conv_w = uniform(ks[1], (D_INNER, D_CONV), 1.0 / math.sqrt(D_CONV))
    conv_b = uniform(ks[2], (D_INNER,), 1.0 / math.sqrt(D_CONV))
    x_proj = uniform(ks[3], (DT_RANK + 2 * D_STATE, D_INNER), 1.0 / math.sqrt(D_INNER))
    dt_w = uniform(ks[4], (D_INNER, DT_RANK), DT_RANK ** -0.5)
    u = jax.random.uniform(ks[5], (D_INNER,), jnp.float32)
    dt0 = jnp.exp(u * (math.log(0.1) - math.log(1e-3)) + math.log(1e-3))
    dt_b = dt0 + jnp.log(-jnp.expm1(-dt0))          # inverse softplus of dt init
    A_log = jnp.log(jnp.broadcast_to(
        jnp.arange(1, D_STATE + 1, dtype=jnp.float32), (D_INNER, D_STATE)))
    out_w = uniform(ks[6], (D_MODEL, D_INNER),
                    math.sqrt(3.0) / math.sqrt(D_INNER)) / math.sqrt(N_LAYER)
    return dict(in_proj=in_proj, conv_w=conv_w, conv_b=conv_b, x_proj=x_proj,
                dt_w=dt_w, dt_b=dt_b, A_log=A_log, out_w=out_w,
                D=jnp.ones((D_INNER,), jnp.float32),        # learned values accepted here
                ln_w=jnp.ones((D_MODEL,), jnp.float32),
                ln_b=jnp.zeros((D_MODEL,), jnp.float32))


def pack_params(raw_layers, norm_w, norm_b):
    """Pack per-layer params into a bf16 MXU-weight slab and an f32 scan/norm slab."""
    def pad_cols(a):
        return jnp.pad(a, ((0, 0), (0, LANES - a.shape[1])))

    def rep2(a):                                    # replicate across both 64-lane halves
        return jnp.concatenate([a, a], axis=1)

    w_parts, s_parts = [], []
    for r in raw_layers:
        in_w = r["in_proj"].T                                        # (32,128)
        out_w = pad_cols(r["out_w"].T)                               # (64,128) cols[:32] valid
        w_parts.append(jnp.concatenate([in_w, out_w], axis=0).astype(jnp.bfloat16))

        xp_dt = r["x_proj"][:DT_RANK].T                              # (Di, R)
        xp_B = r["x_proj"][DT_RANK:DT_RANK + D_STATE].T              # (Di, N)
        xp_C = r["x_proj"][DT_RANK + D_STATE:].T                     # (Di, N)
        w_dt_fused = xp_dt @ r["dt_w"].T                             # (Di, Di): x_proj@dt_proj
        xp_w = pad_cols(jnp.concatenate([w_dt_fused, xp_B, xp_C], axis=1))   # (64,128) f32
        A_T = (-jnp.exp(r["A_log"])).T                               # (N, Di)
        s_layer = jnp.concatenate([
            xp_w,
            rep2(A_T),                                               # lane-replicated x2
            pad_cols(r["conv_w"].T),
            pad_cols(r["conv_b"][None, :]),
            rep2(r["dt_b"][None, :]),
            rep2(r["D"][None, :]),
            pad_cols(r["ln_w"][None, :]),
            pad_cols(r["ln_b"][None, :]),
        ], axis=0)
        s_parts.append(jnp.pad(s_layer, ((0, S_LAYER_ROWS - s_layer.shape[0]), (0, 0))))

    fin = jnp.concatenate([pad_cols(norm_w[None, :]), pad_cols(norm_b[None, :])], axis=0)
    s_parts.append(jnp.pad(fin, ((0, 8 - fin.shape[0]), (0, 0))))

    w_slab = jnp.concatenate(w_parts, axis=0)                        # (W_ROWS, 128) bf16
    s_slab = jnp.concatenate(s_parts, axis=0).astype(jnp.float32)    # (S_ROWS, 128) f32
    assert w_slab.shape == (W_ROWS, LANES) and s_slab.shape == (S_ROWS, LANES)
    return w_slab, s_slab


if __name__ == "__main__":
    root = jax.random.PRNGKey(0)
    keys = jax.random.split(root, N_LAYER + 1)
    x = jax.random.normal(keys[0], (B, L, D_MODEL), jnp.float32)
    raw_layers = [init_layer_raw(k) for k in keys[1:]]
    norm_w = jnp.ones((D_MODEL,), jnp.float32)     # norm_f default affine
    norm_b = jnp.zeros((D_MODEL,), jnp.float32)
    w_slab, s_slab = pack_params(raw_layers, norm_w, norm_b)

    out = mixer_model_forward(x, w_slab, s_slab)
    out = jax.block_until_ready(out)

    ref = reference_forward(x, w_slab, s_slab)
    assert out.shape == (B, L, D_MODEL), out.shape
    assert bool(jnp.all(jnp.isfinite(out)))
    assert bool(jnp.allclose(out, ref, rtol=2e-2, atol=2e-2)), (
        f"max abs err {float(jnp.max(jnp.abs(out - ref)))}")
    print("KERNEL_OK")
</pallas_src>

<mosaic_0001>
module attributes {stable_mosaic.version = 11 : i64} {
  func.func @mixer_kernel(%arg0: i32, %arg1: memref<16x32xf32, #tpu.memory_space<vmem>>, %arg2: memref<192x128xbf16, #tpu.memory_space<vmem>>, %arg3: memref<200x128xf32, #tpu.memory_space<vmem>>, %arg4: memref<8x64xf32, #tpu.memory_space<vmem>>, %arg5: memref<2x11x64xf32, #tpu.memory_space<vmem>>, %arg6: memref<8x16x128xf32, #tpu.memory_space<vmem>>) attributes {dimension_semantics = [#tpu.dimension_semantics<arbitrary>], iteration_bounds = array<i64: 1>, scalar_prefetch = 0 : i64, scratch_operands = 2 : i64, tpu.core_type = #tpu.core_type<tc>, window_params = [{pipeline_mode = #tpu.pipeline_mode<synchronous>, transform_indices = @transform_0, window_bounds = array<i64: 16, 32>}, {pipeline_mode = #tpu.pipeline_mode<synchronous>, transform_indices = @transform_1, window_bounds = array<i64: 192, 128>}, {pipeline_mode = #tpu.pipeline_mode<synchronous>, transform_indices = @transform_2, window_bounds = array<i64: 200, 128>}, {pipeline_mode = #tpu.pipeline_mode<synchronous>, transform_indices = @transform_3, window_bounds = array<i64: 8, 64>}]} {
    %c0 = arith.constant 0 : index
    %c0_0 = arith.constant 0 : index
    %0 = vector.load %arg1[%c0, %c0_0] : memref<16x32xf32, #tpu.memory_space<vmem>>, vector<16x32xf32>
    %cst = arith.constant 0.000000e+00 : f32
    %1 = vector.broadcast %cst : f32 to vector<16x32xf32>
    %c0_1 = arith.constant 0 : index
    %c0_2 = arith.constant 0 : index
    %2 = vector.load %arg2[%c0_1, %c0_2] : memref<192x128xbf16, #tpu.memory_space<vmem>>, vector<32x128xbf16>
    %c32 = arith.constant 32 : index
    %c0_3 = arith.constant 0 : index
    %3 = vector.load %arg2[%c32, %c0_3] : memref<192x128xbf16, #tpu.memory_space<vmem>>, vector<64x128xbf16>
    %c0_4 = arith.constant 0 : index
    %c0_5 = arith.constant 0 : index
    %4 = vector.load %arg3[%c0_4, %c0_5] : memref<200x128xf32, #tpu.memory_space<vmem>>, vector<64x128xf32>
    %c64 = arith.constant 64 : index
    %c0_6 = arith.constant 0 : index
    %5 = vector.load %arg3[%c64, %c0_6] : memref<200x128xf32, #tpu.memory_space<vmem>>, vector<16x128xf32>
    %c80 = arith.constant 80 : index
    %c0_7 = arith.constant 0 : index
    %6 = vector.load %arg3[%c80, %c0_7] : memref<200x128xf32, #tpu.memory_space<vmem>>, vector<4x64xf32>
    %c84 = arith.constant 84 : index
    %c0_8 = arith.constant 0 : index
    %7 = vector.load %arg3[%c84, %c0_8] : memref<200x128xf32, #tpu.memory_space<vmem>>, vector<1x64xf32>
    %c85 = arith.constant 85 : index
    %c0_9 = arith.constant 0 : index
    %8 = vector.load %arg3[%c85, %c0_9] : memref<200x128xf32, #tpu.memory_space<vmem>>, vector<1x128xf32>
    %c86 = arith.constant 86 : index
    %c0_10 = arith.constant 0 : index
    %9 = vector.load %arg3[%c86, %c0_10] : memref<200x128xf32, #tpu.memory_space<vmem>>, vector<1x128xf32>
    %c87 = arith.constant 87 : index
    %c0_11 = arith.constant 0 : index
    %10 = vector.load %arg3[%c87, %c0_11] : memref<200x128xf32, #tpu.memory_space<vmem>>, vector<1x32xf32>
    %c88 = arith.constant 88 : index
    %c0_12 = arith.constant 0 : index
    %11 = vector.load %arg3[%c88, %c0_12] : memref<200x128xf32, #tpu.memory_space<vmem>>, vector<1x32xf32>
    %12 = arith.addf %0, %1 : vector<16x32xf32>
    %cst_13 = arith.constant dense<0.000000e+00> : vector<16xf32>
    %13 = vector.multi_reduction <add>, %12, %cst_13 [1] : vector<16x32xf32> to vector<16xf32>
    %14 = vector.shape_cast %13 : vector<16xf32> to vector<16x1xf32>
    %cst_14 = arith.constant 3.200000e+01 : f32
    %15 = vector.broadcast %cst_14 : f32 to vector<16x1xf32>
    %16 = arith.divf %14, %15 : vector<16x1xf32>
    %17 = vector.broadcast %16 : vector<16x1xf32> to vector<16x32xf32>
    %18 = arith.subf %12, %17 : vector<16x32xf32>
    %19 = arith.mulf %18, %18 : vector<16x32xf32>
    %cst_15 = arith.constant dense<0.000000e+00> : vector<16xf32>
    %20 = vector.multi_reduction <add>, %19, %cst_15 [1] : vector<16x32xf32> to vector<16xf32>
    %21 = vector.shape_cast %20 : vector<16xf32> to vector<16x1xf32>
    %cst_16 = arith.constant 3.200000e+01 : f32
    %22 = vector.broadcast %cst_16 : f32 to vector<16x1xf32>
    %23 = arith.divf %21, %22 : vector<16x1xf32>
    %24 = vector.broadcast %16 : vector<16x1xf32> to vector<16x32xf32>
    %25 = arith.subf %12, %24 : vector<16x32xf32>
    %cst_17 = arith.constant 9.99999974E-6 : f32
    %26 = vector.broadcast %cst_17 : f32 to vector<16x1xf32>
    %27 = arith.addf %23, %26 : vector<16x1xf32>
    %28 = math.rsqrt %27 : vector<16x1xf32>
    %29 = vector.broadcast %28 : vector<16x1xf32> to vector<16x32xf32>
    %30 = arith.mulf %25, %29 : vector<16x32xf32>
    %31 = vector.broadcast %10 : vector<1x32xf32> to vector<16x32xf32>
    %32 = arith.mulf %30, %31 : vector<16x32xf32>
    %33 = vector.broadcast %11 : vector<1x32xf32> to vector<16x32xf32>
    %34 = arith.addf %32, %33 : vector<16x32xf32>
    %35 = arith.truncf %34 : vector<16x32xf32> to vector<16x32xbf16>
    %cst_18 = arith.constant dense<0.000000e+00> : vector<16x128xf32>
    %36 = tpu.matmul %35, %2, %cst_18 {dimension_numbers = #tpu.dot_dimension_numbers<[1], [0], [0], [1], [0, 0, 1, 1], [], []>} : vector<16x32xbf16>, vector<32x128xbf16>, vector<16x128xf32> -> vector<16x128xf32>
    %37 = vector.extract_strided_slice %36 {offsets = [0, 0], sizes = [16, 64], strides = [1, 1]} : vector<16x128xf32> to vector<16x64xf32>
    %38 = vector.extract_strided_slice %36 {offsets = [0, 64], sizes = [16, 64], strides = [1, 1]} : vector<16x128xf32> to vector<16x64xf32>
    %cst_19 = arith.constant 0.000000e+00 : f32
    %39 = vector.broadcast %cst_19 : f32 to vector<2x3x64xf32>
    %c0_20 = arith.constant 0 : index
    %c0_21 = arith.constant 0 : index
    %c0_22 = arith.constant 0 : index
    %40 = vector.load %arg5[%c0_20, %c0_21, %c0_22] : memref<2x11x64xf32, #tpu.memory_space<vmem>>, vector<2x3x64xf32>
    tpu.vector_store %arg5[%c0_20, %c0_21, %c0_22], %39 {strides = array<i32>} : memref<2x11x64xf32, #tpu.memory_space<vmem>>, vector<2x3x64xf32>,
    %41 = vector.shape_cast %37 : vector<16x64xf32> to vector<2x8x64xf32>
    %c0_23 = arith.constant 0 : index
    %c3 = arith.constant 3 : index
    %c0_24 = arith.constant 0 : index
    %42 = vector.load %arg5[%c0_23, %c3, %c0_24] : memref<2x11x64xf32, #tpu.memory_space<vmem>>, vector<2x8x64xf32>
    tpu.vector_store %arg5[%c0_23, %c3, %c0_24], %41 {strides = array<i32>} : memref<2x11x64xf32, #tpu.memory_space<vmem>>, vector<2x8x64xf32>,
    %c0_25 = arith.constant 0 : index
    %c0_26 = arith.constant 0 : index
    %c0_27 = arith.constant 0 : index
    %43 = vector.load %arg5[%c0_25, %c0_26, %c0_27] : memref<2x11x64xf32, #tpu.memory_space<vmem>>, vector<2x8x64xf32>
    %44 = vector.extract_strided_slice %6 {offsets = [0, 0], sizes = [1, 64], strides = [1, 1]} : vector<4x64xf32> to vector<1x64xf32>
    %45 = vector.shape_cast %44 : vector<1x64xf32> to vector<1x1x64xf32>
    %46 = vector.broadcast %45 : vector<1x1x64xf32> to vector<2x8x64xf32>
    %47 = arith.mulf %43, %46 : vector<2x8x64xf32>
    %48 = vector.shape_cast %7 : vector<1x64xf32> to vector<1x1x64xf32>
    %49 = vector.broadcast %48 : vector<1x1x64xf32> to vector<2x8x64xf32>
    %50 = arith.addf %49, %47 : vector<2x8x64xf32>
    %c0_28 = arith.constant 0 : index
    %c1 = arith.constant 1 : index
    %c0_29 = arith.constant 0 : index
    %51 = vector.load %arg5[%c0_28, %c1, %c0_29] : memref<2x11x64xf32, #tpu.memory_space<vmem>>, vector<2x8x64xf32>
    %52 = vector.extract_strided_slice %6 {offsets = [1, 0], sizes = [1, 64], strides = [1, 1]} : vector<4x64xf32> to vector<1x64xf32>
    %53 = vector.shape_cast %52 : vector<1x64xf32> to vector<1x1x64xf32>
    %54 = vector.broadcast %53 : vector<1x1x64xf32> to vector<2x8x64xf32>
    %55 = arith.mulf %51, %54 : vector<2x8x64xf32>
    %56 = arith.addf %50, %55 : vector<2x8x64xf32>
    %c0_30 = arith.constant 0 : index
    %c2 = arith.constant 2 : index
    %c0_31 = arith.constant 0 : index
    %57 = vector.load %arg5[%c0_30, %c2, %c0_31] : memref<2x11x64xf32, #tpu.memory_space<vmem>>, vector<2x8x64xf32>
    %58 = vector.extract_strided_slice %6 {offsets = [2, 0], sizes = [1, 64], strides = [1, 1]} : vector<4x64xf32> to vector<1x64xf32>
    %59 = vector.shape_cast %58 : vector<1x64xf32> to vector<1x1x64xf32>
    %60 = vector.broadcast %59 : vector<1x1x64xf32> to vector<2x8x64xf32>
    %61 = arith.mulf %57, %60 : vector<2x8x64xf32>
    %62 = arith.addf %56, %61 : vector<2x8x64xf32>
    %c0_32 = arith.constant 0 : index
    %c3_33 = arith.constant 3 : index
    %c0_34 = arith.constant 0 : index
    %63 = vector.load %arg5[%c0_32, %c3_33, %c0_34] : memref<2x11x64xf32, #tpu.memory_space<vmem>>, vector<2x8x64xf32>
    %64 = vector.extract_strided_slice %6 {offsets = [3, 0], sizes = [1, 64], strides = [1, 1]} : vector<4x64xf32> to vector<1x64xf32>
    %65 = vector.shape_cast %64 : vector<1x64xf32> to vector<1x1x64xf32>
    %66 = vector.broadcast %65 : vector<1x1x64xf32> to vector<2x8x64xf32>
    %67 = arith.mulf %63, %66 : vector<2x8x64xf32>
    %68 = arith.addf %62, %67 : vector<2x8x64xf32>
    %69 = arith.negf %68 : vector<2x8x64xf32>
    %70 = math.exp %69 : vector<2x8x64xf32>
    %cst_35 = arith.constant 1.000000e+00 : f32
    %71 = vector.broadcast %cst_35 : f32 to vector<2x8x64xf32>
    %72 = arith.addf %71, %70 : vector<2x8x64xf32>
    %73 = arith.divf %71, %72 : vector<2x8x64xf32>
    %74 = arith.mulf %68, %73 : vector<2x8x64xf32>
    %75 = vector.shape_cast %74 : vector<2x8x64xf32> to vector<16x64xf32>
    %cst_36 = arith.constant dense<0.000000e+00> : vector<16x128xf32>
    %76 = tpu.matmul %75, %4, %cst_36 {dimension_numbers = #tpu.dot_dimension_numbers<[1], [0], [0], [1], [0, 0, 1, 1], [], []>} : vector<16x64xf32>, vector<64x128xf32>, vector<16x128xf32> -> vector<16x128xf32>
    %77 = vector.extract_strided_slice %76 {offsets = [0, 64], sizes = [16, 16], strides = [1, 1]} : vector<16x128xf32> to vector<16x16xf32>
    %78 = vector.extract_strided_slice %76 {offsets = [0, 80], sizes = [16, 16], strides = [1, 1]} : vector<16x128xf32> to vector<16x16xf32>
    %79 = vector.extract_strided_slice %75 {offsets = [0, 0], sizes = [8, 64], strides = [1, 1]} : vector<16x64xf32> to vector<8x64xf32>
    %80 = vector.extract_strided_slice %75 {offsets = [8, 0], sizes = [8, 64], strides = [1, 1]} : vector<16x64xf32> to vector<8x64xf32>
    %81 = tpu.concatenate %79, %80 in 1 : vector<8x64xf32>, vector<8x64xf32> -> vector<8x128xf32>
    %82 = vector.extract_strided_slice %38 {offsets = [0, 0], sizes = [8, 64], strides = [1, 1]} : vector<16x64xf32> to vector<8x64xf32>
    %83 = vector.extract_strided_slice %38 {offsets = [8, 0], sizes = [8, 64], strides = [1, 1]} : vector<16x64xf32> to vector<8x64xf32>
    %84 = tpu.concatenate %82, %83 in 1 : vector<8x64xf32>, vector<8x64xf32> -> vector<8x128xf32>
    %85 = vector.extract_strided_slice %76 {offsets = [0, 0], sizes = [16, 64], strides = [1, 1]} : vector<16x128xf32> to vector<16x64xf32>
    %86 = vector.extract_strided_slice %85 {offsets = [0, 0], sizes = [8, 64], strides = [1, 1]} : vector<16x64xf32> to vector<8x64xf32>
    %87 = vector.extract_strided_slice %85 {offsets = [8, 0], sizes = [8, 64], strides = [1, 1]} : vector<16x64xf32> to vector<8x64xf32>
    %88 = tpu.concatenate %86, %87 in 1 : vector<8x64xf32>, vector<8x64xf32> -> vector<8x128xf32>
    %89 = vector.broadcast %8 : vector<1x128xf32> to vector<8x128xf32>
    %90 = arith.addf %88, %89 : vector<8x128xf32>
    %cst_37 = arith.constant 0.000000e+00 : f32
    %91 = vector.broadcast %cst_37 : f32 to vector<8x128xf32>
    %92 = arith.maximumf %90, %91 : vector<8x128xf32>
    %93 = vector.broadcast %cst_37 : f32 to vector<8x128xf32>
    %94 = arith.subf %90, %93 : vector<8x128xf32>
    %95 = arith.cmpf one, %94, %94 : vector<8x128xf32>
    %96 = vector.broadcast %cst_37 : f32 to vector<8x128xf32>
    %97 = arith.addf %90, %96 : vector<8x128xf32>
    %98 = math.absf %94 : vector<8x128xf32>
    %cst_38 = arith.constant 0.000000e+00 : f32
    %99 = vector.broadcast %cst_38 : f32 to vector<8x128xf32>
    %100 = arith.subf %99, %98 : vector<8x128xf32>
    %101 = math.exp %100 : vector<8x128xf32>
    %102 = math.log1p %101 : vector<8x128xf32>
    %103 = arith.addf %92, %102 : vector<8x128xf32>
    %104 = arith.select %95, %97, %103 : vector<8x128xi1>, vector<8x128xf32>
    %105 = vector.shape_cast %104 : vector<8x128xf32> to vector<8x1x128xf32>
    %106 = vector.shape_cast %5 : vector<16x128xf32> to vector<1x16x128xf32>
    %107 = vector.broadcast %105 : vector<8x1x128xf32> to vector<8x16x128xf32>
    %108 = vector.broadcast %106 : vector<1x16x128xf32> to vector<8x16x128xf32>
    %109 = arith.mulf %107, %108 : vector<8x16x128xf32>
    %110 = math.exp %109 : vector<8x16x128xf32>
    %111 = vector.extract_strided_slice %77 {offsets = [0, 0], sizes = [8, 16], strides = [1, 1]} : vector<16x16xf32> to vector<8x16xf32>
    %112 = vector.shape_cast %111 : vector<8x16xf32> to vector<8x16x1xf32>
    %113 = vector.shape_cast %112 : vector<8x16x1xf32> to vector<8x16x1xf32>
    %114 = vector.broadcast %113 : vector<8x16x1xf32> to vector<8x16x64xf32>
    %115 = vector.extract_strided_slice %77 {offsets = [8, 0], sizes = [8, 16], strides = [1, 1]} : vector<16x16xf32> to vector<8x16xf32>
    %116 = vector.shape_cast %115 : vector<8x16xf32> to vector<8x16x1xf32>
    %117 = vector.shape_cast %116 : vector<8x16x1xf32> to vector<8x16x1xf32>
    %118 = vector.broadcast %117 : vector<8x16x1xf32> to vector<8x16x64xf32>
    %119 = tpu.concatenate %114, %118 in 2 : vector<8x16x64xf32>, vector<8x16x64xf32> -> vector<8x16x128xf32>
    %120 = arith.mulf %104, %81 : vector<8x128xf32>
    %121 = vector.shape_cast %120 : vector<8x128xf32> to vector<8x1x128xf32>
    %122 = vector.broadcast %121 : vector<8x1x128xf32> to vector<8x16x128xf32>
    %123 = arith.mulf %119, %122 : vector<8x16x128xf32>
    %cst_39 = arith.constant 0.000000e+00 : f32
    %124 = vector.broadcast %cst_39 : f32 to vector<16x128xf32>
    %125 = vector.extract_strided_slice %110 {offsets = [0, 0, 0], sizes = [1, 16, 128], strides = [1, 1, 1]} : vector<8x16x128xf32> to vector<1x16x128xf32>
    %126 = vector.shape_cast %125 : vector<1x16x128xf32> to vector<16x128xf32>
    %127 = arith.mulf %126, %124 : vector<16x128xf32>
    %128 = vector.extract_strided_slice %123 {offsets = [0, 0, 0], sizes = [1, 16, 128], strides = [1, 1, 1]} : vector<8x16x128xf32> to vector<1x16x128xf32>
    %129 = vector.shape_cast %128 : vector<1x16x128xf32> to vector<16x128xf32>
    %130 = arith.addf %127, %129 : vector<16x128xf32>
    %c0_40 = arith.constant 0 : index
    %c0_41 = arith.constant 0 : index
    %c0_42 = arith.constant 0 : index
    %131 = vector.load %arg6[%c0_40, %c0_41, %c0_42] : memref<8x16x128xf32, #tpu.memory_space<vmem>>, vector<1x16x128xf32>
    %132 = vector.shape_cast %131 : vector<1x16x128xf32> to vector<16x128xf32>
    %133 = vector.shape_cast %130 : vector<16x128xf32> to vector<1x16x128xf32>
    tpu.vector_store %arg6[%c0_40, %c0_41, %c0_42], %133 {strides = array<i32>} : memref<8x16x128xf32, #tpu.memory_space<vmem>>, vector<1x16x128xf32>,
    %134 = vector.extract_strided_slice %110 {offsets = [1, 0, 0], sizes = [1, 16, 128], strides = [1, 1, 1]} : vector<8x16x128xf32> to vector<1x16x128xf32>
    %135 = vector.shape_cast %134 : vector<1x16x128xf32> to vector<16x128xf32>
    %136 = arith.mulf %135, %130 : vector<16x128xf32>
    %137 = vector.extract_strided_slice %123 {offsets = [1, 0, 0], sizes = [1, 16, 128], strides = [1, 1, 1]} : vector<8x16x128xf32> to vector<1x16x128xf32>
    %138 = vector.shape_cast %137 : vector<1x16x128xf32> to vector<16x128xf32>
    %139 = arith.addf %136, %138 : vector<16x128xf32>
    %c1_43 = arith.constant 1 : index
    %c0_44 = arith.constant 0 : index
    %c0_45 = arith.constant 0 : index
    %140 = vector.load %arg6[%c1_43, %c0_44, %c0_45] : memref<8x16x128xf32, #tpu.memory_space<vmem>>, vector<1x16x128xf32>
    %141 = vector.shape_cast %140 : vector<1x16x128xf32> to vector<16x128xf32>
    %142 = vector.shape_cast %139 : vector<16x128xf32> to vector<1x16x128xf32>
    tpu.vector_store %arg6[%c1_43, %c0_44, %c0_45], %142 {strides = array<i32>} : memref<8x16x128xf32, #tpu.memory_space<vmem>>, vector<1x16x128xf32>,
    %143 = vector.extract_strided_slice %110 {offsets = [2, 0, 0], sizes = [1, 16, 128], strides = [1, 1, 1]} : vector<8x16x128xf32> to vector<1x16x128xf32>
    %144 = vector.shape_cast %143 : vector<1x16x128xf32> to vector<16x128xf32>
    %145 = arith.mulf %144, %139 : vector<16x128xf32>
    %146 = vector.extract_strided_slice %123 {offsets = [2, 0, 0], sizes = [1, 16, 128], strides = [1, 1, 1]} : vector<8x16x128xf32> to vector<1x16x128xf32>
    %147 = vector.shape_cast %146 : vector<1x16x128xf32> to vector<16x128xf32>
    %148 = arith.addf %145, %147 : vector<16x128xf32>
    %c2_46 = arith.constant 2 : index
    %c0_47 = arith.constant 0 : index
    %c0_48 = arith.constant 0 : index
    %149 = vector.load %arg6[%c2_46, %c0_47, %c0_48] : memref<8x16x128xf32, #tpu.memory_space<vmem>>, vector<1x16x128xf32>
    %150 = vector.shape_cast %149 : vector<1x16x128xf32> to vector<16x128xf32>
    %151 = vector.shape_cast %148 : vector<16x128xf32> to vector<1x16x128xf32>
    tpu.vector_store %arg6[%c2_46, %c0_47, %c0_48], %151 {strides = array<i32>} : memref<8x16x128xf32, #tpu.memory_space<vmem>>, vector<1x16x128xf32>,
    %152 = vector.extract_strided_slice %110 {offsets = [3, 0, 0], sizes = [1, 16, 128], strides = [1, 1, 1]} : vector<8x16x128xf32> to vector<1x16x128xf32>
    %153 = vector.shape_cast %152 : vector<1x16x128xf32> to vector<16x128xf32>
    %154 = arith.mulf %153, %148 : vector<16x128xf32>
    %155 = vector.extract_strided_slice %123 {offsets = [3, 0, 0], sizes = [1, 16, 128], strides = [1, 1, 1]} : vector<8x16x128xf32> to vector<1x16x128xf32>
    %156 = vector.shape_cast %155 : vector<1x16x128xf32> to vector<16x128xf32>
    %157 = arith.addf %154, %156 : vector<16x128xf32>
    %c3_49 = arith.constant 3 : index
    %c0_50 = arith.constant 0 : index
    %c0_51 = arith.constant 0 : index
    %158 = vector.load %arg6[%c3_49, %c0_50, %c0_51] : memref<8x16x128xf32, #tpu.memory_space<vmem>>, vector<1x16x128xf32>
    %159 = vector.shape_cast %158 : vector<1x16x128xf32> to vector<16x128xf32>
    %160 = vector.shape_cast %157 : vector<16x128xf32> to vector<1x16x128xf32>
    tpu.vector_store %arg6[%c3_49, %c0_50, %c0_51], %160 {strides = array<i32>} : memref<8x16x128xf32, #tpu.memory_space<vmem>>, vector<1x16x128xf32>,
    %161 = vector.extract_strided_slice %110 {offsets = [4, 0, 0], sizes = [1, 16, 128], strides = [1, 1, 1]} : vector<8x16x128xf32> to vector<1x16x128xf32>
    %162 = vector.shape_cast %161 : vector<1x16x128xf32> to vector<16x128xf32>
    %163 = arith.mulf %162, %157 : vector<16x128xf32>
    %164 = vector.extract_strided_slice %123 {offsets = [4, 0, 0], sizes = [1, 16, 128], strides = [1, 1, 1]} : vector<8x16x128xf32> to vector<1x16x128xf32>
    %165 = vector.shape_cast %164 : vector<1x16x128xf32> to vector<16x128xf32>
    %166 = arith.addf %163, %165 : vector<16x128xf32>
    %c4 = arith.constant 4 : index
    %c0_52 = arith.constant 0 : index
    %c0_53 = arith.constant 0 : index
    %167 = vector.load %arg6[%c4, %c0_52, %c0_53] : memref<8x16x128xf32, #tpu.memory_space<vmem>>, vector<1x16x128xf32>
    %168 = vector.shape_cast %167 : vector<1x16x128xf32> to vector<16x128xf32>
    %169 = vector.shape_cast %166 : vector<16x128xf32> to vector<1x16x128xf32>
    tpu.vector_store %arg6[%c4, %c0_52, %c0_53], %169 {strides = array<i32>} : memref<8x16x128xf32, #tpu.memory_space<vmem>>, vector<1x16x128xf32>,
    %170 = vector.extract_strided_slice %110 {offsets = [5, 0, 0], sizes = [1, 16, 128], strides = [1, 1, 1]} : vector<8x16x128xf32> to vector<1x16x128xf32>
    %171 = vector.shape_cast %170 : vector<1x16x128xf32> to vector<16x128xf32>
    %172 = arith.mulf %171, %166 : vector<16x128xf32>
    %173 = vector.extract_strided_slice %123 {offsets = [5, 0, 0], sizes = [1, 16, 128], strides = [1, 1, 1]} : vector<8x16x128xf32> to vector<1x16x128xf32>
    %174 = vector.shape_cast %173 : vector<1x16x128xf32> to vector<16x128xf32>
    %175 = arith.addf %172, %174 : vector<16x128xf32>
    %c5 = arith.constant 5 : index
    %c0_54 = arith.constant 0 : index
    %c0_55 = arith.constant 0 : index
    %176 = vector.load %arg6[%c5, %c0_54, %c0_55] : memref<8x16x128xf32, #tpu.memory_space<vmem>>, vector<1x16x128xf32>
    %177 = vector.shape_cast %176 : vector<1x16x128xf32> to vector<16x128xf32>
    %178 = vector.shape_cast %175 : vector<16x128xf32> to vector<1x16x128xf32>
    tpu.vector_store %arg6[%c5, %c0_54, %c0_55], %178 {strides = array<i32>} : memref<8x16x128xf32, #tpu.memory_space<vmem>>, vector<1x16x128xf32>,
    %179 = vector.extract_strided_slice %110 {offsets = [6, 0, 0], sizes = [1, 16, 128], strides = [1, 1, 1]} : vector<8x16x128xf32> to vector<1x16x128xf32>
    %180 = vector.shape_cast %179 : vector<1x16x128xf32> to vector<16x128xf32>
    %181 = arith.mulf %180, %175 : vector<16x128xf32>
    %182 = vector.extract_strided_slice %123 {offsets = [6, 0, 0], sizes = [1, 16, 128], strides = [1, 1, 1]} : vector<8x16x128xf32> to vector<1x16x128xf32>
    %183 = vector.shape_cast %182 : vector<1x16x128xf32> to vector<16x128xf32>
    %184 = arith.addf %181, %183 : vector<16x128xf32>
    %c6 = arith.constant 6 : index
    %c0_56 = arith.constant 0 : index
    %c0_57 = arith.constant 0 : index
    %185 = vector.load %arg6[%c6, %c0_56, %c0_57] : memref<8x16x128xf32, #tpu.memory_space<vmem>>, vector<1x16x128xf32>
    %186 = vector.shape_cast %185 : vector<1x16x128xf32> to vector<16x128xf32>
    %187 = vector.shape_cast %184 : vector<16x128xf32> to vector<1x16x128xf32>
    tpu.vector_store %arg6[%c6, %c0_56, %c0_57], %187 {strides = array<i32>} : memref<8x16x128xf32, #tpu.memory_space<vmem>>, vector<1x16x128xf32>,
    %188 = vector.extract_strided_slice %110 {offsets = [7, 0, 0], sizes = [1, 16, 128], strides = [1, 1, 1]} : vector<8x16x128xf32> to vector<1x16x128xf32>
    %189 = vector.shape_cast %188 : vector<1x16x128xf32> to vector<16x128xf32>
    %190 = arith.mulf %189, %184 : vector<16x128xf32>
    %191 = vector.extract_strided_slice %123 {offsets = [7, 0, 0], sizes = [1, 16, 128], strides = [1, 1, 1]} : vector<8x16x128xf32> to vector<1x16x128xf32>
    %192 = vector.shape_cast %191 : vector<1x16x128xf32> to vector<16x128xf32>
    %193 = arith.addf %190, %192 : vector<16x128xf32>
    %c7 = arith.constant 7 : index
    %c0_58 = arith.constant 0 : index
    %c0_59 = arith.constant 0 : index
    %194 = vector.load %arg6[%c7, %c0_58, %c0_59] : memref<8x16x128xf32, #tpu.memory_space<vmem>>, vector<1x16x128xf32>
    %195 = vector.shape_cast %194 : vector<1x16x128xf32> to vector<16x128xf32>
    %196 = vector.shape_cast %193 : vector<16x128xf32> to vector<1x16x128xf32>
    tpu.vector_store %arg6[%c7, %c0_58, %c0_59], %196 {strides = array<i32>} : memref<8x16x128xf32, #tpu.memory_space<vmem>>, vector<1x16x128xf32>,
    %c0_60 = arith.constant 0 : index
    %c0_61 = arith.constant 0 : index
    %c0_62 = arith.constant 0 : index
    %197 = vector.load %arg6[%c0_60, %c0_61, %c0_62] : memref<8x16x128xf32, #tpu.memory_space<vmem>>, vector<8x16x128xf32>
    %198 = vector.extract_strided_slice %78 {offsets = [0, 0], sizes = [8, 16], strides = [1, 1]} : vector<16x16xf32> to vector<8x16xf32>
    %199 = vector.shape_cast %198 : vector<8x16xf32> to vector<8x16x1xf32>
    %200 = vector.shape_cast %199 : vector<8x16x1xf32> to vector<8x16x1xf32>
    %201 = vector.broadcast %200 : vector<8x16x1xf32> to vector<8x16x64xf32>
    %202 = vector.extract_strided_slice %78 {offsets = [8, 0], sizes = [8, 16], strides = [1, 1]} : vector<16x16xf32> to vector<8x16xf32>
    %203 = vector.shape_cast %202 : vector<8x16xf32> to vector<8x16x1xf32>
    %204 = vector.shape_cast %203 : vector<8x16x1xf32> to vector<8x16x1xf32>
    %205 = vector.broadcast %204 : vector<8x16x1xf32> to vector<8x16x64xf32>
    %206 = tpu.concatenate %201, %205 in 2 : vector<8x16x64xf32>, vector<8x16x64xf32> -> vector<8x16x128xf32>
    %207 = arith.mulf %206, %197 : vector<8x16x128xf32>
    %cst_63 = arith.constant dense<0.000000e+00> : vector<8x128xf32>
    %208 = vector.multi_reduction <add>, %207, %cst_63 [1] : vector<8x16x128xf32> to vector<8x128xf32>
    %209 = vector.broadcast %9 : vector<1x128xf32> to vector<8x128xf32>
    %210 = arith.mulf %209, %81 : vector<8x128xf32>
    %211 = arith.addf %208, %210 : vector<8x128xf32>
    %212 = arith.negf %84 : vector<8x128xf32>
    %213 = math.exp %212 : vector<8x128xf32>
    %cst_64 = arith.constant 1.000000e+00 : f32
    %214 = vector.broadcast %cst_64 : f32 to vector<8x128xf32>
    %215 = arith.addf %214, %213 : vector<8x128xf32>
    %216 = arith.divf %214, %215 : vector<8x128xf32>
    %217 = arith.mulf %84, %216 : vector<8x128xf32>
    %218 = arith.mulf %211, %217 : vector<8x128xf32>
    %219 = vector.extract_strided_slice %218 {offsets = [0, 0], sizes = [8, 64], strides = [1, 1]} : vector<8x128xf32> to vector<8x64xf32>
    %220 = vector.extract_strided_slice %218 {offsets = [0, 64], sizes = [8, 64], strides = [1, 1]} : vector<8x128xf32> to vector<8x64xf32>
    %221 = tpu.concatenate %219, %220 in 0 : vector<8x64xf32>, vector<8x64xf32> -> vector<16x64xf32>
    %222 = arith.truncf %221 : vector<16x64xf32> to vector<16x64xbf16>
    %cst_65 = arith.constant dense<0.000000e+00> : vector<16x128xf32>
    %223 = tpu.matmul %222, %3, %cst_65 {dimension_numbers = #tpu.dot_dimension_numbers<[1], [0], [0], [1], [0, 0, 1, 1], [], []>} : vector<16x64xbf16>, vector<64x128xbf16>, vector<16x128xf32> -> vector<16x128xf32>
    %224 = vector.extract_strided_slice %223 {offsets = [0, 0], sizes = [16, 32], strides = [1, 1]} : vector<16x128xf32> to vector<16x32xf32>
    %c96 = arith.constant 96 : index
    %c0_66 = arith.constant 0 : index
    %225 = vector.load %arg2[%c96, %c0_66] : memref<192x128xbf16, #tpu.memory_space<vmem>>, vector<32x128xbf16>
    %c128 = arith.constant 128 : index
    %c0_67 = arith.constant 0 : index
    %226 = vector.load %arg2[%c128, %c0_67] : memref<192x128xbf16, #tpu.memory_space<vmem>>, vector<64x128xbf16>
    %c96_68 = arith.constant 96 : index
    %c0_69 = arith.constant 0 : index
    %227 = vector.load %arg3[%c96_68, %c0_69] : memref<200x128xf32, #tpu.memory_space<vmem>>, vector<64x128xf32>
    %c160 = arith.constant 160 : index
    %c0_70 = arith.constant 0 : index
    %228 = vector.load %arg3[%c160, %c0_70] : memref<200x128xf32, #tpu.memory_space<vmem>>, vector<16x128xf32>
    %c176 = arith.constant 176 : index
    %c0_71 = arith.constant 0 : index
    %229 = vector.load %arg3[%c176, %c0_71] : memref<200x128xf32, #tpu.memory_space<vmem>>, vector<4x64xf32>
    %c180 = arith.constant 180 : index
    %c0_72 = arith.constant 0 : index
    %230 = vector.load %arg3[%c180, %c0_72] : memref<200x128xf32, #tpu.memory_space<vmem>>, vector<1x64xf32>
    %c181 = arith.constant 181 : index
    %c0_73 = arith.constant 0 : index
    %231 = vector.load %arg3[%c181, %c0_73] : memref<200x128xf32, #tpu.memory_space<vmem>>, vector<1x128xf32>
    %c182 = arith.constant 182 : index
    %c0_74 = arith.constant 0 : index
    %232 = vector.load %arg3[%c182, %c0_74] : memref<200x128xf32, #tpu.memory_space<vmem>>, vector<1x128xf32>
    %c183 = arith.constant 183 : index
    %c0_75 = arith.constant 0 : index
    %233 = vector.load %arg3[%c183, %c0_75] : memref<200x128xf32, #tpu.memory_space<vmem>>, vector<1x32xf32>
    %c184 = arith.constant 184 : index
    %c0_76 = arith.constant 0 : index
    %234 = vector.load %arg3[%c184, %c0_76] : memref<200x128xf32, #tpu.memory_space<vmem>>, vector<1x32xf32>
    %235 = arith.addf %224, %12 : vector<16x32xf32>
    %cst_77 = arith.constant dense<0.000000e+00> : vector<16xf32>
    %236 = vector.multi_reduction <add>, %235, %cst_77 [1] : vector<16x32xf32> to vector<16xf32>
    %237 = vector.shape_cast %236 : vector<16xf32> to vector<16x1xf32>
    %cst_78 = arith.constant 3.200000e+01 : f32
    %238 = vector.broadcast %cst_78 : f32 to vector<16x1xf32>
    %239 = arith.divf %237, %238 : vector<16x1xf32>
    %240 = vector.broadcast %239 : vector<16x1xf32> to vector<16x32xf32>
    %241 = arith.subf %235, %240 : vector<16x32xf32>
    %242 = arith.mulf %241, %241 : vector<16x32xf32>
    %cst_79 = arith.constant dense<0.000000e+00> : vector<16xf32>
    %243 = vector.multi_reduction <add>, %242, %cst_79 [1] : vector<16x32xf32> to vector<16xf32>
    %244 = vector.shape_cast %243 : vector<16xf32> to vector<16x1xf32>
    %cst_80 = arith.constant 3.200000e+01 : f32
    %245 = vector.broadcast %cst_80 : f32 to vector<16x1xf32>
    %246 = arith.divf %244, %245 : vector<16x1xf32>
    %247 = vector.broadcast %239 : vector<16x1xf32> to vector<16x32xf32>
    %248 = arith.subf %235, %247 : vector<16x32xf32>
    %cst_81 = arith.constant 9.99999974E-6 : f32
    %249 = vector.broadcast %cst_81 : f32 to vector<16x1xf32>
    %250 = arith.addf %246, %249 : vector<16x1xf32>
    %251 = math.rsqrt %250 : vector<16x1xf32>
    %252 = vector.broadcast %251 : vector<16x1xf32> to vector<16x32xf32>
    %253 = arith.mulf %248, %252 : vector<16x32xf32>
    %254 = vector.broadcast %233 : vector<1x32xf32> to vector<16x32xf32>
    %255 = arith.mulf %253, %254 : vector<16x32xf32>
    %256 = vector.broadcast %234 : vector<1x32xf32> to vector<16x32xf32>
    %257 = arith.addf %255, %256 : vector<16x32xf32>
    %258 = arith.truncf %257 : vector<16x32xf32> to vector<16x32xbf16>
    %cst_82 = arith.constant dense<0.000000e+00> : vector<16x128xf32>
    %259 = tpu.matmul %258, %225, %cst_82 {dimension_numbers = #tpu.dot_dimension_numbers<[1], [0], [0], [1], [0, 0, 1, 1], [], []>} : vector<16x32xbf16>, vector<32x128xbf16>, vector<16x128xf32> -> vector<16x128xf32>
    %260 = vector.extract_strided_slice %259 {offsets = [0, 0], sizes = [16, 64], strides = [1, 1]} : vector<16x128xf32> to vector<16x64xf32>
    %261 = vector.extract_strided_slice %259 {offsets = [0, 64], sizes = [16, 64], strides = [1, 1]} : vector<16x128xf32> to vector<16x64xf32>
    %cst_83 = arith.constant 0.000000e+00 : f32
    %262 = vector.broadcast %cst_83 : f32 to vector<2x3x64xf32>
    %c0_84 = arith.constant 0 : index
    %c0_85 = arith.constant 0 : index
    %c0_86 = arith.constant 0 : index
    %263 = vector.load %arg5[%c0_84, %c0_85, %c0_86] : memref<2x11x64xf32, #tpu.memory_space<vmem>>, vector<2x3x64xf32>
    tpu.vector_store %arg5[%c0_84, %c0_85, %c0_86], %262 {strides = array<i32>} : memref<2x11x64xf32, #tpu.memory_space<vmem>>, vector<2x3x64xf32>,
    %264 = vector.shape_cast %260 : vector<16x64xf32> to vector<2x8x64xf32>
    %c0_87 = arith.constant 0 : index
    %c3_88 = arith.constant 3 : index
    %c0_89 = arith.constant 0 : index
    %265 = vector.load %arg5[%c0_87, %c3_88, %c0_89] : memref<2x11x64xf32, #tpu.memory_space<vmem>>, vector<2x8x64xf32>
    tpu.vector_store %arg5[%c0_87, %c3_88, %c0_89], %264 {strides = array<i32>} : memref<2x11x64xf32, #tpu.memory_space<vmem>>, vector<2x8x64xf32>,
    %c0_90 = arith.constant 0 : index
    %c0_91 = arith.constant 0 : index
    %c0_92 = arith.constant 0 : index
    %266 = vector.load %arg5[%c0_90, %c0_91, %c0_92] : memref<2x11x64xf32, #tpu.memory_space<vmem>>, vector<2x8x64xf32>
    %267 = vector.extract_strided_slice %229 {offsets = [0, 0], sizes = [1, 64], strides = [1, 1]} : vector<4x64xf32> to vector<1x64xf32>
    %268 = vector.shape_cast %267 : vector<1x64xf32> to vector<1x1x64xf32>
    %269 = vector.broadcast %268 : vector<1x1x64xf32> to vector<2x8x64xf32>
    %270 = arith.mulf %266, %269 : vector<2x8x64xf32>
    %271 = vector.shape_cast %230 : vector<1x64xf32> to vector<1x1x64xf32>
    %272 = vector.broadcast %271 : vector<1x1x64xf32> to vector<2x8x64xf32>
    %273 = arith.addf %272, %270 : vector<2x8x64xf32>
    %c0_93 = arith.constant 0 : index
    %c1_94 = arith.constant 1 : index
    %c0_95 = arith.constant 0 : index
    %274 = vector.load %arg5[%c0_93, %c1_94, %c0_95] : memref<2x11x64xf32, #tpu.memory_space<vmem>>, vector<2x8x64xf32>
    %275 = vector.extract_strided_slice %229 {offsets = [1, 0], sizes = [1, 64], strides = [1, 1]} : vector<4x64xf32> to vector<1x64xf32>
    %276 = vector.shape_cast %275 : vector<1x64xf32> to vector<1x1x64xf32>
    %277 = vector.broadcast %276 : vector<1x1x64xf32> to vector<2x8x64xf32>
    %278 = arith.mulf %274, %277 : vector<2x8x64xf32>
    %279 = arith.addf %273, %278 : vector<2x8x64xf32>
    %c0_96 = arith.constant 0 : index
    %c2_97 = arith.constant 2 : index
    %c0_98 = arith.constant 0 : index
    %280 = vector.load %arg5[%c0_96, %c2_97, %c0_98] : memref<2x11x64xf32, #tpu.memory_space<vmem>>, vector<2x8x64xf32>
    %281 = vector.extract_strided_slice %229 {offsets = [2, 0], sizes = [1, 64], strides = [1, 1]} : vector<4x64xf32> to vector<1x64xf32>
    %282 = vector.shape_cast %281 : vector<1x64xf32> to vector<1x1x64xf32>
    %283 = vector.broadcast %282 : vector<1x1x64xf32> to vector<2x8x64xf32>
    %284 = arith.mulf %280, %283 : vector<2x8x64xf32>
    %285 = arith.addf %279, %284 : vector<2x8x64xf32>
    %c0_99 = arith.constant 0 : index
    %c3_100 = arith.constant 3 : index
    %c0_101 = arith.constant 0 : index
    %286 = vector.load %arg5[%c0_99, %c3_100, %c0_101] : memref<2x11x64xf32, #tpu.memory_space<vmem>>, vector<2x8x64xf32>
    %287 = vector.extract_strided_slice %229 {offsets = [3, 0], sizes = [1, 64], strides = [1, 1]} : vector<4x64xf32> to vector<1x64xf32>
    %288 = vector.shape_cast %287 : vector<1x64xf32> to vector<1x1x64xf32>
    %289 = vector.broadcast %288 : vector<1x1x64xf32> to vector<2x8x64xf32>
    %290 = arith.mulf %286, %289 : vector<2x8x64xf32>
    %291 = arith.addf %285, %290 : vector<2x8x64xf32>
    %292 = arith.negf %291 : vector<2x8x64xf32>
    %293 = math.exp %292 : vector<2x8x64xf32>
    %cst_102 = arith.constant 1.000000e+00 : f32
    %294 = vector.broadcast %cst_102 : f32 to vector<2x8x64xf32>
    %295 = arith.addf %294, %293 : vector<2x8x64xf32>
    %296 = arith.divf %294, %295 : vector<2x8x64xf32>
    %297 = arith.mulf %291, %296 : vector<2x8x64xf32>
    %298 = vector.shape_cast %297 : vector<2x8x64xf32> to vector<16x64xf32>
    %cst_103 = arith.constant dense<0.000000e+00> : vector<16x128xf32>
    %299 = tpu.matmul %298, %227, %cst_103 {dimension_numbers = #tpu.dot_dimension_numbers<[1], [0], [0], [1], [0, 0, 1, 1], [], []>} : vector<16x64xf32>, vector<64x128xf32>, vector<16x128xf32> -> vector<16x128xf32>
    %300 = vector.extract_strided_slice %299 {offsets = [0, 64], sizes = [16, 16], strides = [1, 1]} : vector<16x128xf32> to vector<16x16xf32>
    %301 = vector.extract_strided_slice %299 {offsets = [0, 80], sizes = [16, 16], strides = [1, 1]} : vector<16x128xf32> to vector<16x16xf32>
    %302 = vector.extract_strided_slice %298 {offsets = [0, 0], sizes = [8, 64], strides = [1, 1]} : vector<16x64xf32> to vector<8x64xf32>
    %303 = vector.extract_strided_slice %298 {offsets = [8, 0], sizes = [8, 64], strides = [1, 1]} : vector<16x64xf32> to vector<8x64xf32>
    %304 = tpu.concatenate %302, %303 in 1 : vector<8x64xf32>, vector<8x64xf32> -> vector<8x128xf32>
    %305 = vector.extract_strided_slice %261 {offsets = [0, 0], sizes = [8, 64], strides = [1, 1]} : vector<16x64xf32> to vector<8x64xf32>
    %306 = vector.extract_strided_slice %261 {offsets = [8, 0], sizes = [8, 64], strides = [1, 1]} : vector<16x64xf32> to vector<8x64xf32>
    %307 = tpu.concatenate %305, %306 in 1 : vector<8x64xf32>, vector<8x64xf32> -> vector<8x128xf32>
    %308 = vector.extract_strided_slice %299 {offsets = [0, 0], sizes = [16, 64], strides = [1, 1]} : vector<16x128xf32> to vector<16x64xf32>
    %309 = vector.extract_strided_slice %308 {offsets = [0, 0], sizes = [8, 64], strides = [1, 1]} : vector<16x64xf32> to vector<8x64xf32>
    %310 = vector.extract_strided_slice %308 {offsets = [8, 0], sizes = [8, 64], strides = [1, 1]} : vector<16x64xf32> to vector<8x64xf32>
    %311 = tpu.concatenate %309, %310 in 1 : vector<8x64xf32>, vector<8x64xf32> -> vector<8x128xf32>
    %312 = vector.broadcast %231 : vector<1x128xf32> to vector<8x128xf32>
    %313 = arith.addf %311, %312 : vector<8x128xf32>
    %cst_104 = arith.constant 0.000000e+00 : f32
    %314 = vector.broadcast %cst_104 : f32 to vector<8x128xf32>
    %315 = arith.maximumf %313, %314 : vector<8x128xf32>
    %316 = vector.broadcast %cst_104 : f32 to vector<8x128xf32>
    %317 = arith.subf %313, %316 : vector<8x128xf32>
    %318 = arith.cmpf one, %317, %317 : vector<8x128xf32>
    %319 = vector.broadcast %cst_104 : f32 to vector<8x128xf32>
    %320 = arith.addf %313, %319 : vector<8x128xf32>
    %321 = math.absf %317 : vector<8x128xf32>
    %cst_105 = arith.constant 0.000000e+00 : f32
    %322 = vector.broadcast %cst_105 : f32 to vector<8x128xf32>
    %323 = arith.subf %322, %321 : vector<8x128xf32>
    %324 = math.exp %323 : vector<8x128xf32>
    %325 = math.log1p %324 : vector<8x128xf32>
    %326 = arith.addf %315, %325 : vector<8x128xf32>
    %327 = arith.select %318, %320, %326 : vector<8x128xi1>, vector<8x128xf32>
    %328 = vector.shape_cast %327 : vector<8x128xf32> to vector<8x1x128xf32>
    %329 = vector.shape_cast %228 : vector<16x128xf32> to vector<1x16x128xf32>
    %330 = vector.broadcast %328 : vector<8x1x128xf32> to vector<8x16x128xf32>
    %331 = vector.broadcast %329 : vector<1x16x128xf32> to vector<8x16x128xf32>
    %332 = arith.mulf %330, %331 : vector<8x16x128xf32>
    %333 = math.exp %332 : vector<8x16x128xf32>
    %334 = vector.extract_strided_slice %300 {offsets = [0, 0], sizes = [8, 16], strides = [1, 1]} : vector<16x16xf32> to vector<8x16xf32>
    %335 = vector.shape_cast %334 : vector<8x16xf32> to vector<8x16x1xf32>
    %336 = vector.shape_cast %335 : vector<8x16x1xf32> to vector<8x16x1xf32>
    %337 = vector.broadcast %336 : vector<8x16x1xf32> to vector<8x16x64xf32>
    %338 = vector.extract_strided_slice %300 {offsets = [8, 0], sizes = [8, 16], strides = [1, 1]} : vector<16x16xf32> to vector<8x16xf32>
    %339 = vector.shape_cast %338 : vector<8x16xf32> to vector<8x16x1xf32>
    %340 = vector.shape_cast %339 : vector<8x16x1xf32> to vector<8x16x1xf32>
    %341 = vector.broadcast %340 : vector<8x16x1xf32> to vector<8x16x64xf32>
    %342 = tpu.concatenate %337, %341 in 2 : vector<8x16x64xf32>, vector<8x16x64xf32> -> vector<8x16x128xf32>
    %343 = arith.mulf %327, %304 : vector<8x128xf32>
    %344 = vector.shape_cast %343 : vector<8x128xf32> to vector<8x1x128xf32>
    %345 = vector.broadcast %344 : vector<8x1x128xf32> to vector<8x16x128xf32>
    %346 = arith.mulf %342, %345 : vector<8x16x128xf32>
    %cst_106 = arith.constant 0.000000e+00 : f32
    %347 = vector.broadcast %cst_106 : f32 to vector<16x128xf32>
    %348 = vector.extract_strided_slice %333 {offsets = [0, 0, 0], sizes = [1, 16, 128], strides = [1, 1, 1]} : vector<8x16x128xf32> to vector<1x16x128xf32>
    %349 = vector.shape_cast %348 : vector<1x16x128xf32> to vector<16x128xf32>
    %350 = arith.mulf %349, %347 : vector<16x128xf32>
    %351 = vector.extract_strided_slice %346 {offsets = [0, 0, 0], sizes = [1, 16, 128], strides = [1, 1, 1]} : vector<8x16x128xf32> to vector<1x16x128xf32>
    %352 = vector.shape_cast %351 : vector<1x16x128xf32> to vector<16x128xf32>
    %353 = arith.addf %350, %352 : vector<16x128xf32>
    %c0_107 = arith.constant 0 : index
    %c0_108 = arith.constant 0 : index
    %c0_109 = arith.constant 0 : index
    %354 = vector.load %arg6[%c0_107, %c0_108, %c0_109] : memref<8x16x128xf32, #tpu.memory_space<vmem>>, vector<1x16x128xf32>
    %355 = vector.shape_cast %354 : vector<1x16x128xf32> to vector<16x128xf32>
    %356 = vector.shape_cast %353 : vector<16x128xf32> to vector<1x16x128xf32>
    tpu.vector_store %arg6[%c0_107, %c0_108, %c0_109], %356 {strides = array<i32>} : memref<8x16x128xf32, #tpu.memory_space<vmem>>, vector<1x16x128xf32>,
    %357 = vector.extract_strided_slice %333 {offsets = [1, 0, 0], sizes = [1, 16, 128], strides = [1, 1, 1]} : vector<8x16x128xf32> to vector<1x16x128xf32>
    %358 = vector.shape_cast %357 : vector<1x16x128xf32> to vector<16x128xf32>
    %359 = arith.mulf %358, %353 : vector<16x128xf32>
    %360 = vector.extract_strided_slice %346 {offsets = [1, 0, 0], sizes = [1, 16, 128], strides = [1, 1, 1]} : vector<8x16x128xf32> to vector<1x16x128xf32>
    %361 = vector.shape_cast %360 : vector<1x16x128xf32> to vector<16x128xf32>
    %362 = arith.addf %359, %361 : vector<16x128xf32>
    %c1_110 = arith.constant 1 : index
    %c0_111 = arith.constant 0 : index
    %c0_112 = arith.constant 0 : index
    %363 = vector.load %arg6[%c1_110, %c0_111, %c0_112] : memref<8x16x128xf32, #tpu.memory_space<vmem>>, vector<1x16x128xf32>
    %364 = vector.shape_cast %363 : vector<1x16x128xf32> to vector<16x128xf32>
    %365 = vector.shape_cast %362 : vector<16x128xf32> to vector<1x16x128xf32>
    tpu.vector_store %arg6[%c1_110, %c0_111, %c0_112], %365 {strides = array<i32>} : memref<8x16x128xf32, #tpu.memory_space<vmem>>, vector<1x16x128xf32>,
    %366 = vector.extract_strided_slice %333 {offsets = [2, 0, 0], sizes = [1, 16, 128], strides = [1, 1, 1]} : vector<8x16x128xf32> to vector<1x16x128xf32>
    %367 = vector.shape_cast %366 : vector<1x16x128xf32> to vector<16x128xf32>
    %368 = arith.mulf %367, %362 : vector<16x128xf32>
    %369 = vector.extract_strided_slice %346 {offsets = [2, 0, 0], sizes = [1, 16, 128], strides = [1, 1, 1]} : vector<8x16x128xf32> to vector<1x16x128xf32>
    %370 = vector.shape_cast %369 : vector<1x16x128xf32> to vector<16x128xf32>
    %371 = arith.addf %368, %370 : vector<16x128xf32>
    %c2_113 = arith.constant 2 : index
    %c0_114 = arith.constant 0 : index
    %c0_115 = arith.constant 0 : index
    %372 = vector.load %arg6[%c2_113, %c0_114, %c0_115] : memref<8x16x128xf32, #tpu.memory_space<vmem>>, vector<1x16x128xf32>
    %373 = vector.shape_cast %372 : vector<1x16x128xf32> to vector<16x128xf32>
    %374 = vector.shape_cast %371 : vector<16x128xf32> to vector<1x16x128xf32>
    tpu.vector_store %arg6[%c2_113, %c0_114, %c0_115], %374 {strides = array<i32>} : memref<8x16x128xf32, #tpu.memory_space<vmem>>, vector<1x16x128xf32>,
    %375 = vector.extract_strided_slice %333 {offsets = [3, 0, 0], sizes = [1, 16, 128], strides = [1, 1, 1]} : vector<8x16x128xf32> to vector<1x16x128xf32>
    %376 = vector.shape_cast %375 : vector<1x16x128xf32> to vector<16x128xf32>
    %377 = arith.mulf %376, %371 : vector<16x128xf32>
    %378 = vector.extract_strided_slice %346 {offsets = [3, 0, 0], sizes = [1, 16, 128], strides = [1, 1, 1]} : vector<8x16x128xf32> to vector<1x16x128xf32>
    %379 = vector.shape_cast %378 : vector<1x16x128xf32> to vector<16x128xf32>
    %380 = arith.addf %377, %379 : vector<16x128xf32>
    %c3_116 = arith.constant 3 : index
    %c0_117 = arith.constant 0 : index
    %c0_118 = arith.constant 0 : index
    %381 = vector.load %arg6[%c3_116, %c0_117, %c0_118] : memref<8x16x128xf32, #tpu.memory_space<vmem>>, vector<1x16x128xf32>
    %382 = vector.shape_cast %381 : vector<1x16x128xf32> to vector<16x128xf32>
    %383 = vector.shape_cast %380 : vector<16x128xf32> to vector<1x16x128xf32>
    tpu.vector_store %arg6[%c3_116, %c0_117, %c0_118], %383 {strides = array<i32>} : memref<8x16x128xf32, #tpu.memory_space<vmem>>, vector<1x16x128xf32>,
    %384 = vector.extract_strided_slice %333 {offsets = [4, 0, 0], sizes = [1, 16, 128], strides = [1, 1, 1]} : vector<8x16x128xf32> to vector<1x16x128xf32>
    %385 = vector.shape_cast %384 : vector<1x16x128xf32> to vector<16x128xf32>
    %386 = arith.mulf %385, %380 : vector<16x128xf32>
    %387 = vector.extract_strided_slice %346 {offsets = [4, 0, 0], sizes = [1, 16, 128], strides = [1, 1, 1]} : vector<8x16x128xf32> to vector<1x16x128xf32>
    %388 = vector.shape_cast %387 : vector<1x16x128xf32> to vector<16x128xf32>
    %389 = arith.addf %386, %388 : vector<16x128xf32>
    %c4_119 = arith.constant 4 : index
    %c0_120 = arith.constant 0 : index
    %c0_121 = arith.constant 0 : index
    %390 = vector.load %arg6[%c4_119, %c0_120, %c0_121] : memref<8x16x128xf32, #tpu.memory_space<vmem>>, vector<1x16x128xf32>
    %391 = vector.shape_cast %390 : vector<1x16x128xf32> to vector<16x128xf32>
    %392 = vector.shape_cast %389 : vector<16x128xf32> to vector<1x16x128xf32>
    tpu.vector_store %arg6[%c4_119, %c0_120, %c0_121], %392 {strides = array<i32>} : memref<8x16x128xf32, #tpu.memory_space<vmem>>, vector<1x16x128xf32>,
    %393 = vector.extract_strided_slice %333 {offsets = [5, 0, 0], sizes = [1, 16, 128], strides = [1, 1, 1]} : vector<8x16x128xf32> to vector<1x16x128xf32>
    %394 = vector.shape_cast %393 : vector<1x16x128xf32> to vector<16x128xf32>
    %395 = arith.mulf %394, %389 : vector<16x128xf32>
    %396 = vector.extract_strided_slice %346 {offsets = [5, 0, 0], sizes = [1, 16, 128], strides = [1, 1, 1]} : vector<8x16x128xf32> to vector<1x16x128xf32>
    %397 = vector.shape_cast %396 : vector<1x16x128xf32> to vector<16x128xf32>
    %398 = arith.addf %395, %397 : vector<16x128xf32>
    %c5_122 = arith.constant 5 : index
    %c0_123 = arith.constant 0 : index
    %c0_124 = arith.constant 0 : index
    %399 = vector.load %arg6[%c5_122, %c0_123, %c0_124] : memref<8x16x128xf32, #tpu.memory_space<vmem>>, vector<1x16x128xf32>
    %400 = vector.shape_cast %399 : vector<1x16x128xf32> to vector<16x128xf32>
    %401 = vector.shape_cast %398 : vector<16x128xf32> to vector<1x16x128xf32>
    tpu.vector_store %arg6[%c5_122, %c0_123, %c0_124], %401 {strides = array<i32>} : memref<8x16x128xf32, #tpu.memory_space<vmem>>, vector<1x16x128xf32>,
    %402 = vector.extract_strided_slice %333 {offsets = [6, 0, 0], sizes = [1, 16, 128], strides = [1, 1, 1]} : vector<8x16x128xf32> to vector<1x16x128xf32>
    %403 = vector.shape_cast %402 : vector<1x16x128xf32> to vector<16x128xf32>
    %404 = arith.mulf %403, %398 : vector<16x128xf32>
    %405 = vector.extract_strided_slice %346 {offsets = [6, 0, 0], sizes = [1, 16, 128], strides = [1, 1, 1]} : vector<8x16x128xf32> to vector<1x16x128xf32>
    %406 = vector.shape_cast %405 : vector<1x16x128xf32> to vector<16x128xf32>
    %407 = arith.addf %404, %406 : vector<16x128xf32>
    %c6_125 = arith.constant 6 : index
    %c0_126 = arith.constant 0 : index
    %c0_127 = arith.constant 0 : index
    %408 = vector.load %arg6[%c6_125, %c0_126, %c0_127] : memref<8x16x128xf32, #tpu.memory_space<vmem>>, vector<1x16x128xf32>
    %409 = vector.shape_cast %408 : vector<1x16x128xf32> to vector<16x128xf32>
    %410 = vector.shape_cast %407 : vector<16x128xf32> to vector<1x16x128xf32>
    tpu.vector_store %arg6[%c6_125, %c0_126, %c0_127], %410 {strides = array<i32>} : memref<8x16x128xf32, #tpu.memory_space<vmem>>, vector<1x16x128xf32>,
    %411 = vector.extract_strided_slice %333 {offsets = [7, 0, 0], sizes = [1, 16, 128], strides = [1, 1, 1]} : vector<8x16x128xf32> to vector<1x16x128xf32>
    %412 = vector.shape_cast %411 : vector<1x16x128xf32> to vector<16x128xf32>
    %413 = arith.mulf %412, %407 : vector<16x128xf32>
    %414 = vector.extract_strided_slice %346 {offsets = [7, 0, 0], sizes = [1, 16, 128], strides = [1, 1, 1]} : vector<8x16x128xf32> to vector<1x16x128xf32>
    %415 = vector.shape_cast %414 : vector<1x16x128xf32> to vector<16x128xf32>
    %416 = arith.addf %413, %415 : vector<16x128xf32>
    %c7_128 = arith.constant 7 : index
    %c0_129 = arith.constant 0 : index
    %c0_130 = arith.constant 0 : index
    %417 = vector.load %arg6[%c7_128, %c0_129, %c0_130] : memref<8x16x128xf32, #tpu.memory_space<vmem>>, vector<1x16x128xf32>
    %418 = vector.shape_cast %417 : vector<1x16x128xf32> to vector<16x128xf32>
    %419 = vector.shape_cast %416 : vector<16x128xf32> to vector<1x16x128xf32>
    tpu.vector_store %arg6[%c7_128, %c0_129, %c0_130], %419 {strides = array<i32>} : memref<8x16x128xf32, #tpu.memory_space<vmem>>, vector<1x16x128xf32>,
    %c0_131 = arith.constant 0 : index
    %c0_132 = arith.constant 0 : index
    %c0_133 = arith.constant 0 : index
    %420 = vector.load %arg6[%c0_131, %c0_132, %c0_133] : memref<8x16x128xf32, #tpu.memory_space<vmem>>, vector<8x16x128xf32>
    %421 = vector.extract_strided_slice %301 {offsets = [0, 0], sizes = [8, 16], strides = [1, 1]} : vector<16x16xf32> to vector<8x16xf32>
    %422 = vector.shape_cast %421 : vector<8x16xf32> to vector<8x16x1xf32>
    %423 = vector.shape_cast %422 : vector<8x16x1xf32> to vector<8x16x1xf32>
    %424 = vector.broadcast %423 : vector<8x16x1xf32> to vector<8x16x64xf32>
    %425 = vector.extract_strided_slice %301 {offsets = [8, 0], sizes = [8, 16], strides = [1, 1]} : vector<16x16xf32> to vector<8x16xf32>
    %426 = vector.shape_cast %425 : vector<8x16xf32> to vector<8x16x1xf32>
    %427 = vector.shape_cast %426 : vector<8x16x1xf32> to vector<8x16x1xf32>
    %428 = vector.broadcast %427 : vector<8x16x1xf32> to vector<8x16x64xf32>
    %429 = tpu.concatenate %424, %428 in 2 : vector<8x16x64xf32>, vector<8x16x64xf32> -> vector<8x16x128xf32>
    %430 = arith.mulf %429, %420 : vector<8x16x128xf32>
    %cst_134 = arith.constant dense<0.000000e+00> : vector<8x128xf32>
    %431 = vector.multi_reduction <add>, %430, %cst_134 [1] : vector<8x16x128xf32> to vector<8x128xf32>
    %432 = vector.broadcast %232 : vector<1x128xf32> to vector<8x128xf32>
    %433 = arith.mulf %432, %304 : vector<8x128xf32>
    %434 = arith.addf %431, %433 : vector<8x128xf32>
    %435 = arith.negf %307 : vector<8x128xf32>
    %436 = math.exp %435 : vector<8x128xf32>
    %cst_135 = arith.constant 1.000000e+00 : f32
    %437 = vector.broadcast %cst_135 : f32 to vector<8x128xf32>
    %438 = arith.addf %437, %436 : vector<8x128xf32>
    %439 = arith.divf %437, %438 : vector<8x128xf32>
    %440 = arith.mulf %307, %439 : vector<8x128xf32>
    %441 = arith.mulf %434, %440 : vector<8x128xf32>
    %442 = vector.extract_strided_slice %441 {offsets = [0, 0], sizes = [8, 64], strides = [1, 1]} : vector<8x128xf32> to vector<8x64xf32>
    %443 = vector.extract_strided_slice %441 {offsets = [0, 64], sizes = [8, 64], strides = [1, 1]} : vector<8x128xf32> to vector<8x64xf32>
    %444 = tpu.concatenate %442, %443 in 0 : vector<8x64xf32>, vector<8x64xf32> -> vector<16x64xf32>
    %445 = arith.truncf %444 : vector<16x64xf32> to vector<16x64xbf16>
    %cst_136 = arith.constant dense<0.000000e+00> : vector<16x128xf32>
    %446 = tpu.matmul %445, %226, %cst_136 {dimension_numbers = #tpu.dot_dimension_numbers<[1], [0], [0], [1], [0, 0, 1, 1], [], []>} : vector<16x64xbf16>, vector<64x128xbf16>, vector<16x128xf32> -> vector<16x128xf32>
    %447 = vector.extract_strided_slice %446 {offsets = [0, 0], sizes = [16, 32], strides = [1, 1]} : vector<16x128xf32> to vector<16x32xf32>
    %c192 = arith.constant 192 : index
    %c0_137 = arith.constant 0 : index
    %448 = vector.load %arg3[%c192, %c0_137] : memref<200x128xf32, #tpu.memory_space<vmem>>, vector<1x32xf32>
    %c193 = arith.constant 193 : index
    %c0_138 = arith.constant 0 : index
    %449 = vector.load %arg3[%c193, %c0_138] : memref<200x128xf32, #tpu.memory_space<vmem>>, vector<1x32xf32>
    %450 = arith.addf %447, %235 : vector<16x32xf32>
    %cst_139 = arith.constant dense<0.000000e+00> : vector<16xf32>
    %451 = vector.multi_reduction <add>, %450, %cst_139 [1] : vector<16x32xf32> to vector<16xf32>
    %452 = vector.shape_cast %451 : vector<16xf32> to vector<16x1xf32>
    %cst_140 = arith.constant 3.200000e+01 : f32
    %453 = vector.broadcast %cst_140 : f32 to vector<16x1xf32>
    %454 = arith.divf %452, %453 : vector<16x1xf32>
    %455 = vector.broadcast %454 : vector<16x1xf32> to vector<16x32xf32>
    %456 = arith.subf %450, %455 : vector<16x32xf32>
    %457 = arith.mulf %456, %456 : vector<16x32xf32>
    %cst_141 = arith.constant dense<0.000000e+00> : vector<16xf32>
    %458 = vector.multi_reduction <add>, %457, %cst_141 [1] : vector<16x32xf32> to vector<16xf32>
    %459 = vector.shape_cast %458 : vector<16xf32> to vector<16x1xf32>
    %cst_142 = arith.constant 3.200000e+01 : f32
    %460 = vector.broadcast %cst_142 : f32 to vector<16x1xf32>
    %461 = arith.divf %459, %460 : vector<16x1xf32>
    %462 = vector.broadcast %454 : vector<16x1xf32> to vector<16x32xf32>
    %463 = arith.subf %450, %462 : vector<16x32xf32>
    %cst_143 = arith.constant 9.99999974E-6 : f32
    %464 = vector.broadcast %cst_143 : f32 to vector<16x1xf32>
    %465 = arith.addf %461, %464 : vector<16x1xf32>
    %466 = math.rsqrt %465 : vector<16x1xf32>
    %467 = vector.broadcast %466 : vector<16x1xf32> to vector<16x32xf32>
    %468 = arith.mulf %463, %467 : vector<16x32xf32>
    %469 = vector.broadcast %448 : vector<1x32xf32> to vector<16x32xf32>
    %470 = arith.mulf %468, %469 : vector<16x32xf32>
    %471 = vector.broadcast %449 : vector<1x32xf32> to vector<16x32xf32>
    %472 = arith.addf %470, %471 : vector<16x32xf32>
    %473 = vector.extract_strided_slice %472 {offsets = [0, 0], sizes = [8, 32], strides = [1, 1]} : vector<16x32xf32> to vector<8x32xf32>
    %474 = vector.extract_strided_slice %472 {offsets = [8, 0], sizes = [8, 32], strides = [1, 1]} : vector<16x32xf32> to vector<8x32xf32>
    %475 = tpu.concatenate %473, %474 in 1 : vector<8x32xf32>, vector<8x32xf32> -> vector<8x64xf32>
    %c0_144 = arith.constant 0 : index
    %c0_145 = arith.constant 0 : index
    %476 = vector.load %arg4[%c0_144, %c0_145] : memref<8x64xf32, #tpu.memory_space<vmem>>, vector<8x64xf32>
    tpu.vector_store %arg4[%c0_144, %c0_145], %475 {strides = array<i32>} : memref<8x64xf32, #tpu.memory_space<vmem>>, vector<8x64xf32>,
    return
  }
  func.func @transform_0(%arg0: i32) -> (i32, i32) {
    %c0_i32 = arith.constant 0 : i32
    %c0_i32_0 = arith.constant 0 : i32
    %c0_i32_1 = arith.constant 0 : i32
    return %c0_i32, %c0_i32_0 : i32, i32
  }
  func.func @transform_1(%arg0: i32) -> (i32, i32) {
    %c0_i32 = arith.constant 0 : i32
    %c0_i32_0 = arith.constant 0 : i32
    %c0_i32_1 = arith.constant 0 : i32
    return %c0_i32, %c0_i32_0 : i32, i32
  }
  func.func @transform_2(%arg0: i32) -> (i32, i32) {
    %c0_i32 = arith.constant 0 : i32
    %c0_i32_0 = arith.constant 0 : i32
    %c0_i32_1 = arith.constant 0 : i32
    return %c0_i32, %c0_i32_0 : i32, i32
  }
  func.func @transform_3(%arg0: i32) -> (i32, i32) {
    %c0_i32 = arith.constant 0 : i32
    %c0_i32_0 = arith.constant 0 : i32
    %c0_i32_1 = arith.constant 0 : i32
    return %c0_i32, %c0_i32_0 : i32, i32
  }
}

</mosaic_0001>

<llo_original>
// kernel: mixer_model_forward.1
$region0: #{mixer_model_forward.1}
  #allocation0 [shape = 'u32[]', space=smem, size = 0x4, offset = 0x4, fixed_abs, tag = 'smem constant byte address 0x4 - core index']
  #allocation1 [shape = 'u32[72,128]{1,0:T(1,128)}', space=vmem, size = 0x9000, scoped, tag = 'internal scratch']
  #allocation2 [shape = 'f32[2,11,64]{2,1,0:T(8,128)}', space=vmem, size = 0x4000, scoped, tag = 'scratch operand']
  #allocation3 [shape = 'f32[8,16,128]{2,1,0:T(8,128)}', space=vmem, size = 0x10000, scoped, tag = 'scratch operand']
  %s0 = inlined_call_operand.hbm [shape: f32[16,32], index: 0, kind: input, shape index: {}]
  %s1 = inlined_call_operand.hbm [shape: bf16[192,128], index: 1, kind: input, shape index: {}]
  %s2 = inlined_call_operand.hbm [shape: f32[200,128], index: 2, kind: input, shape index: {}]
  %s3 = inlined_call_operand.vmem [shape: f32[8,64], index: 3, kind: output, shape index: {}]
  %s4 = sld [smem:[#allocation0]]
  $region34: #{mixer_model_forward.1} parent=0
    _
  %s6 = ssub.s32 1, %s4
  %s7 = scalar_select 0, %s6, %s4
  $region1: #{mixer_model_forward.1} parent=0
    #allocation4 [shape = 'u8[8192]{0}', space=vmem, size = 0x2000, scoped, tag = 'input window, operand 0, single buffered']
    #allocation5 [shape = 's32[1]{0}', space=sflag, size = 0x4, scoped, tag = 'scoped memory for mixer_model_forward.1']
    #allocation6 [shape = 'u8[49152]{0}', space=vmem, size = 0xc000, scoped, tag = 'input window, operand 1, single buffered']
    #allocation7 [shape = 's32[1]{0}', space=sflag, size = 0x4, scoped, tag = 'scoped memory for mixer_model_forward.1']
    #allocation8 [shape = 'u8[102400]{0}', space=vmem, size = 0x19000, scoped, tag = 'input window, operand 2, single buffered']
    %8 = vsyncpa [#allocation5], 0
    %9 = vsyncpa [#allocation7], 0
    // Predicated region
    $region2: #{mixer_model_forward.1} parent=1 // pred_check
      _
    $region3: #{mixer_model_forward.1} parent=1 // pred_check_branch
      %11 = sbr.rel (0) target = $region5
    $region4: #{mixer_model_forward.1} parent=1 // pred_region
      %13 = vsyncadd [#allocation5], 0
      %s14 = sshll.u32 %s0, 4
      %s15 = int_to_ptr.hbm [resolvable:$true] %s14
      %s16 = sshll.u32 [#allocation4], 4
      %s17 = int_to_ptr.vmem [resolvable:$true] %s16
      %22 = dma.hbm_to_vmem [thread:$0]  %s15, 256, %s17, [#allocation5], 128, 128, 8
    $region5: #{mixer_model_forward.1} parent=1 // pred_fallthru
      _
    // Predicated region
    $region6: #{mixer_model_forward.1} parent=1 // pred_check
      _
    $region7: #{mixer_model_forward.1} parent=1 // pred_check_branch
      %24 = sbr.rel (0) target = $region9
    $region8: #{mixer_model_forward.1} parent=1 // pred_region
      %26 = vsyncadd [#allocation7], 0
      %s27 = sshll.u32 %s1, 4
      %s28 = int_to_ptr.hbm [resolvable:$true] %s27
      %s29 = sshll.u32 [#allocation6], 4
      %s30 = int_to_ptr.vmem [resolvable:$true] %s29
      %35 = dma.hbm_to_vmem [thread:$0]  %s28, 1536, %s30, [#allocation7], 64, 64, 4
    $region9: #{mixer_model_forward.1} parent=1 // pred_fallthru
      _
    // Predicated region
    $region10: #{mixer_model_forward.1} parent=1 // pred_check
      _
    $region11: #{mixer_model_forward.1} parent=1 // pred_check_branch
      %37 = sbr.rel (0) target = $region13
    $region12: #{mixer_model_forward.1} parent=1 // pred_region
      %39 = vsyncadd [#allocation7], 0
      %s40 = sshll.u32 %s2, 4
      %s41 = int_to_ptr.hbm [resolvable:$true] %s40
      %s42 = sshll.u32 [#allocation8], 4
      %s43 = int_to_ptr.vmem [resolvable:$true] %s42
      %48 = dma.hbm_to_vmem [thread:$0]  %s41, 3200, %s43, [#allocation7], 128, 128, 8
    $region13: #{mixer_model_forward.1} parent=1 // pred_fallthru
      _
    // Predicated region
    $region14: #{mixer_model_forward.1} parent=1 // pred_check
      _
    $region15: #{mixer_model_forward.1} parent=1 // pred_check_branch
      %50 = sbr.rel (0) target = $region17
    $region16: #{mixer_model_forward.1} parent=1 // pred_region
      %52 = dma.done [#allocation5], 256
    $region17: #{mixer_model_forward.1} parent=1 // pred_fallthru
      _
    // Predicated region
    $region18: #{mixer_model_forward.1} parent=1 // pred_check
      _
    $region19: #{mixer_model_forward.1} parent=1 // pred_check_branch
      %54 = sbr.rel (0) target = $region21
    $region20: #{mixer_model_forward.1} parent=1 // pred_region
      %56 = dma.done [#allocation7], 1536
    $region21: #{mixer_model_forward.1} parent=1 // pred_fallthru
      _
    // Predicated region
    $region22: #{mixer_model_forward.1} parent=1 // pred_check
      _
    $region23: #{mixer_model_forward.1} parent=1 // pred_check_branch
      %58 = sbr.rel (0) target = $region25
    $region24: #{mixer_model_forward.1} parent=1 // pred_region
      %60 = dma.done [#allocation7], 3200
    $region25: #{mixer_model_forward.1} parent=1 // pred_fallthru
      _
    %v62 = vld [vmem:[#allocation4] sm:$0xff]
    %v63 = vld [vmem:[#allocation4 + $0x8] sm:$0xff]
    %v64 = vld [vmem:[#allocation6] sm:$0xf]
    %v65 = vld [vmem:[#allocation6 + $0x4] sm:$0xf]
    %v66 = vld [vmem:[#allocation6 + $0x8] sm:$0xf]
    %v67 = vld [vmem:[#allocation6 + $0xc] sm:$0xf]
    %v68 = vld [vmem:[#allocation6 + $0x10] sm:$0xf]
    %v69 = vld [vmem:[#allocation6 + $0x14] sm:$0xf]
    %v70 = vld [vmem:[#allocation6 + $0x18] sm:$0xf]
    %v71 = vld [vmem:[#allocation6 + $0x1c] sm:$0xf]
    %v72 = vld [vmem:[#allocation6 + $0x20] sm:$0xf]
    %v73 = vld [vmem:[#allocation6 + $0x24] sm:$0xf]
    %v74 = vld [vmem:[#allocation6 + $0x28] sm:$0xf]
    %v75 = vld [vmem:[#allocation6 + $0x2c] sm:$0xf]
    %v76 = vld [vmem:[#allocation8] sm:$0xff]
    %v77 = vld [vmem:[#allocation8 + $0x8] sm:$0xff]
    %v78 = vld [vmem:[#allocation8 + $0x10] sm:$0xff]
    %v79 = vld [vmem:[#allocation8 + $0x18] sm:$0xff]
    %v80 = vld [vmem:[#allocation8 + $0x20] sm:$0xff]
    %v81 = vld [vmem:[#allocation8 + $0x28] sm:$0xff]
    %v82 = vld [vmem:[#allocation8 + $0x30] sm:$0xff]
    %v83 = vld [vmem:[#allocation8 + $0x38] sm:$0xff]
    %v84 = vld [vmem:[#allocation8 + $0x40] sm:$0xff]
    %v85 = vld [vmem:[#allocation8 + $0x48] sm:$0xff]
    %v86 = vld [vmem:[#allocation8 + $0x50] sm:$0xf]
    %v87 = vld [vmem:[#allocation8 + $0x54] sm:$0x1]
    %v88 = vld [vmem:[#allocation8 + $0x55] sm:$0x1]
    %v89 = vld [vmem:[#allocation8 + $0x56] sm:$0x1]
    %v90 = vld [vmem:[#allocation8 + $0x57] sm:$0x1]
    %v91 = vld [vmem:[#allocation8 + $0x58] sm:$0x1]
    %v92 = vadd.f32 %v62, 0.0
    %v93 = vadd.f32 %v63, 0.0
    %vm94 = vcmask 261120
    %v95 = vsel %vm94, %v92, 0.0
    %96 = vadd.xlane.f32.xlu0 %v95
    %v97 = vpop.xlane.xlu0 %96
    %v98 = vsel %vm94, %v93, 0.0
    %99 = vadd.xlane.f32.xlu0 %v98
    %v100 = vpop.xlane.xlu0 %99
    %v101 = vrcp.pop 32.0
    %v102 = vmul.f32 32.0, %v101
    %v103 = vsub.f32 1.0, %v102
    %v104 = vmul.f32 %v101, %v103
    %v105 = vadd.f32 %v101, %v104
    %vm106 = vweird.f32 %v101
    %v107 = vsel %vm106, %v101, %v105
    %v108 = vmul.f32 %v97, %v107
    %v109 = vmul.f32 %v100, %v107
    %v110 = vsub.f32 %v92, %v108
    %v111 = vsub.f32 %v93, %v109
    %v112 = vmul.f32 %v110, %v110
    %v113 = vmul.f32 %v111, %v111
    %v114 = vsel %vm94, %v112, 0.0
    %115 = vadd.xlane.f32.xlu0 %v114
    %v116 = vpop.xlane.xlu0 %115
    %v117 = vsel %vm94, %v113, 0.0
    %118 = vadd.xlane.f32.xlu0 %v117
    %v119 = vpop.xlane.xlu0 %118
    %v120 = vmul.f32 %v116, %v107
    %v121 = vmul.f32 %v119, %v107
    %v122 = vadd.f32 %v120, 1e-05
    %v123 = vadd.f32 %v121, 1e-05
    %v124 = vrsqrt.pop %v122
    %v125 = vmul.f32 %v124, %v122
    %v126 = vmul.f32 %v125, %v124
    %v127 = vmul.f32 0.5, %v126
    %v128 = vsub.f32 1.5, %v127
    %v129 = vmul.f32 %v124, %v128
    %vm130 = vweird.f32 %v122
    %vm131 = vweird.f32 %v124
    %vm132 = vmor %vm130, %vm131
    %v133 = vsel %vm132, %v124, %v129
    %v134 = vrsqrt.pop %v123
    %v135 = vmul.f32 %v134, %v123
    %v136 = vmul.f32 %v135, %v134
    %v137 = vmul.f32 0.5, %v136
    %v138 = vsub.f32 1.5, %v137
    %v139 = vmul.f32 %v134, %v138
    %vm140 = vweird.f32 %v123
    %vm141 = vweird.f32 %v134
    %vm142 = vmor %vm140, %vm141
    %v143 = vsel %vm142, %v134, %v139
    %v144 = vmul.f32 %v110, %v133
    %v145 = vmul.f32 %v111, %v143
    %v146 = vperm.slane %v90, 0
    %v147 = vmul.f32 %v144, %v146
    %v148 = vmul.f32 %v145, %v146
    %v149 = vperm.slane %v91, 0
    %v150 = vadd.f32 %v147, %v149
    %v151 = vadd.f32 %v148, %v149
    %v152 = vpack.c.bf16 %v151, %v150
    %v157 = vunpack.c.l.b16 %v64
    %v158 = vunpack.c.l.b16 %v65
    %v159 = vunpack.c.l.b16 %v66
    %v160 = vunpack.c.l.b16 %v67
    %v161 = vpack.c.b16 %v158, %v157
    %v162 = vpack.c.b16 %v160, %v159
    %v166 = vsel %vm94, %v152, 0
    %168 = vmatpush.bf16.msra.mxu0 0
    %169 = vmatpush.bf16.msra.mxu0 0
    %170 = vmatpush.bf16.msra.mxu0 0
    %171 = vmatpush.bf16.msra.mxu0 0
    %172 = vmatpush.bf16.msra.mxu0 0
    %173 = vmatpush.bf16.msra.mxu0 0
    %174 = vmatpush.bf16.msra.mxu0 %v162
    %175 = vmatpush.bf16.msra.mxu0 %v161
    %176 = vmatmul.bf16.gmra.mxu0 %v166
    %v177 = vpop.f32.mrf.mxu0
    %v178 = vadd.f32 0.0, %v177
    %v179 = vpop.f32.mrf.mxu0
    %v180 = vadd.f32 0.0, %v179
    %181 = vdwg.mxu0
    %vm182 = vcmask 518144
    %183 = vst.msk [vmem:[#allocation2] sm:$0x7] %vm182, 0.0
    %184 = vst.msk [vmem:[#allocation2 + $0x10] sm:$0x7] %vm182, 0.0
    %vm185 = vcmask 523264
    %186 = vst.msk [vmem:[#allocation2 + $0x3] sm:$0xff] %vm185, %v178
    %187 = vst.msk [vmem:[#allocation2 + $0x13] sm:$0xff] %vm185, %v180
    %v188 = vld [vmem:[#allocation2] sm:$0xff]
    %v189 = vld [vmem:[#allocation2 + $0x10] sm:$0xff]
    %v190 = vperm.slane %v86, 0
    %v191 = vmul.f32 %v188, %v190
    %v192 = vmul.f32 %v189, %v190
    %v193 = vperm.slane %v87, 0
    %v194 = vadd.f32 %v193, %v191
    %v195 = vadd.f32 %v193, %v192
    %v196 = vld [vmem:[#allocation2 + $0x1] sm:$0xff]
    %v197 = vld [vmem:[#allocation2 + $0x11] sm:$0xff]
    %v198 = vperm.slane %v86, 1
    %v199 = vmul.f32 %v196, %v198
    %v200 = vmul.f32 %v197, %v198
    %v201 = vadd.f32 %v194, %v199
    %v202 = vadd.f32 %v195, %v200
    %v203 = vld [vmem:[#allocation2 + $0x2] sm:$0xff]
    %v204 = vld [vmem:[#allocation2 + $0x12] sm:$0xff]
    %v205 = vperm.slane %v86, 2
    %v206 = vmul.f32 %v203, %v205
    %v207 = vmul.f32 %v204, %v205
    %v208 = vadd.f32 %v201, %v206
    %v209 = vadd.f32 %v202, %v207
    %v210 = vld [vmem:[#allocation2 + $0x3] sm:$0xff]
    %v211 = vld [vmem:[#allocation2 + $0x13] sm:$0xff]
    %v212 = vperm.slane %v86, 3
    %v213 = vmul.f32 %v210, %v212
    %v214 = vmul.f32 %v211, %v212
    %v215 = vadd.f32 %v208, %v213
    %v216 = vadd.f32 %v209, %v214
    %v217 = vxor.u32 %v215, 2147483648
    %v218 = vxor.u32 %v216, 2147483648
    %v219 = vmul.f32 %v217, 1.442695
    %v220 = vpow.pop %v219
    %v221 = vmul.f32 %v218, 1.442695
    %v222 = vpow.pop %v221
    %v223 = vadd.f32 %v220, 1.0
    %v224 = vadd.f32 %v222, 1.0
    %v225 = vrcp.pop %v223
    %v226 = vmul.f32 %v223, %v225
    %v227 = vsub.f32 1.0, %v226
    %v228 = vmul.f32 %v225, %v227
    %v229 = vadd.f32 %v225, %v228
    %vm230 = vweird.f32 %v223
    %vm231 = vweird.f32 %v225
    %vm232 = vmor %vm230, %vm231
    %v233 = vsel %vm232, %v225, %v229
    %v234 = vand.u32 2147483647, %v223
    %vm235 = vcmp.eq.f32.partialorder %v234, 8.507059e+37
    %v236 = vand.u32 %v223, 2147483648
    %v237 = vor.u32 1.1754944e-38, %v236
    %v238 = vsel %vm235, %v237, %v233
    %v239 = vmul.f32 1.0, %v238
    %v240 = vrcp.pop %v224
    %v241 = vmul.f32 %v224, %v240
    %v242 = vsub.f32 1.0, %v241
    %v243 = vmul.f32 %v240, %v242
    %v244 = vadd.f32 %v240, %v243
    %vm245 = vweird.f32 %v224
    %vm246 = vweird.f32 %v240
    %vm247 = vmor %vm245, %vm246
    %v248 = vsel %vm247, %v240, %v244
    %v249 = vand.u32 2147483647, %v224
    %vm250 = vcmp.eq.f32.partialorder %v249, 8.507059e+37
    %v251 = vand.u32 %v224, 2147483648
    %v252 = vor.u32 1.1754944e-38, %v251
    %v253 = vsel %vm250, %v252, %v248
    %v254 = vmul.f32 1.0, %v253
    %v255 = vmul.f32 %v215, %v239
    %v256 = vmul.f32 %v216, %v254
    %v258 = vsel %vm185, %v255, 0
    %v261 = vsel %vm185, %v256, 0
    %263 = vmatpush.msra.mxu0 0.0
    %264 = vmatpush.msra.mxu0 0.0
    %265 = vmatpush.msra.mxu0 0.0
    %266 = vmatpush.msra.mxu0 0.0
    %267 = vmatpush.msra.mxu0 0.0
    %268 = vmatpush.msra.mxu0 0.0
    %269 = vmatpush.msra.mxu0 0.0
    %270 = vmatpush.msra.mxu0 0.0
    %271 = vmatpush.msra.mxu0 %v83
    %272 = vmatpush.msra.mxu0 %v82
    %273 = vmatpush.msra.mxu0 %v81
    %274 = vmatpush.msra.mxu0 %v80
    %275 = vmatpush.msra.mxu0 %v79
    %276 = vmatpush.msra.mxu0 %v78
    %277 = vmatpush.msra.mxu0 %v77
    %278 = vmatpush.msra.mxu0 %v76
    %279 = vmatmul.f32.gmra.mxu0 %v258
    %v280 = vpop.f32.mrf.mxu0
    %v281 = vadd.f32 0.0, %v280
    %282 = vmatmul.f32.gmra.mxu0 %v261
    %v283 = vpop.f32.mrf.mxu0
    %v284 = vadd.f32 0.0, %v283
    %285 = vdwg.mxu0
    %286 = vrot.lane.b32.xlu0 %v256, 64
    %v287 = vpop.permute.xlu0 %286
    %v289 = vsel %vm185, %v255, %v287
    %291 = vrot.lane.b32.xlu0 %v178, 64
    %v292 = vpop.permute.xlu0 %291
    %v294 = vsel %vm185, %v292, %v180
    %296 = vrot.lane.b32.xlu0 %v284, 64
    %v297 = vpop.permute.xlu0 %296
    %v299 = vsel %vm185, %v281, %v297
    %v300 = vperm.slane %v88, 0
    %v301 = vadd.f32 %v299, %v300
    %v302 = vmax.f32 %v301, 0.0
    %vm303 = vcmp.ne.f32.partialorder %v301, %v301
    %v304 = vadd.f32 %v301, 0.0
    %v305 = vand.u32 2147483647, %v301
    %v306 = vsub.f32 0.0, %v305
    %v307 = vmul.f32 %v306, 1.442695
    %v308 = vpow.pop %v307
    %v309 = vadd.f32 %v308, 1.0
    %v310 = vlog2.pop %v309
    %v311 = vmul.f32 %v310, 0.6931472
    %v312 = vmul.f32 -0.5, %v308
    %v313 = vadd.f32 %v312, 1.0
    %v314 = vmul.f32 %v313, %v308
    %v315 = vand.u32 2147483647, %v308
    %vm316 = vcmp.lt.f32.partialorder %v315, 0.0004427343
    %v317 = vsel %vm316, %v314, %v311
    %v318 = vadd.f32 %v302, %v317
    %v319 = vsel %vm303, %v304, %v318
    %v321 = vrot.slane %v319, 1
    %v322 = vrot.slane %v319, 2
    %v323 = vrot.slane %v319, 3
    %v324 = vrot.slane %v319, 4
    %v325 = vrot.slane %v319, 5
    %v326 = vrot.slane %v319, 6
    %v327 = vrot.slane %v319, 7
    %v328 = vperm.slane %v319, 0
    %v329 = vperm.slane %v321, 0
    %v330 = vperm.slane %v322, 0
    %v331 = vperm.slane %v323, 0
    %v332 = vperm.slane %v324, 0
    %v333 = vperm.slane %v325, 0
    %v334 = vperm.slane %v326, 0
    %v335 = vperm.slane %v327, 0
    %v344 = vmul.f32 %v328, %v84
    %v345 = vmul.f32 %v328, %v85
    %v346 = vmul.f32 %v329, %v84
    %v347 = vmul.f32 %v329, %v85
    %v348 = vmul.f32 %v330, %v84
    %v349 = vmul.f32 %v330, %v85
    %v350 = vmul.f32 %v331, %v84
    %v351 = vmul.f32 %v331, %v85
    %v352 = vmul.f32 %v332, %v84
    %v353 = vmul.f32 %v332, %v85
    %v354 = vmul.f32 %v333, %v84
    %v355 = vmul.f32 %v333, %v85
    %v356 = vmul.f32 %v334, %v84
    %v357 = vmul.f32 %v334, %v85
    %v358 = vmul.f32 %v335, %v84
    %v359 = vmul.f32 %v335, %v85
    %v360 = vmul.f32 %v344, 1.442695
    %v361 = vpow.pop %v360
    %v362 = vmul.f32 %v345, 1.442695
    %v363 = vpow.pop %v362
    %v364 = vmul.f32 %v346, 1.442695
    %v365 = vpow.pop %v364
    %v366 = vmul.f32 %v347, 1.442695
    %v367 = vpow.pop %v366
    %v368 = vmul.f32 %v348, 1.442695
    %v369 = vpow.pop %v368
    %v370 = vmul.f32 %v349, 1.442695
    %v371 = vpow.pop %v370
    %v372 = vmul.f32 %v350, 1.442695
    %v373 = vpow.pop %v372
    %v374 = vmul.f32 %v351, 1.442695
    %v375 = vpow.pop %v374
    %v376 = vmul.f32 %v352, 1.442695
    %v377 = vpow.pop %v376
    %v378 = vmul.f32 %v353, 1.442695
    %v379 = vpow.pop %v378
    %v380 = vmul.f32 %v354, 1.442695
    %v381 = vpow.pop %v380
    %v382 = vmul.f32 %v355, 1.442695
    %v383 = vpow.pop %v382
    %v384 = vmul.f32 %v356, 1.442695
    %v385 = vpow.pop %v384
    %v386 = vmul.f32 %v357, 1.442695
    %v387 = vpow.pop %v386
    %v388 = vmul.f32 %v358, 1.442695
    %v389 = vpow.pop %v388
    %v390 = vmul.f32 %v359, 1.442695
    %v391 = vpow.pop %v390
    %v392 = vperm.slane %v281, 0
    %v393 = vlaneseq
    %v394 = vshrl.u32 %v393, 7
    %v395 = vadd.s32 %v394, 64
    %396 = vset.pattern.permute.xlu0 %v395
    %397 = vperm.xlu0 %396, %v392
    %v398 = vpop.permute.xlu0 %397
    %v399 = vlaneseq
    %v400 = vshrl.u32 %v399, 7
    %v401 = vadd.s32 %v400, 72
    %402 = vset.pattern.permute.xlu0 %v401
    %403 = vperm.xlu0 %402, %v392
    %v404 = vpop.permute.xlu0 %403
    %v405 = vperm.slane %v281, 1
    %v406 = vlaneseq
    %v407 = vshrl.u32 %v406, 7
    %v408 = vadd.s32 %v407, 64
    %409 = vset.pattern.permute.xlu0 %v408
    %410 = vperm.xlu0 %409, %v405
    %v411 = vpop.permute.xlu0 %410
    %v412 = vlaneseq
    %v413 = vshrl.u32 %v412, 7
    %v414 = vadd.s32 %v413, 72
    %415 = vset.pattern.permute.xlu0 %v414
    %416 = vperm.xlu0 %415, %v405
    %v417 = vpop.permute.xlu0 %416
    %v418 = vperm.slane %v281, 2
    %v419 = vlaneseq
    %v420 = vshrl.u32 %v419, 7
    %v421 = vadd.s32 %v420, 64
    %422 = vset.pattern.permute.xlu0 %v421
    %423 = vperm.xlu0 %422, %v418
    %v424 = vpop.permute.xlu0 %423
    %v425 = vlaneseq
    %v426 = vshrl.u32 %v425, 7
    %v427 = vadd.s32 %v426, 72
    %428 = vset.pattern.permute.xlu0 %v427
    %429 = vperm.xlu0 %428, %v418
    %v430 = vpop.permute.xlu0 %429
    %v431 = vperm.slane %v281, 3
    %v432 = vlaneseq
    %v433 = vshrl.u32 %v432, 7
    %v434 = vadd.s32 %v433, 64
    %435 = vset.pattern.permute.xlu0 %v434
    %436 = vperm.xlu0 %435, %v431
    %v437 = vpop.permute.xlu0 %436
    %v438 = vlaneseq
    %v439 = vshrl.u32 %v438, 7
    %v440 = vadd.s32 %v439, 72
    %441 = vset.pattern.permute.xlu0 %v440
    %442 = vperm.xlu0 %441, %v431
    %v443 = vpop.permute.xlu0 %442
    %v444 = vperm.slane %v281, 4
    %v445 = vlaneseq
    %v446 = vshrl.u32 %v445, 7
    %v447 = vadd.s32 %v446, 64
    %448 = vset.pattern.permute.xlu0 %v447
    %449 = vperm.xlu0 %448, %v444
    %v450 = vpop.permute.xlu0 %449
    %v451 = vlaneseq
    %v452 = vshrl.u32 %v451, 7
    %v453 = vadd.s32 %v452, 72
    %454 = vset.pattern.permute.xlu0 %v453
    %455 = vperm.xlu0 %454, %v444
    %v456 = vpop.permute.xlu0 %455
    %v457 = vperm.slane %v281, 5
    %v458 = vlaneseq
    %v459 = vshrl.u32 %v458, 7
    %v460 = vadd.s32 %v459, 64
    %461 = vset.pattern.permute.xlu0 %v460
    %462 = vperm.xlu0 %461, %v457
    %v463 = vpop.permute.xlu0 %462
    %v464 = vlaneseq
    %v465 = vshrl.u32 %v464, 7
    %v466 = vadd.s32 %v465, 72
    %467 = vset.pattern.permute.xlu0 %v466
    %468 = vperm.xlu0 %467, %v457
    %v469 = vpop.permute.xlu0 %468
    %v470 = vperm.slane %v281, 6
    %v471 = vlaneseq
    %v472 = vshrl.u32 %v471, 7
    %v473 = vadd.s32 %v472, 64
    %474 = vset.pattern.permute.xlu0 %v473
    %475 = vperm.xlu0 %474, %v470
    %v476 = vpop.permute.xlu0 %475
    %v477 = vlaneseq
    %v478 = vshrl.u32 %v477, 7
    %v479 = vadd.s32 %v478, 72
    %480 = vset.pattern.permute.xlu0 %v479
    %481 = vperm.xlu0 %480, %v470
    %v482 = vpop.permute.xlu0 %481
    %v483 = vperm.slane %v281, 7
    %v484 = vlaneseq
    %v485 = vshrl.u32 %v484, 7
    %v486 = vadd.s32 %v485, 64
    %487 = vset.pattern.permute.xlu0 %v486
    %488 = vperm.xlu0 %487, %v483
    %v489 = vpop.permute.xlu0 %488
    %v490 = vlaneseq
    %v491 = vshrl.u32 %v490, 7
    %v492 = vadd.s32 %v491, 72
    %493 = vset.pattern.permute.xlu0 %v492
    %494 = vperm.xlu0 %493, %v483
    %v495 = vpop.permute.xlu0 %494
    %v496 = vperm.slane %v284, 0
    %v497 = vlaneseq
    %v498 = vshrl.u32 %v497, 7
    %v499 = vadd.s32 %v498, 64
    %500 = vset.pattern.permute.xlu0 %v499
    %501 = vperm.xlu0 %500, %v496
    %v502 = vpop.permute.xlu0 %501
    %v503 = vlaneseq
    %v504 = vshrl.u32 %v503, 7
    %v505 = vadd.s32 %v504, 72
    %506 = vset.pattern.permute.xlu0 %v505
    %507 = vperm.xlu0 %506, %v496
    %v508 = vpop.permute.xlu0 %507
    %v509 = vperm.slane %v284, 1
    %v510 = vlaneseq
    %v511 = vshrl.u32 %v510, 7
    %v512 = vadd.s32 %v511, 64
    %513 = vset.pattern.permute.xlu0 %v512
    %514 = vperm.xlu0 %513, %v509
    %v515 = vpop.permute.xlu0 %514
    %v516 = vlaneseq
    %v517 = vshrl.u32 %v516, 7
    %v518 = vadd.s32 %v517, 72
    %519 = vset.pattern.permute.xlu0 %v518
    %520 = vperm.xlu0 %519, %v509
    %v521 = vpop.permute.xlu0 %520
    %v522 = vperm.slane %v284, 2
    %v523 = vlaneseq
    %v524 = vshrl.u32 %v523, 7
    %v525 = vadd.s32 %v524, 64
    %526 = vset.pattern.permute.xlu0 %v525
    %527 = vperm.xlu0 %526, %v522
    %v528 = vpop.permute.xlu0 %527
    %v529 = vlaneseq
    %v530 = vshrl.u32 %v529, 7
    %v531 = vadd.s32 %v530, 72
    %532 = vset.pattern.permute.xlu0 %v531
    %533 = vperm.xlu0 %532, %v522
    %v534 = vpop.permute.xlu0 %533
    %v535 = vperm.slane %v284, 3
    %v536 = vlaneseq
    %v537 = vshrl.u32 %v536, 7
    %v538 = vadd.s32 %v537, 64
    %539 = vset.pattern.permute.xlu0 %v538
    %540 = vperm.xlu0 %539, %v535
    %v541 = vpop.permute.xlu0 %540
    %v542 = vlaneseq
    %v543 = vshrl.u32 %v542, 7
    %v544 = vadd.s32 %v543, 72
    %545 = vset.pattern.permute.xlu0 %v544
    %546 = vperm.xlu0 %545, %v535
    %v547 = vpop.permute.xlu0 %546
    %v548 = vperm.slane %v284, 4
    %v549 = vlaneseq
    %v550 = vshrl.u32 %v549, 7
    %v551 = vadd.s32 %v550, 64
    %552 = vset.pattern.permute.xlu0 %v551
    %553 = vperm.xlu0 %552, %v548
    %v554 = vpop.permute.xlu0 %553
    %v555 = vlaneseq
    %v556 = vshrl.u32 %v555, 7
    %v557 = vadd.s32 %v556, 72
    %558 = vset.pattern.permute.xlu0 %v557
    %559 = vperm.xlu0 %558, %v548
    %v560 = vpop.permute.xlu0 %559
    %v561 = vperm.slane %v284, 5
    %v562 = vlaneseq
    %v563 = vshrl.u32 %v562, 7
    %v564 = vadd.s32 %v563, 64
    %565 = vset.pattern.permute.xlu0 %v564
    %566 = vperm.xlu0 %565, %v561
    %v567 = vpop.permute.xlu0 %566
    %v568 = vlaneseq
    %v569 = vshrl.u32 %v568, 7
    %v570 = vadd.s32 %v569, 72
    %571 = vset.pattern.permute.xlu0 %v570
    %572 = vperm.xlu0 %571, %v561
    %v573 = vpop.permute.xlu0 %572
    %v574 = vperm.slane %v284, 6
    %v575 = vlaneseq
    %v576 = vshrl.u32 %v575, 7
    %v577 = vadd.s32 %v576, 64
    %578 = vset.pattern.permute.xlu0 %v577
    %579 = vperm.xlu0 %578, %v574
    %v580 = vpop.permute.xlu0 %579
    %v581 = vlaneseq
    %v582 = vshrl.u32 %v581, 7
    %v583 = vadd.s32 %v582, 72
    %584 = vset.pattern.permute.xlu0 %v583
    %585 = vperm.xlu0 %584, %v574
    %v586 = vpop.permute.xlu0 %585
    %v587 = vperm.slane %v284, 7
    %v588 = vlaneseq
    %v589 = vshrl.u32 %v588, 7
    %v590 = vadd.s32 %v589, 64
    %591 = vset.pattern.permute.xlu0 %v590
    %592 = vperm.xlu0 %591, %v587
    %v593 = vpop.permute.xlu0 %592
    %v594 = vlaneseq
    %v595 = vshrl.u32 %v594, 7
    %v596 = vadd.s32 %v595, 72
    %597 = vset.pattern.permute.xlu0 %v596
    %598 = vperm.xlu0 %597, %v587
    %v599 = vpop.permute.xlu0 %598
    %v600 = vsel %vm185, %v398, %v502
    %v601 = vsel %vm185, %v404, %v508
    %v602 = vsel %vm185, %v411, %v515
    %v603 = vsel %vm185, %v417, %v521
    %v604 = vsel %vm185, %v424, %v528
    %v605 = vsel %vm185, %v430, %v534
    %v606 = vsel %vm185, %v437, %v541
    %v607 = vsel %vm185, %v443, %v547
    %v608 = vsel %vm185, %v450, %v554
    %v609 = vsel %vm185, %v456, %v560
    %v610 = vsel %vm185, %v463, %v567
    %v611 = vsel %vm185, %v469, %v573
    %v612 = vsel %vm185, %v476, %v580
    %v613 = vsel %vm185, %v482, %v586
    %v614 = vsel %vm185, %v489, %v593
    %v615 = vsel %vm185, %v495, %v599
    %v616 = vmul.f32 %v319, %v289
    %v618 = vrot.slane %v616, 1
    %v619 = vrot.slane %v616, 2
    %v620 = vrot.slane %v616, 3
    %v621 = vrot.slane %v616, 4
    %v622 = vrot.slane %v616, 5
    %v623 = vrot.slane %v616, 6
    %v624 = vrot.slane %v616, 7
    %v625 = vperm.slane %v616, 0
    %v626 = vperm.slane %v618, 0
    %v627 = vperm.slane %v619, 0
    %v628 = vperm.slane %v620, 0
    %v629 = vperm.slane %v621, 0
    %v630 = vperm.slane %v622, 0
    %v631 = vperm.slane %v623, 0
    %v632 = vperm.slane %v624, 0
    %v641 = vmul.f32 %v600, %v625
    %v642 = vmul.f32 %v601, %v625
    %v643 = vmul.f32 %v602, %v626
    %v644 = vmul.f32 %v603, %v626
    %v645 = vmul.f32 %v604, %v627
    %v646 = vmul.f32 %v605, %v627
    %v647 = vmul.f32 %v606, %v628
    %v648 = vmul.f32 %v607, %v628
    %v649 = vmul.f32 %v608, %v629
    %v650 = vmul.f32 %v609, %v629
    %v651 = vmul.f32 %v610, %v630
    %v652 = vmul.f32 %v611, %v630
    %v653 = vmul.f32 %v612, %v631
    %v654 = vmul.f32 %v613, %v631
    %v655 = vmul.f32 %v614, %v632
    %v656 = vmul.f32 %v615, %v632
    %v657 = vmul.f32 %v361, 0.0
    %v658 = vmul.f32 %v363, 0.0
    %v659 = vadd.f32 %v657, %v641
    %v660 = vadd.f32 %v658, %v642
    %661 = vst [vmem:[#allocation3] sm:$0xff] %v659
    %662 = vst [vmem:[#allocation3 + $0x8] sm:$0xff] %v660
    %v663 = vmul.f32 %v365, %v659
    %v664 = vmul.f32 %v367, %v660
    %v665 = vadd.f32 %v663, %v643
    %v666 = vadd.f32 %v664, %v644
    %s667 = scalar_lea.vmem [#allocation3], 16
    %668 = vst [vmem:[%s667] sm:$0xff] %v665
    %669 = vst [vmem:[%s667 + $0x8] sm:$0xff] %v666
    %v670 = vmul.f32 %v369, %v665
    %v671 = vmul.f32 %v371, %v666
    %v672 = vadd.f32 %v670, %v645
    %v673 = vadd.f32 %v671, %v646
    %s674 = scalar_lea.vmem [#allocation3], 32
    %675 = vst [vmem:[%s674] sm:$0xff] %v672
    %676 = vst [vmem:[%s674 + $0x8] sm:$0xff] %v673
    %v677 = vmul.f32 %v373, %v672
    %v678 = vmul.f32 %v375, %v673
    %v679 = vadd.f32 %v677, %v647
    %v680 = vadd.f32 %v678, %v648
    %s681 = scalar_lea.vmem [#allocation3], 48
    %682 = vst [vmem:[%s681] sm:$0xff] %v679
    %683 = vst [vmem:[%s681 + $0x8] sm:$0xff] %v680
    %v684 = vmul.f32 %v377, %v679
    %v685 = vmul.f32 %v379, %v680
    %v686 = vadd.f32 %v684, %v649
    %v687 = vadd.f32 %v685, %v650
    %s688 = scalar_lea.vmem [#allocation3], 64
    %689 = vst [vmem:[%s688] sm:$0xff] %v686
    %690 = vst [vmem:[%s688 + $0x8] sm:$0xff] %v687
    %v691 = vmul.f32 %v381, %v686
    %v692 = vmul.f32 %v383, %v687
    %v693 = vadd.f32 %v691, %v651
    %v694 = vadd.f32 %v692, %v652
    %s695 = scalar_lea.vmem [#allocation3], 80
    %696 = vst [vmem:[%s695] sm:$0xff] %v693
    %697 = vst [vmem:[%s695 + $0x8] sm:$0xff] %v694
    %v698 = vmul.f32 %v385, %v693
    %v699 = vmul.f32 %v387, %v694
    %v700 = vadd.f32 %v698, %v653
    %v701 = vadd.f32 %v699, %v654
    %s702 = scalar_lea.vmem [#allocation3], 96
    %703 = vst [vmem:[%s702] sm:$0xff] %v700
    %704 = vst [vmem:[%s702 + $0x8] sm:$0xff] %v701
    %v705 = vmul.f32 %v389, %v700
    %v706 = vmul.f32 %v391, %v701
    %v707 = vadd.f32 %v705, %v655
    %v708 = vadd.f32 %v706, %v656
    %s709 = scalar_lea.vmem [#allocation3], 112
    %710 = vst [vmem:[%s709] sm:$0xff] %v707
    %711 = vst [vmem:[%s709 + $0x8] sm:$0xff] %v708
    %v712 = vld [vmem:[#allocation3] sm:$0xff]
    %v713 = vld [vmem:[#allocation3 + $0x8] sm:$0xff]
    %v714 = vld [vmem:[#allocation3 + $0x10] sm:$0xff]
    %v715 = vld [vmem:[#allocation3 + $0x18] sm:$0xff]
    %v716 = vld [vmem:[#allocation3 + $0x20] sm:$0xff]
    %v717 = vld [vmem:[#allocation3 + $0x28] sm:$0xff]
    %v718 = vld [vmem:[#allocation3 + $0x30] sm:$0xff]
    %v719 = vld [vmem:[#allocation3 + $0x38] sm:$0xff]
    %v720 = vld [vmem:[#allocation3 + $0x40] sm:$0xff]
    %v721 = vld [vmem:[#allocation3 + $0x48] sm:$0xff]
    %v722 = vld [vmem:[#allocation3 + $0x50] sm:$0xff]
    %v723 = vld [vmem:[#allocation3 + $0x58] sm:$0xff]
    %v724 = vld [vmem:[#allocation3 + $0x60] sm:$0xff]
    %v725 = vld [vmem:[#allocation3 + $0x68] sm:$0xff]
    %v726 = vld [vmem:[#allocation3 + $0x70] sm:$0xff]
    %v727 = vld [vmem:[#allocation3 + $0x78] sm:$0xff]
    %v728 = vlaneseq
    %v729 = vshrl.u32 %v728, 7
    %v730 = vadd.s32 %v729, 80
    %731 = vset.pattern.permute.xlu0 %v730
    %732 = vperm.xlu0 %731, %v392
    %v733 = vpop.permute.xlu0 %732
    %v734 = vlaneseq
    %v735 = vshrl.u32 %v734, 7
    %v736 = vadd.s32 %v735, 88
    %737 = vset.pattern.permute.xlu0 %v736
    %738 = vperm.xlu0 %737, %v392
    %v739 = vpop.permute.xlu0 %738
    %v740 = vlaneseq
    %v741 = vshrl.u32 %v740, 7
    %v742 = vadd.s32 %v741, 80
    %743 = vset.pattern.permute.xlu0 %v742
    %744 = vperm.xlu0 %743, %v405
    %v745 = vpop.permute.xlu0 %744
    %v746 = vlaneseq
    %v747 = vshrl.u32 %v746, 7
    %v748 = vadd.s32 %v747, 88
    %749 = vset.pattern.permute.xlu0 %v748
    %750 = vperm.xlu0 %749, %v405
    %v751 = vpop.permute.xlu0 %750
    %v752 = vlaneseq
    %v753 = vshrl.u32 %v752, 7
    %v754 = vadd.s32 %v753, 80
    %755 = vset.pattern.permute.xlu0 %v754
    %756 = vperm.xlu0 %755, %v418
    %v757 = vpop.permute.xlu0 %756
    %v758 = vlaneseq
    %v759 = vshrl.u32 %v758, 7
    %v760 = vadd.s32 %v759, 88
    %761 = vset.pattern.permute.xlu0 %v760
    %762 = vperm.xlu0 %761, %v418
    %v763 = vpop.permute.xlu0 %762
    %v764 = vlaneseq
    %v765 = vshrl.u32 %v764, 7
    %v766 = vadd.s32 %v765, 80
    %767 = vset.pattern.permute.xlu0 %v766
    %768 = vperm.xlu0 %767, %v431
    %v769 = vpop.permute.xlu0 %768
    %v770 = vlaneseq
    %v771 = vshrl.u32 %v770, 7
    %v772 = vadd.s32 %v771, 88
    %773 = vset.pattern.permute.xlu0 %v772
    %774 = vperm.xlu0 %773, %v431
    %v775 = vpop.permute.xlu0 %774
    %v776 = vlaneseq
    %v777 = vshrl.u32 %v776, 7
    %v778 = vadd.s32 %v777, 80
    %779 = vset.pattern.permute.xlu0 %v778
    %780 = vperm.xlu0 %779, %v444
    %v781 = vpop.permute.xlu0 %780
    %v782 = vlaneseq
    %v783 = vshrl.u32 %v782, 7
    %v784 = vadd.s32 %v783, 88
    %785 = vset.pattern.permute.xlu0 %v784
    %786 = vperm.xlu0 %785, %v444
    %v787 = vpop.permute.xlu0 %786
    %v788 = vlaneseq
    %v789 = vshrl.u32 %v788, 7
    %v790 = vadd.s32 %v789, 80
    %791 = vset.pattern.permute.xlu0 %v790
    %792 = vperm.xlu0 %791, %v457
    %v793 = vpop.permute.xlu0 %792
    %v794 = vlaneseq
    %v795 = vshrl.u32 %v794, 7
    %v796 = vadd.s32 %v795, 88
    %797 = vset.pattern.permute.xlu0 %v796
    %798 = vperm.xlu0 %797, %v457
    %v799 = vpop.permute.xlu0 %798
    %v800 = vlaneseq
    %v801 = vshrl.u32 %v800, 7
    %v802 = vadd.s32 %v801, 80
    %803 = vset.pattern.permute.xlu0 %v802
    %804 = vperm.xlu0 %803, %v470
    %v805 = vpop.permute.xlu0 %804
    %v806 = vlaneseq
    %v807 = vshrl.u32 %v806, 7
    %v808 = vadd.s32 %v807, 88
    %809 = vset.pattern.permute.xlu0 %v808
    %810 = vperm.xlu0 %809, %v470
    %v811 = vpop.permute.xlu0 %810
    %v812 = vlaneseq
    %v813 = vshrl.u32 %v812, 7
    %v814 = vadd.s32 %v813, 80
    %815 = vset.pattern.permute.xlu0 %v814
    %816 = vperm.xlu0 %815, %v483
    %v817 = vpop.permute.xlu0 %816
    %v818 = vlaneseq
    %v819 = vshrl.u32 %v818, 7
    %v820 = vadd.s32 %v819, 88
    %821 = vset.pattern.permute.xlu0 %v820
    %822 = vperm.xlu0 %821, %v483
    %v823 = vpop.permute.xlu0 %822
    %v824 = vlaneseq
    %v825 = vshrl.u32 %v824, 7
    %v826 = vadd.s32 %v825, 80
    %827 = vset.pattern.permute.xlu0 %v826
    %828 = vperm.xlu0 %827, %v496
    %v829 = vpop.permute.xlu0 %828
    %v830 = vlaneseq
    %v831 = vshrl.u32 %v830, 7
    %v832 = vadd.s32 %v831, 88
    %833 = vset.pattern.permute.xlu0 %v832
    %834 = vperm.xlu0 %833, %v496
    %v835 = vpop.permute.xlu0 %834
    %v836 = vlaneseq
    %v837 = vshrl.u32 %v836, 7
    %v838 = vadd.s32 %v837, 80
    %839 = vset.pattern.permute.xlu0 %v838
    %840 = vperm.xlu0 %839, %v509
    %v841 = vpop.permute.xlu0 %840
    %v842 = vlaneseq
    %v843 = vshrl.u32 %v842, 7
    %v844 = vadd.s32 %v843, 88
    %845 = vset.pattern.permute.xlu0 %v844
    %846 = vperm.xlu0 %845, %v509
    %v847 = vpop.permute.xlu0 %846
    %v848 = vlaneseq
    %v849 = vshrl.u32 %v848, 7
    %v850 = vadd.s32 %v849, 80
    %851 = vset.pattern.permute.xlu0 %v850
    %852 = vperm.xlu0 %851, %v522
    %v853 = vpop.permute.xlu0 %852
    %v854 = vlaneseq
    %v855 = vshrl.u32 %v854, 7
    %v856 = vadd.s32 %v855, 88
    %857 = vset.pattern.permute.xlu0 %v856
    %858 = vperm.xlu0 %857, %v522
    %v859 = vpop.permute.xlu0 %858
    %v860 = vlaneseq
    %v861 = vshrl.u32 %v860, 7
    %v862 = vadd.s32 %v861, 80
    %863 = vset.pattern.permute.xlu0 %v862
    %864 = vperm.xlu0 %863, %v535
    %v865 = vpop.permute.xlu0 %864
    %v866 = vlaneseq
    %v867 = vshrl.u32 %v866, 7
    %v868 = vadd.s32 %v867, 88
    %869 = vset.pattern.permute.xlu0 %v868
    %870 = vperm.xlu0 %869, %v535
    %v871 = vpop.permute.xlu0 %870
    %v872 = vlaneseq
    %v873 = vshrl.u32 %v872, 7
    %v874 = vadd.s32 %v873, 80
    %875 = vset.pattern.permute.xlu0 %v874
    %876 = vperm.xlu0 %875, %v548
    %v877 = vpop.permute.xlu0 %876
    %v878 = vlaneseq
    %v879 = vshrl.u32 %v878, 7
    %v880 = vadd.s32 %v879, 88
    %881 = vset.pattern.permute.xlu0 %v880
    %882 = vperm.xlu0 %881, %v548
    %v883 = vpop.permute.xlu0 %882
    %v884 = vlaneseq
    %v885 = vshrl.u32 %v884, 7
    %v886 = vadd.s32 %v885, 80
    %887 = vset.pattern.permute.xlu0 %v886
    %888 = vperm.xlu0 %887, %v561
    %v889 = vpop.permute.xlu0 %888
    %v890 = vlaneseq
    %v891 = vshrl.u32 %v890, 7
    %v892 = vadd.s32 %v891, 88
    %893 = vset.pattern.permute.xlu0 %v892
    %894 = vperm.xlu0 %893, %v561
    %v895 = vpop.permute.xlu0 %894
    %v896 = vlaneseq
    %v897 = vshrl.u32 %v896, 7
    %v898 = vadd.s32 %v897, 80
    %899 = vset.pattern.permute.xlu0 %v898
    %900 = vperm.xlu0 %899, %v574
    %v901 = vpop.permute.xlu0 %900
    %v902 = vlaneseq
    %v903 = vshrl.u32 %v902, 7
    %v904 = vadd.s32 %v903, 88
    %905 = vset.pattern.permute.xlu0 %v904
    %906 = vperm.xlu0 %905, %v574
    %v907 = vpop.permute.xlu0 %906
    %v908 = vlaneseq
    %v909 = vshrl.u32 %v908, 7
    %v910 = vadd.s32 %v909, 80
    %911 = vset.pattern.permute.xlu0 %v910
    %912 = vperm.xlu0 %911, %v587
    %v913 = vpop.permute.xlu0 %912
    %v914 = vlaneseq
    %v915 = vshrl.u32 %v914, 7
    %v916 = vadd.s32 %v915, 88
    %917 = vset.pattern.permute.xlu0 %v916
    %918 = vperm.xlu0 %917, %v587
    %v919 = vpop.permute.xlu0 %918
    %v920 = vsel %vm185, %v733, %v829
    %v921 = vsel %vm185, %v739, %v835
    %v922 = vsel %vm185, %v745, %v841
    %v923 = vsel %vm185, %v751, %v847
    %v924 = vsel %vm185, %v757, %v853
    %v925 = vsel %vm185, %v763, %v859
    %v926 = vsel %vm185, %v769, %v865
    %v927 = vsel %vm185, %v775, %v871
    %v928 = vsel %vm185, %v781, %v877
    %v929 = vsel %vm185, %v787, %v883
    %v930 = vsel %vm185, %v793, %v889
    %v931 = vsel %vm185, %v799, %v895
    %v932 = vsel %vm185, %v805, %v901
    %v933 = vsel %vm185, %v811, %v907
    %v934 = vsel %vm185, %v817, %v913
    %v935 = vsel %vm185, %v823, %v919
    %v936 = vmul.f32 %v920, %v712
    %v937 = vmul.f32 %v921, %v713
    %v938 = vmul.f32 %v922, %v714
    %v939 = vmul.f32 %v923, %v715
    %v940 = vmul.f32 %v924, %v716
    %v941 = vmul.f32 %v925, %v717
    %v942 = vmul.f32 %v926, %v718
    %v943 = vmul.f32 %v927, %v719
    %v944 = vmul.f32 %v928, %v720
    %v945 = vmul.f32 %v929, %v721
    %v946 = vmul.f32 %v930, %v722
    %v947 = vmul.f32 %v931, %v723
    %v948 = vmul.f32 %v932, %v724
    %v949 = vmul.f32 %v933, %v725
    %v950 = vmul.f32 %v934, %v726
    %v951 = vmul.f32 %v935, %v727
    %v952 = vadd.f32 %v936, %v937
    %v953 = vrot.slane %v952, 4
    %v954 = vadd.f32 %v952, %v953
    %v955 = vrot.slane %v954, 2
    %v956 = vadd.f32 %v954, %v955
    %v957 = vrot.slane %v956, 1
    %v958 = vadd.f32 %v956, %v957
    %v959 = vadd.f32 %v938, %v939
    %v960 = vrot.slane %v959, 4
    %v961 = vadd.f32 %v959, %v960
    %v962 = vrot.slane %v961, 2
    %v963 = vadd.f32 %v961, %v962
    %v964 = vrot.slane %v963, 1
    %v965 = vadd.f32 %v963, %v964
    %v966 = vadd.f32 %v940, %v941
    %v967 = vrot.slane %v966, 4
    %v968 = vadd.f32 %v966, %v967
    %v969 = vrot.slane %v968, 2
    %v970 = vadd.f32 %v968, %v969
    %v971 = vrot.slane %v970, 1
    %v972 = vadd.f32 %v970, %v971
    %v973 = vadd.f32 %v942, %v943
    %v974 = vrot.slane %v973, 4
    %v975 = vadd.f32 %v973, %v974
    %v976 = vrot.slane %v975, 2
    %v977 = vadd.f32 %v975, %v976
    %v978 = vrot.slane %v977, 1
    %v979 = vadd.f32 %v977, %v978
    %v980 = vadd.f32 %v944, %v945
    %v981 = vrot.slane %v980, 4
    %v982 = vadd.f32 %v980, %v981
    %v983 = vrot.slane %v982, 2
    %v984 = vadd.f32 %v982, %v983
    %v985 = vrot.slane %v984, 1
    %v986 = vadd.f32 %v984, %v985
    %v987 = vadd.f32 %v946, %v947
    %v988 = vrot.slane %v987, 4
    %v989 = vadd.f32 %v987, %v988
    %v990 = vrot.slane %v989, 2
    %v991 = vadd.f32 %v989, %v990
    %v992 = vrot.slane %v991, 1
    %v993 = vadd.f32 %v991, %v992
    %v994 = vadd.f32 %v948, %v949
    %v995 = vrot.slane %v994, 4
    %v996 = vadd.f32 %v994, %v995
    %v997 = vrot.slane %v996, 2
    %v998 = vadd.f32 %v996, %v997
    %v999 = vrot.slane %v998, 1
    %v1000 = vadd.f32 %v998, %v999
    %v1001 = vadd.f32 %v950, %v951
    %v1002 = vrot.slane %v1001, 4
    %v1003 = vadd.f32 %v1001, %v1002
    %v1004 = vrot.slane %v1003, 2
    %v1005 = vadd.f32 %v1003, %v1004
    %v1006 = vrot.slane %v1005, 1
    %v1007 = vadd.f32 %v1005, %v1006
    %v1008 = vperm.slane %v89, 0
    %v1009 = vmul.f32 %v1008, %v289
    %v1011 = vrot.slane %v1009, 1
    %v1012 = vrot.slane %v1009, 2
    %v1013 = vrot.slane %v1009, 3
    %v1014 = vrot.slane %v1009, 4
    %v1015 = vrot.slane %v1009, 5
    %v1016 = vrot.slane %v1009, 6
    %v1017 = vrot.slane %v1009, 7
    %v1026 = vadd.f32 %v958, %v1009
    %v1027 = vadd.f32 %v965, %v1011
    %v1028 = vadd.f32 %v972, %v1012
    %v1029 = vadd.f32 %v979, %v1013
    %v1030 = vadd.f32 %v986, %v1014
    %v1031 = vadd.f32 %v993, %v1015
    %v1032 = vadd.f32 %v1000, %v1016
    %v1033 = vadd.f32 %v1007, %v1017
    %v1034 = vxor.u32 %v294, 2147483648
    %v1035 = vmul.f32 %v1034, 1.442695
    %v1036 = vpow.pop %v1035
    %v1037 = vadd.f32 %v1036, 1.0
    %v1038 = vrcp.pop %v1037
    %v1039 = vmul.f32 %v1037, %v1038
    %v1040 = vsub.f32 1.0, %v1039
    %v1041 = vmul.f32 %v1038, %v1040
    %v1042 = vadd.f32 %v1038, %v1041
    %vm1043 = vweird.f32 %v1037
    %vm1044 = vweird.f32 %v1038
    %vm1045 = vmor %vm1043, %vm1044
    %v1046 = vsel %vm1045, %v1038, %v1042
    %v1047 = vand.u32 2147483647, %v1037
    %vm1048 = vcmp.eq.f32.partialorder %v1047, 8.507059e+37
    %v1049 = vand.u32 %v1037, 2147483648
    %v1050 = vor.u32 1.1754944e-38, %v1049
    %v1051 = vsel %vm1048, %v1050, %v1046
    %v1052 = vmul.f32 1.0, %v1051
    %v1053 = vmul.f32 %v294, %v1052
    %v1055 = vrot.slane %v1053, 1
    %v1056 = vrot.slane %v1053, 2
    %v1057 = vrot.slane %v1053, 3
    %v1058 = vrot.slane %v1053, 4
    %v1059 = vrot.slane %v1053, 5
    %v1060 = vrot.slane %v1053, 6
    %v1061 = vrot.slane %v1053, 7
    %v1070 = vmul.f32 %v1026, %v1053
    %v1071 = vmul.f32 %v1027, %v1055
    %v1072 = vmul.f32 %v1028, %v1056
    %v1073 = vmul.f32 %v1029, %v1057
    %v1074 = vmul.f32 %v1030, %v1058
    %v1075 = vmul.f32 %v1031, %v1059
    %v1076 = vmul.f32 %v1032, %v1060
    %v1077 = vmul.f32 %v1033, %v1061
    %v1086 = vrot.slane %v1071, 7
    %vm1087 = vcmask 1041409
    %v1088 = vsel %vm1087, %v1086, %v1070
    %v1089 = vrot.slane %v1072, 6
    %vm1090 = vcmask 1042434
    %v1091 = vsel %vm1090, %v1089, %v1088
    %v1092 = vrot.slane %v1073, 5
    %vm1093 = vcmask 1043459
    %v1094 = vsel %vm1093, %v1092, %v1091
    %v1095 = vrot.slane %v1074, 4
    %vm1096 = vcmask 1044484
    %v1097 = vsel %vm1096, %v1095, %v1094
    %v1098 = vrot.slane %v1075, 3
    %vm1099 = vcmask 1045509
    %v1100 = vsel %vm1099, %v1098, %v1097
    %v1101 = vrot.slane %v1076, 2
    %vm1102 = vcmask 1046534
    %v1103 = vsel %vm1102, %v1101, %v1100
    %v1104 = vrot.slane %v1077, 1
    %vm1105 = vcmask 1047559
    %v1106 = vsel %vm1105, %v1104, %v1103
    %1108 = vrot.lane.b32.xlu0 %v1106, 64
    %v1109 = vpop.permute.xlu0 %1108
    %v1111 = vpack.c.bf16 %v1109, %v1106
    %v1120 = vunpack.c.l.b16 %v68
    %v1121 = vunpack.c.l.b16 %v69
    %v1122 = vunpack.c.l.b16 %v70
    %v1123 = vunpack.c.l.b16 %v71
    %v1124 = vunpack.c.l.b16 %v72
    %v1125 = vunpack.c.l.b16 %v73
    %v1126 = vunpack.c.l.b16 %v74
    %v1127 = vunpack.c.l.b16 %v75
    %v1128 = vpack.c.b16 %v1121, %v1120
    %v1129 = vpack.c.b16 %v1123, %v1122
    %v1130 = vpack.c.b16 %v1125, %v1124
    %v1131 = vpack.c.b16 %v1127, %v1126
    %v1137 = vsel %vm185, %v1111, 0
    %1139 = vmatpush.bf16.msra.mxu0 0
    %1140 = vmatpush.bf16.msra.mxu0 0
    %1141 = vmatpush.bf16.msra.mxu0 0
    %1142 = vmatpush.bf16.msra.mxu0 0
    %1143 = vmatpush.bf16.msra.mxu0 %v1131
    %1144 = vmatpush.bf16.msra.mxu0 %v1130
    %1145 = vmatpush.bf16.msra.mxu0 %v1129
    %1146 = vmatpush.bf16.msra.mxu0 %v1128
    %1147 = vmatmul.bf16.gmra.mxu0 %v1137
    %v1148 = vpop.f32.mrf.mxu0
    %v1149 = vadd.f32 0.0, %v1148
    %v1150 = vpop.f32.mrf.mxu0
    %v1151 = vadd.f32 0.0, %v1150
    %1152 = vdwg.mxu0
    %v1153 = vld [vmem:[#allocation6 + $0x30] sm:$0xf]
    %v1154 = vld [vmem:[#allocation6 + $0x34] sm:$0xf]
    %v1155 = vld [vmem:[#allocation6 + $0x38] sm:$0xf]
    %v1156 = vld [vmem:[#allocation6 + $0x3c] sm:$0xf]
    %v1157 = vld [vmem:[#allocation6 + $0x40] sm:$0xf]
    %v1158 = vld [vmem:[#allocation6 + $0x44] sm:$0xf]
    %v1159 = vld [vmem:[#allocation6 + $0x48] sm:$0xf]
    %v1160 = vld [vmem:[#allocation6 + $0x4c] sm:$0xf]
    %v1161 = vld [vmem:[#allocation6 + $0x50] sm:$0xf]
    %v1162 = vld [vmem:[#allocation6 + $0x54] sm:$0xf]
    %v1163 = vld [vmem:[#allocation6 + $0x58] sm:$0xf]
    %v1164 = vld [vmem:[#allocation6 + $0x5c] sm:$0xf]
    %v1165 = vld [vmem:[#allocation8 + $0x60] sm:$0xff]
    %v1166 = vld [vmem:[#allocation8 + $0x68] sm:$0xff]
    %v1167 = vld [vmem:[#allocation8 + $0x70] sm:$0xff]
    %v1168 = vld [vmem:[#allocation8 + $0x78] sm:$0xff]
    %v1169 = vld [vmem:[#allocation8 + $0x80] sm:$0xff]
    %v1170 = vld [vmem:[#allocation8 + $0x88] sm:$0xff]
    %v1171 = vld [vmem:[#allocation8 + $0x90] sm:$0xff]
    %v1172 = vld [vmem:[#allocation8 + $0x98] sm:$0xff]
    %v1173 = vld [vmem:[#allocation8 + $0xa0] sm:$0xff]
    %v1174 = vld [vmem:[#allocation8 + $0xa8] sm:$0xff]
    %v1175 = vld [vmem:[#allocation8 + $0xb0] sm:$0xf]
    %v1176 = vld [vmem:[#allocation8 + $0xb4] sm:$0x1]
    %v1177 = vld [vmem:[#allocation8 + $0xb5] sm:$0x1]
    %v1178 = vld [vmem:[#allocation8 + $0xb6] sm:$0x1]
    %v1179 = vld [vmem:[#allocation8 + $0xb7] sm:$0x1]
    %v1180 = vld [vmem:[#allocation8 + $0xb8] sm:$0x1]
    %v1181 = vadd.f32 %v1149, %v92
    %v1182 = vadd.f32 %v1151, %v93
    %v1183 = vsel %vm94, %v1181, 0.0
    %1184 = vadd.xlane.f32.xlu0 %v1183
    %v1185 = vpop.xlane.xlu0 %1184
    %v1186 = vsel %vm94, %v1182, 0.0
    %1187 = vadd.xlane.f32.xlu0 %v1186
    %v1188 = vpop.xlane.xlu0 %1187
    %v1189 = vmul.f32 %v1185, %v107
    %v1190 = vmul.f32 %v1188, %v107
    %v1191 = vsub.f32 %v1181, %v1189
    %v1192 = vsub.f32 %v1182, %v1190
    %v1193 = vmul.f32 %v1191, %v1191
    %v1194 = vmul.f32 %v1192, %v1192
    %v1195 = vsel %vm94, %v1193, 0.0
    %1196 = vadd.xlane.f32.xlu0 %v1195
    %v1197 = vpop.xlane.xlu0 %1196
    %v1198 = vsel %vm94, %v1194, 0.0
    %1199 = vadd.xlane.f32.xlu0 %v1198
    %v1200 = vpop.xlane.xlu0 %1199
    %v1201 = vmul.f32 %v1197, %v107
    %v1202 = vmul.f32 %v1200, %v107
    %v1203 = vadd.f32 %v1201, 1e-05
    %v1204 = vadd.f32 %v1202, 1e-05
    %v1205 = vrsqrt.pop %v1203
    %v1206 = vmul.f32 %v1205, %v1203
    %v1207 = vmul.f32 %v1206, %v1205
    %v1208 = vmul.f32 0.5, %v1207
    %v1209 = vsub.f32 1.5, %v1208
    %v1210 = vmul.f32 %v1205, %v1209
    %vm1211 = vweird.f32 %v1203
    %vm1212 = vweird.f32 %v1205
    %vm1213 = vmor %vm1211, %vm1212
    %v1214 = vsel %vm1213, %v1205, %v1210
    %v1215 = vrsqrt.pop %v1204
    %v1216 = vmul.f32 %v1215, %v1204
    %v1217 = vmul.f32 %v1216, %v1215
    %v1218 = vmul.f32 0.5, %v1217
    %v1219 = vsub.f32 1.5, %v1218
    %v1220 = vmul.f32 %v1215, %v1219
    %vm1221 = vweird.f32 %v1204
    %vm1222 = vweird.f32 %v1215
    %vm1223 = vmor %vm1221, %vm1222
    %v1224 = vsel %vm1223, %v1215, %v1220
    %v1225 = vmul.f32 %v1191, %v1214
    %v1226 = vmul.f32 %v1192, %v1224
    %v1227 = vperm.slane %v1179, 0
    %v1228 = vmul.f32 %v1225, %v1227
    %v1229 = vmul.f32 %v1226, %v1227
    %v1230 = vperm.slane %v1180, 0
    %v1231 = vadd.f32 %v1228, %v1230
    %v1232 = vadd.f32 %v1229, %v1230
    %v1233 = vpack.c.bf16 %v1232, %v1231
    %v1238 = vunpack.c.l.b16 %v1153
    %v1239 = vunpack.c.l.b16 %v1154
    %v1240 = vunpack.c.l.b16 %v1155
    %v1241 = vunpack.c.l.b16 %v1156
    %v1242 = vpack.c.b16 %v1239, %v1238
    %v1243 = vpack.c.b16 %v1241, %v1240
    %v1247 = vsel %vm94, %v1233, 0
    %1249 = vmatpush.bf16.msra.mxu0 0
    %1250 = vmatpush.bf16.msra.mxu0 0
    %1251 = vmatpush.bf16.msra.mxu0 0
    %1252 = vmatpush.bf16.msra.mxu0 0
    %1253 = vmatpush.bf16.msra.mxu0 0
    %1254 = vmatpush.bf16.msra.mxu0 0
    %1255 = vmatpush.bf16.msra.mxu0 %v1243
    %1256 = vmatpush.bf16.msra.mxu0 %v1242
    %1257 = vmatmul.bf16.gmra.mxu0 %v1247
    %v1258 = vpop.f32.mrf.mxu0
    %v1259 = vadd.f32 0.0, %v1258
    %v1260 = vpop.f32.mrf.mxu0
    %v1261 = vadd.f32 0.0, %v1260
    %1262 = vdwg.mxu0
    %1263 = vst.msk [vmem:[#allocation2] sm:$0x7] %vm182, 0.0
    %1264 = vst.msk [vmem:[#allocation2 + $0x10] sm:$0x7] %vm182, 0.0
    %1265 = vst.msk [vmem:[#allocation2 + $0x3] sm:$0xff] %vm185, %v1259
    %1266 = vst.msk [vmem:[#allocation2 + $0x13] sm:$0xff] %vm185, %v1261
    %v1267 = vld [vmem:[#allocation2] sm:$0xff]
    %v1268 = vld [vmem:[#allocation2 + $0x10] sm:$0xff]
    %v1269 = vperm.slane %v1175, 0
    %v1270 = vmul.f32 %v1267, %v1269
    %v1271 = vmul.f32 %v1268, %v1269
    %v1272 = vperm.slane %v1176, 0
    %v1273 = vadd.f32 %v1272, %v1270
    %v1274 = vadd.f32 %v1272, %v1271
    %v1275 = vld [vmem:[#allocation2 + $0x1] sm:$0xff]
    %v1276 = vld [vmem:[#allocation2 + $0x11] sm:$0xff]
    %v1277 = vperm.slane %v1175, 1
    %v1278 = vmul.f32 %v1275, %v1277
    %v1279 = vmul.f32 %v1276, %v1277
    %v1280 = vadd.f32 %v1273, %v1278
    %v1281 = vadd.f32 %v1274, %v1279
    %v1282 = vld [vmem:[#allocation2 + $0x2] sm:$0xff]
    %v1283 = vld [vmem:[#allocation2 + $0x12] sm:$0xff]
    %v1284 = vperm.slane %v1175, 2
    %v1285 = vmul.f32 %v1282, %v1284
    %v1286 = vmul.f32 %v1283, %v1284
    %v1287 = vadd.f32 %v1280, %v1285
    %v1288 = vadd.f32 %v1281, %v1286
    %v1289 = vld [vmem:[#allocation2 + $0x3] sm:$0xff]
    %v1290 = vld [vmem:[#allocation2 + $0x13] sm:$0xff]
    %v1291 = vperm.slane %v1175, 3
    %v1292 = vmul.f32 %v1289, %v1291
    %v1293 = vmul.f32 %v1290, %v1291
    %v1294 = vadd.f32 %v1287, %v1292
    %v1295 = vadd.f32 %v1288, %v1293
    %v1296 = vxor.u32 %v1294, 2147483648
    %v1297 = vxor.u32 %v1295, 2147483648
    %v1298 = vmul.f32 %v1296, 1.442695
    %v1299 = vpow.pop %v1298
    %v1300 = vmul.f32 %v1297, 1.442695
    %v1301 = vpow.pop %v1300
    %v1302 = vadd.f32 %v1299, 1.0
    %v1303 = vadd.f32 %v1301, 1.0
    %v1304 = vrcp.pop %v1302
    %v1305 = vmul.f32 %v1302, %v1304
    %v1306 = vsub.f32 1.0, %v1305
    %v1307 = vmul.f32 %v1304, %v1306
    %v1308 = vadd.f32 %v1304, %v1307
    %vm1309 = vweird.f32 %v1302
    %vm1310 = vweird.f32 %v1304
    %vm1311 = vmor %vm1309, %vm1310
    %v1312 = vsel %vm1311, %v1304, %v1308
    %v1313 = vand.u32 2147483647, %v1302
    %vm1314 = vcmp.eq.f32.partialorder %v1313, 8.507059e+37
    %v1315 = vand.u32 %v1302, 2147483648
    %v1316 = vor.u32 1.1754944e-38, %v1315
    %v1317 = vsel %vm1314, %v1316, %v1312
    %v1318 = vmul.f32 1.0, %v1317
    %v1319 = vrcp.pop %v1303
    %v1320 = vmul.f32 %v1303, %v1319
    %v1321 = vsub.f32 1.0, %v1320
    %v1322 = vmul.f32 %v1319, %v1321
    %v1323 = vadd.f32 %v1319, %v1322
    %vm1324 = vweird.f32 %v1303
    %vm1325 = vweird.f32 %v1319
    %vm1326 = vmor %vm1324, %vm1325
    %v1327 = vsel %vm1326, %v1319, %v1323
    %v1328 = vand.u32 2147483647, %v1303
    %vm1329 = vcmp.eq.f32.partialorder %v1328, 8.507059e+37
    %v1330 = vand.u32 %v1303, 2147483648
    %v1331 = vor.u32 1.1754944e-38, %v1330
    %v1332 = vsel %vm1329, %v1331, %v1327
    %v1333 = vmul.f32 1.0, %v1332
    %v1334 = vmul.f32 %v1294, %v1318
    %v1335 = vmul.f32 %v1295, %v1333
    %v1337 = vsel %vm185, %v1334, 0
    %v1340 = vsel %vm185, %v1335, 0
    %1342 = vmatpush.msra.mxu0 0.0
    %1343 = vmatpush.msra.mxu0 0.0
    %1344 = vmatpush.msra.mxu0 0.0
    %1345 = vmatpush.msra.mxu0 0.0
    %1346 = vmatpush.msra.mxu0 0.0
    %1347 = vmatpush.msra.mxu0 0.0
    %1348 = vmatpush.msra.mxu0 0.0
    %1349 = vmatpush.msra.mxu0 0.0
    %1350 = vmatpush.msra.mxu0 %v1172
    %1351 = vmatpush.msra.mxu0 %v1171
    %1352 = vmatpush.msra.mxu0 %v1170
    %1353 = vmatpush.msra.mxu0 %v1169
    %1354 = vmatpush.msra.mxu0 %v1168
    %1355 = vmatpush.msra.mxu0 %v1167
    %1356 = vmatpush.msra.mxu0 %v1166
    %1357 = vmatpush.msra.mxu0 %v1165
    %1358 = vmatmul.f32.gmra.mxu0 %v1337
    %v1359 = vpop.f32.mrf.mxu0
    %v1360 = vadd.f32 0.0, %v1359
    %1361 = vmatmul.f32.gmra.mxu0 %v1340
    %v1362 = vpop.f32.mrf.mxu0
    %v1363 = vadd.f32 0.0, %v1362
    %1364 = vdwg.mxu0
    %1365 = vrot.lane.b32.xlu0 %v1335, 64
    %v1366 = vpop.permute.xlu0 %1365
    %v1368 = vsel %vm185, %v1334, %v1366
    %1370 = vrot.lane.b32.xlu0 %v1259, 64
    %v1371 = vpop.permute.xlu0 %1370
    %v1373 = vsel %vm185, %v1371, %v1261
    %1375 = vrot.lane.b32.xlu0 %v1363, 64
    %v1376 = vpop.permute.xlu0 %1375
    %v1378 = vsel %vm185, %v1360, %v1376
    %v1379 = vperm.slane %v1177, 0
    %v1380 = vadd.f32 %v1378, %v1379
    %v1381 = vmax.f32 %v1380, 0.0
    %vm1382 = vcmp.ne.f32.partialorder %v1380, %v1380
    %v1383 = vadd.f32 %v1380, 0.0
    %v1384 = vand.u32 2147483647, %v1380
    %v1385 = vsub.f32 0.0, %v1384
    %v1386 = vmul.f32 %v1385, 1.442695
    %v1387 = vpow.pop %v1386
    %v1388 = vadd.f32 %v1387, 1.0
    %v1389 = vlog2.pop %v1388
    %v1390 = vmul.f32 %v1389, 0.6931472
    %v1391 = vmul.f32 -0.5, %v1387
    %v1392 = vadd.f32 %v1391, 1.0
    %v1393 = vmul.f32 %v1392, %v1387
    %v1394 = vand.u32 2147483647, %v1387
    %vm1395 = vcmp.lt.f32.partialorder %v1394, 0.0004427343
    %v1396 = vsel %vm1395, %v1393, %v1390
    %v1397 = vadd.f32 %v1381, %v1396
    %v1398 = vsel %vm1382, %v1383, %v1397
    %v1400 = vrot.slane %v1398, 1
    %v1401 = vrot.slane %v1398, 2
    %v1402 = vrot.slane %v1398, 3
    %v1403 = vrot.slane %v1398, 4
    %v1404 = vrot.slane %v1398, 5
    %v1405 = vrot.slane %v1398, 6
    %v1406 = vrot.slane %v1398, 7
    %v1407 = vperm.slane %v1398, 0
    %v1408 = vperm.slane %v1400, 0
    %v1409 = vperm.slane %v1401, 0
    %v1410 = vperm.slane %v1402, 0
    %v1411 = vperm.slane %v1403, 0
    %v1412 = vperm.slane %v1404, 0
    %v1413 = vperm.slane %v1405, 0
    %v1414 = vperm.slane %v1406, 0
    %v1423 = vmul.f32 %v1407, %v1173
    %v1424 = vmul.f32 %v1407, %v1174
    %v1425 = vmul.f32 %v1408, %v1173
    %v1426 = vmul.f32 %v1408, %v1174
    %v1427 = vmul.f32 %v1409, %v1173
    %v1428 = vmul.f32 %v1409, %v1174
    %v1429 = vmul.f32 %v1410, %v1173
    %v1430 = vmul.f32 %v1410, %v1174
    %v1431 = vmul.f32 %v1411, %v1173
    %v1432 = vmul.f32 %v1411, %v1174
    %v1433 = vmul.f32 %v1412, %v1173
    %v1434 = vmul.f32 %v1412, %v1174
    %v1435 = vmul.f32 %v1413, %v1173
    %v1436 = vmul.f32 %v1413, %v1174
    %v1437 = vmul.f32 %v1414, %v1173
    %v1438 = vmul.f32 %v1414, %v1174
    %v1439 = vmul.f32 %v1423, 1.442695
    %v1440 = vpow.pop %v1439
    %v1441 = vmul.f32 %v1424, 1.442695
    %v1442 = vpow.pop %v1441
    %v1443 = vmul.f32 %v1425, 1.442695
    %v1444 = vpow.pop %v1443
    %v1445 = vmul.f32 %v1426, 1.442695
    %v1446 = vpow.pop %v1445
    %v1447 = vmul.f32 %v1427, 1.442695
    %v1448 = vpow.pop %v1447
    %v1449 = vmul.f32 %v1428, 1.442695
    %v1450 = vpow.pop %v1449
    %v1451 = vmul.f32 %v1429, 1.442695
    %v1452 = vpow.pop %v1451
    %v1453 = vmul.f32 %v1430, 1.442695
    %v1454 = vpow.pop %v1453
    %v1455 = vmul.f32 %v1431, 1.442695
    %v1456 = vpow.pop %v1455
    %v1457 = vmul.f32 %v1432, 1.442695
    %v1458 = vpow.pop %v1457
    %v1459 = vmul.f32 %v1433, 1.442695
    %v1460 = vpow.pop %v1459
    %v1461 = vmul.f32 %v1434, 1.442695
    %v1462 = vpow.pop %v1461
    %v1463 = vmul.f32 %v1435, 1.442695
    %v1464 = vpow.pop %v1463
    %v1465 = vmul.f32 %v1436, 1.442695
    %v1466 = vpow.pop %v1465
    %v1467 = vmul.f32 %v1437, 1.442695
    %v1468 = vpow.pop %v1467
    %v1469 = vmul.f32 %v1438, 1.442695
    %v1470 = vpow.pop %v1469
    %v1471 = vperm.slane %v1360, 0
    %v1472 = vlaneseq
    %v1473 = vshrl.u32 %v1472, 7
    %v1474 = vadd.s32 %v1473, 64
    %1475 = vset.pattern.permute.xlu0 %v1474
    %1476 = vperm.xlu0 %1475, %v1471
    %v1477 = vpop.permute.xlu0 %1476
    %v1478 = vlaneseq
    %v1479 = vshrl.u32 %v1478, 7
    %v1480 = vadd.s32 %v1479, 72
    %1481 = vset.pattern.permute.xlu0 %v1480
    %1482 = vperm.xlu0 %1481, %v1471
    %v1483 = vpop.permute.xlu0 %1482
    %v1484 = vperm.slane %v1360, 1
    %v1485 = vlaneseq
    %v1486 = vshrl.u32 %v1485, 7
    %v1487 = vadd.s32 %v1486, 64
    %1488 = vset.pattern.permute.xlu0 %v1487
    %1489 = vperm.xlu0 %1488, %v1484
    %v1490 = vpop.permute.xlu0 %1489
    %v1491 = vlaneseq
    %v1492 = vshrl.u32 %v1491, 7
    %v1493 = vadd.s32 %v1492, 72
    %1494 = vset.pattern.permute.xlu0 %v1493
    %1495 = vperm.xlu0 %1494, %v1484
    %v1496 = vpop.permute.xlu0 %1495
    %v1497 = vperm.slane %v1360, 2
    %v1498 = vlaneseq
    %v1499 = vshrl.u32 %v1498, 7
    %v1500 = vadd.s32 %v1499, 64
    %1501 = vset.pattern.permute.xlu0 %v1500
    %1502 = vperm.xlu0 %1501, %v1497
    %v1503 = vpop.permute.xlu0 %1502
    %v1504 = vlaneseq
    %v1505 = vshrl.u32 %v1504, 7
    %v1506 = vadd.s32 %v1505, 72
    %1507 = vset.pattern.permute.xlu0 %v1506
    %1508 = vperm.xlu0 %1507, %v1497
    %v1509 = vpop.permute.xlu0 %1508
    %v1510 = vperm.slane %v1360, 3
    %v1511 = vlaneseq
    %v1512 = vshrl.u32 %v1511, 7
    %v1513 = vadd.s32 %v1512, 64
    %1514 = vset.pattern.permute.xlu0 %v1513
    %1515 = vperm.xlu0 %1514, %v1510
    %v1516 = vpop.permute.xlu0 %1515
    %v1517 = vlaneseq
    %v1518 = vshrl.u32 %v1517, 7
    %v1519 = vadd.s32 %v1518, 72
    %1520 = vset.pattern.permute.xlu0 %v1519
    %1521 = vperm.xlu0 %1520, %v1510
    %v1522 = vpop.permute.xlu0 %1521
    %v1523 = vperm.slane %v1360, 4
    %v1524 = vlaneseq
    %v1525 = vshrl.u32 %v1524, 7
    %v1526 = vadd.s32 %v1525, 64
    %1527 = vset.pattern.permute.xlu0 %v1526
    %1528 = vperm.xlu0 %1527, %v1523
    %v1529 = vpop.permute.xlu0 %1528
    %v1530 = vlaneseq
    %v1531 = vshrl.u32 %v1530, 7
    %v1532 = vadd.s32 %v1531, 72
    %1533 = vset.pattern.permute.xlu0 %v1532
    %1534 = vperm.xlu0 %1533, %v1523
    %v1535 = vpop.permute.xlu0 %1534
    %v1536 = vperm.slane %v1360, 5
    %v1537 = vlaneseq
    %v1538 = vshrl.u32 %v1537, 7
    %v1539 = vadd.s32 %v1538, 64
    %1540 = vset.pattern.permute.xlu0 %v1539
    %1541 = vperm.xlu0 %1540, %v1536
    %v1542 = vpop.permute.xlu0 %1541
    %v1543 = vlaneseq
    %v1544 = vshrl.u32 %v1543, 7
    %v1545 = vadd.s32 %v1544, 72
    %1546 = vset.pattern.permute.xlu0 %v1545
    %1547 = vperm.xlu0 %1546, %v1536
    %v1548 = vpop.permute.xlu0 %1547
    %v1549 = vperm.slane %v1360, 6
    %v1550 = vlaneseq
    %v1551 = vshrl.u32 %v1550, 7
    %v1552 = vadd.s32 %v1551, 64
    %1553 = vset.pattern.permute.xlu0 %v1552
    %1554 = vperm.xlu0 %1553, %v1549
    %v1555 = vpop.permute.xlu0 %1554
    %v1556 = vlaneseq
    %v1557 = vshrl.u32 %v1556, 7
    %v1558 = vadd.s32 %v1557, 72
    %1559 = vset.pattern.permute.xlu0 %v1558
    %1560 = vperm.xlu0 %1559, %v1549
    %v1561 = vpop.permute.xlu0 %1560
    %v1562 = vperm.slane %v1360, 7
    %v1563 = vlaneseq
    %v1564 = vshrl.u32 %v1563, 7
    %v1565 = vadd.s32 %v1564, 64
    %1566 = vset.pattern.permute.xlu0 %v1565
    %1567 = vperm.xlu0 %1566, %v1562
    %v1568 = vpop.permute.xlu0 %1567
    %v1569 = vlaneseq
    %v1570 = vshrl.u32 %v1569, 7
    %v1571 = vadd.s32 %v1570, 72
    %1572 = vset.pattern.permute.xlu0 %v1571
    %1573 = vperm.xlu0 %1572, %v1562
    %v1574 = vpop.permute.xlu0 %1573
    %v1575 = vperm.slane %v1363, 0
    %v1576 = vlaneseq
    %v1577 = vshrl.u32 %v1576, 7
    %v1578 = vadd.s32 %v1577, 64
    %1579 = vset.pattern.permute.xlu0 %v1578
    %1580 = vperm.xlu0 %1579, %v1575
    %v1581 = vpop.permute.xlu0 %1580
    %v1582 = vlaneseq
    %v1583 = vshrl.u32 %v1582, 7
    %v1584 = vadd.s32 %v1583, 72
    %1585 = vset.pattern.permute.xlu0 %v1584
    %1586 = vperm.xlu0 %1585, %v1575
    %v1587 = vpop.permute.xlu0 %1586
    %v1588 = vperm.slane %v1363, 1
    %v1589 = vlaneseq
    %v1590 = vshrl.u32 %v1589, 7
    %v1591 = vadd.s32 %v1590, 64
    %1592 = vset.pattern.permute.xlu0 %v1591
    %1593 = vperm.xlu0 %1592, %v1588
    %v1594 = vpop.permute.xlu0 %1593
    %v1595 = vlaneseq
    %v1596 = vshrl.u32 %v1595, 7
    %v1597 = vadd.s32 %v1596, 72
    %1598 = vset.pattern.permute.xlu0 %v1597
    %1599 = vperm.xlu0 %1598, %v1588
    %v1600 = vpop.permute.xlu0 %1599
    %v1601 = vperm.slane %v1363, 2
    %v1602 = vlaneseq
    %v1603 = vshrl.u32 %v1602, 7
    %v1604 = vadd.s32 %v1603, 64
    %1605 = vset.pattern.permute.xlu0 %v1604
    %1606 = vperm.xlu0 %1605, %v1601
    %v1607 = vpop.permute.xlu0 %1606
    %v1608 = vlaneseq
    %v1609 = vshrl.u32 %v1608, 7
    %v1610 = vadd.s32 %v1609, 72
    %1611 = vset.pattern.permute.xlu0 %v1610
    %1612 = vperm.xlu0 %1611, %v1601
    %v1613 = vpop.permute.xlu0 %1612
    %v1614 = vperm.slane %v1363, 3
    %v1615 = vlaneseq
    %v1616 = vshrl.u32 %v1615, 7
    %v1617 = vadd.s32 %v1616, 64
    %1618 = vset.pattern.permute.xlu0 %v1617
    %1619 = vperm.xlu0 %1618, %v1614
    %v1620 = vpop.permute.xlu0 %1619
    %v1621 = vlaneseq
    %v1622 = vshrl.u32 %v1621, 7
    %v1623 = vadd.s32 %v1622, 72
    %1624 = vset.pattern.permute.xlu0 %v1623
    %1625 = vperm.xlu0 %1624, %v1614
    %v1626 = vpop.permute.xlu0 %1625
    %v1627 = vperm.slane %v1363, 4
    %v1628 = vlaneseq
    %v1629 = vshrl.u32 %v1628, 7
    %v1630 = vadd.s32 %v1629, 64
    %1631 = vset.pattern.permute.xlu0 %v1630
    %1632 = vperm.xlu0 %1631, %v1627
    %v1633 = vpop.permute.xlu0 %1632
    %v1634 = vlaneseq
    %v1635 = vshrl.u32 %v1634, 7
    %v1636 = vadd.s32 %v1635, 72
    %1637 = vset.pattern.permute.xlu0 %v1636
    %1638 = vperm.xlu0 %1637, %v1627
    %v1639 = vpop.permute.xlu0 %1638
    %v1640 = vperm.slane %v1363, 5
    %v1641 = vlaneseq
    %v1642 = vshrl.u32 %v1641, 7
    %v1643 = vadd.s32 %v1642, 64
    %1644 = vset.pattern.permute.xlu0 %v1643
    %1645 = vperm.xlu0 %1644, %v1640
    %v1646 = vpop.permute.xlu0 %1645
    %v1647 = vlaneseq
    %v1648 = vshrl.u32 %v1647, 7
    %v1649 = vadd.s32 %v1648, 72
    %1650 = vset.pattern.permute.xlu0 %v1649
    %1651 = vperm.xlu0 %1650, %v1640
    %v1652 = vpop.permute.xlu0 %1651
    %v1653 = vperm.slane %v1363, 6
    %v1654 = vlaneseq
    %v1655 = vshrl.u32 %v1654, 7
    %v1656 = vadd.s32 %v1655, 64
    %1657 = vset.pattern.permute.xlu0 %v1656
    %1658 = vperm.xlu0 %1657, %v1653
    %v1659 = vpop.permute.xlu0 %1658
    %v1660 = vlaneseq
    %v1661 = vshrl.u32 %v1660, 7
    %v1662 = vadd.s32 %v1661, 72
    %1663 = vset.pattern.permute.xlu0 %v1662
    %1664 = vperm.xlu0 %1663, %v1653
    %v1665 = vpop.permute.xlu0 %1664
    %v1666 = vperm.slane %v1363, 7
    %v1667 = vlaneseq
    %v1668 = vshrl.u32 %v1667, 7
    %v1669 = vadd.s32 %v1668, 64
    %1670 = vset.pattern.permute.xlu0 %v1669
    %1671 = vperm.xlu0 %1670, %v1666
    %v1672 = vpop.permute.xlu0 %1671
    %v1673 = vlaneseq
    %v1674 = vshrl.u32 %v1673, 7
    %v1675 = vadd.s32 %v1674, 72
    %1676 = vset.pattern.permute.xlu0 %v1675
    %1677 = vperm.xlu0 %1676, %v1666
    %v1678 = vpop.permute.xlu0 %1677
    %v1679 = vsel %vm185, %v1477, %v1581
    %v1680 = vsel %vm185, %v1483, %v1587
    %v1681 = vsel %vm185, %v1490, %v1594
    %v1682 = vsel %vm185, %v1496, %v1600
    %v1683 = vsel %vm185, %v1503, %v1607
    %v1684 = vsel %vm185, %v1509, %v1613
    %v1685 = vsel %vm185, %v1516, %v1620
    %v1686 = vsel %vm185, %v1522, %v1626
    %v1687 = vsel %vm185, %v1529, %v1633
    %v1688 = vsel %vm185, %v1535, %v1639
    %v1689 = vsel %vm185, %v1542, %v1646
    %v1690 = vsel %vm185, %v1548, %v1652
    %v1691 = vsel %vm185, %v1555, %v1659
    %v1692 = vsel %vm185, %v1561, %v1665
    %v1693 = vsel %vm185, %v1568, %v1672
    %v1694 = vsel %vm185, %v1574, %v1678
    %v1695 = vmul.f32 %v1398, %v1368
    %v1697 = vrot.slane %v1695, 1
    %v1698 = vrot.slane %v1695, 2
    %v1699 = vrot.slane %v1695, 3
    %v1700 = vrot.slane %v1695, 4
    %v1701 = vrot.slane %v1695, 5
    %v1702 = vrot.slane %v1695, 6
    %v1703 = vrot.slane %v1695, 7
    %v1704 = vperm.slane %v1695, 0
    %v1705 = vperm.slane %v1697, 0
    %v1706 = vperm.slane %v1698, 0
    %v1707 = vperm.slane %v1699, 0
    %v1708 = vperm.slane %v1700, 0
    %v1709 = vperm.slane %v1701, 0
    %v1710 = vperm.slane %v1702, 0
    %v1711 = vperm.slane %v1703, 0
    %v1720 = vmul.f32 %v1679, %v1704
    %v1721 = vmul.f32 %v1680, %v1704
    %v1722 = vmul.f32 %v1681, %v1705
    %v1723 = vmul.f32 %v1682, %v1705
    %v1724 = vmul.f32 %v1683, %v1706
    %v1725 = vmul.f32 %v1684, %v1706
    %v1726 = vmul.f32 %v1685, %v1707
    %v1727 = vmul.f32 %v1686, %v1707
    %v1728 = vmul.f32 %v1687, %v1708
    %v1729 = vmul.f32 %v1688, %v1708
    %v1730 = vmul.f32 %v1689, %v1709
    %v1731 = vmul.f32 %v1690, %v1709
    %v1732 = vmul.f32 %v1691, %v1710
    %v1733 = vmul.f32 %v1692, %v1710
    %v1734 = vmul.f32 %v1693, %v1711
    %v1735 = vmul.f32 %v1694, %v1711
    %v1736 = vmul.f32 %v1440, 0.0
    %v1737 = vmul.f32 %v1442, 0.0
    %v1738 = vadd.f32 %v1736, %v1720
    %v1739 = vadd.f32 %v1737, %v1721
    %1740 = vst [vmem:[#allocation3] sm:$0xff] %v1738
    %1741 = vst [vmem:[#allocation3 + $0x8] sm:$0xff] %v1739
    %v1742 = vmul.f32 %v1444, %v1738
    %v1743 = vmul.f32 %v1446, %v1739
    %v1744 = vadd.f32 %v1742, %v1722
    %v1745 = vadd.f32 %v1743, %v1723
    %1746 = vst [vmem:[%s667] sm:$0xff] %v1744
    %1747 = vst [vmem:[%s667 + $0x8] sm:$0xff] %v1745
    %v1748 = vmul.f32 %v1448, %v1744
    %v1749 = vmul.f32 %v1450, %v1745
    %v1750 = vadd.f32 %v1748, %v1724
    %v1751 = vadd.f32 %v1749, %v1725
    %1752 = vst [vmem:[%s674] sm:$0xff] %v1750
    %1753 = vst [vmem:[%s674 + $0x8] sm:$0xff] %v1751
    %v1754 = vmul.f32 %v1452, %v1750
    %v1755 = vmul.f32 %v1454, %v1751
    %v1756 = vadd.f32 %v1754, %v1726
    %v1757 = vadd.f32 %v1755, %v1727
    %1758 = vst [vmem:[%s681] sm:$0xff] %v1756
    %1759 = vst [vmem:[%s681 + $0x8] sm:$0xff] %v1757
    %v1760 = vmul.f32 %v1456, %v1756
    %v1761 = vmul.f32 %v1458, %v1757
    %v1762 = vadd.f32 %v1760, %v1728
    %v1763 = vadd.f32 %v1761, %v1729
    %1764 = vst [vmem:[%s688] sm:$0xff] %v1762
    %1765 = vst [vmem:[%s688 + $0x8] sm:$0xff] %v1763
    %v1766 = vmul.f32 %v1460, %v1762
    %v1767 = vmul.f32 %v1462, %v1763
    %v1768 = vadd.f32 %v1766, %v1730
    %v1769 = vadd.f32 %v1767, %v1731
    %1770 = vst [vmem:[%s695] sm:$0xff] %v1768
    %1771 = vst [vmem:[%s695 + $0x8] sm:$0xff] %v1769
    %v1772 = vmul.f32 %v1464, %v1768
    %v1773 = vmul.f32 %v1466, %v1769
    %v1774 = vadd.f32 %v1772, %v1732
    %v1775 = vadd.f32 %v1773, %v1733
    %1776 = vst [vmem:[%s702] sm:$0xff] %v1774
    %1777 = vst [vmem:[%s702 + $0x8] sm:$0xff] %v1775
    %v1778 = vmul.f32 %v1468, %v1774
    %v1779 = vmul.f32 %v1470, %v1775
    %v1780 = vadd.f32 %v1778, %v1734
    %v1781 = vadd.f32 %v1779, %v1735
    %1782 = vst [vmem:[%s709] sm:$0xff] %v1780
    %1783 = vst [vmem:[%s709 + $0x8] sm:$0xff] %v1781
    %v1784 = vld [vmem:[#allocation3] sm:$0xff]
    %v1785 = vld [vmem:[#allocation3 + $0x8] sm:$0xff]
    %v1786 = vld [vmem:[#allocation3 + $0x10] sm:$0xff]
    %v1787 = vld [vmem:[#allocation3 + $0x18] sm:$0xff]
    %v1788 = vld [vmem:[#allocation3 + $0x20] sm:$0xff]
    %v1789 = vld [vmem:[#allocation3 + $0x28] sm:$0xff]
    %v1790 = vld [vmem:[#allocation3 + $0x30] sm:$0xff]
    %v1791 = vld [vmem:[#allocation3 + $0x38] sm:$0xff]
    %v1792 = vld [vmem:[#allocation3 + $0x40] sm:$0xff]
    %v1793 = vld [vmem:[#allocation3 + $0x48] sm:$0xff]
    %v1794 = vld [vmem:[#allocation3 + $0x50] sm:$0xff]
    %v1795 = vld [vmem:[#allocation3 + $0x58] sm:$0xff]
    %v1796 = vld [vmem:[#allocation3 + $0x60] sm:$0xff]
    %v1797 = vld [vmem:[#allocation3 + $0x68] sm:$0xff]
    %v1798 = vld [vmem:[#allocation3 + $0x70] sm:$0xff]
    %v1799 = vld [vmem:[#allocation3 + $0x78] sm:$0xff]
    %v1800 = vlaneseq
    %v1801 = vshrl.u32 %v1800, 7
    %v1802 = vadd.s32 %v1801, 80
    %1803 = vset.pattern.permute.xlu0 %v1802
    %1804 = vperm.xlu0 %1803, %v1471
    %v1805 = vpop.permute.xlu0 %1804
    %v1806 = vlaneseq
    %v1807 = vshrl.u32 %v1806, 7
    %v1808 = vadd.s32 %v1807, 88
    %1809 = vset.pattern.permute.xlu0 %v1808
    %1810 = vperm.xlu0 %1809, %v1471
    %v1811 = vpop.permute.xlu0 %1810
    %v1812 = vlaneseq
    %v1813 = vshrl.u32 %v1812, 7
    %v1814 = vadd.s32 %v1813, 80
    %1815 = vset.pattern.permute.xlu0 %v1814
    %1816 = vperm.xlu0 %1815, %v1484
    %v1817 = vpop.permute.xlu0 %1816
    %v1818 = vlaneseq
    %v1819 = vshrl.u32 %v1818, 7
    %v1820 = vadd.s32 %v1819, 88
    %1821 = vset.pattern.permute.xlu0 %v1820
    %1822 = vperm.xlu0 %1821, %v1484
    %v1823 = vpop.permute.xlu0 %1822
    %v1824 = vlaneseq
    %v1825 = vshrl.u32 %v1824, 7
    %v1826 = vadd.s32 %v1825, 80
    %1827 = vset.pattern.permute.xlu0 %v1826
    %1828 = vperm.xlu0 %1827, %v1497
    %v1829 = vpop.permute.xlu0 %1828
    %v1830 = vlaneseq
    %v1831 = vshrl.u32 %v1830, 7
    %v1832 = vadd.s32 %v1831, 88
    %1833 = vset.pattern.permute.xlu0 %v1832
    %1834 = vperm.xlu0 %1833, %v1497
    %v1835 = vpop.permute.xlu0 %1834
    %v1836 = vlaneseq
    %v1837 = vshrl.u32 %v1836, 7
    %v1838 = vadd.s32 %v1837, 80
    %1839 = vset.pattern.permute.xlu0 %v1838
    %1840 = vperm.xlu0 %1839, %v1510
    %v1841 = vpop.permute.xlu0 %1840
    %v1842 = vlaneseq
    %v1843 = vshrl.u32 %v1842, 7
    %v1844 = vadd.s32 %v1843, 88
    %1845 = vset.pattern.permute.xlu0 %v1844
    %1846 = vperm.xlu0 %1845, %v1510
    %v1847 = vpop.permute.xlu0 %1846
    %v1848 = vlaneseq
    %v1849 = vshrl.u32 %v1848, 7
    %v1850 = vadd.s32 %v1849, 80
    %1851 = vset.pattern.permute.xlu0 %v1850
    %1852 = vperm.xlu0 %1851, %v1523
    %v1853 = vpop.permute.xlu0 %1852
    %v1854 = vlaneseq
    %v1855 = vshrl.u32 %v1854, 7
    %v1856 = vadd.s32 %v1855, 88
    %1857 = vset.pattern.permute.xlu0 %v1856
    %1858 = vperm.xlu0 %1857, %v1523
    %v1859 = vpop.permute.xlu0 %1858
    %v1860 = vlaneseq
    %v1861 = vshrl.u32 %v1860, 7
    %v1862 = vadd.s32 %v1861, 80
    %1863 = vset.pattern.permute.xlu0 %v1862
    %1864 = vperm.xlu0 %1863, %v1536
    %v1865 = vpop.permute.xlu0 %1864
    %v1866 = vlaneseq
    %v1867 = vshrl.u32 %v1866, 7
    %v1868 = vadd.s32 %v1867, 88
    %1869 = vset.pattern.permute.xlu0 %v1868
    %1870 = vperm.xlu0 %1869, %v1536
    %v1871 = vpop.permute.xlu0 %1870
    %v1872 = vlaneseq
    %v1873 = vshrl.u32 %v1872, 7
    %v1874 = vadd.s32 %v1873, 80
    %1875 = vset.pattern.permute.xlu0 %v1874
    %1876 = vperm.xlu0 %1875, %v1549
    %v1877 = vpop.permute.xlu0 %1876
    %v1878 = vlaneseq
    %v1879 = vshrl.u32 %v1878, 7
    %v1880 = vadd.s32 %v1879, 88
    %1881 = vset.pattern.permute.xlu0 %v1880
    %1882 = vperm.xlu0 %1881, %v1549
    %v1883 = vpop.permute.xlu0 %1882
    %v1884 = vlaneseq
    %v1885 = vshrl.u32 %v1884, 7
    %v1886 = vadd.s32 %v1885, 80
    %1887 = vset.pattern.permute.xlu0 %v1886
    %1888 = vperm.xlu0 %1887, %v1562
    %v1889 = vpop.permute.xlu0 %1888
    %v1890 = vlaneseq
    %v1891 = vshrl.u32 %v1890, 7
    %v1892 = vadd.s32 %v1891, 88
    %1893 = vset.pattern.permute.xlu0 %v1892
    %1894 = vperm.xlu0 %1893, %v1562
    %v1895 = vpop.permute.xlu0 %1894
    %v1896 = vlaneseq
    %v1897 = vshrl.u32 %v1896, 7
    %v1898 = vadd.s32 %v1897, 80
    %1899 = vset.pattern.permute.xlu0 %v1898
    %1900 = vperm.xlu0 %1899, %v1575
    %v1901 = vpop.permute.xlu0 %1900
    %v1902 = vlaneseq
    %v1903 = vshrl.u32 %v1902, 7
    %v1904 = vadd.s32 %v1903, 88
    %1905 = vset.pattern.permute.xlu0 %v1904
    %1906 = vperm.xlu0 %1905, %v1575
    %v1907 = vpop.permute.xlu0 %1906
    %v1908 = vlaneseq
    %v1909 = vshrl.u32 %v1908, 7
    %v1910 = vadd.s32 %v1909, 80
    %1911 = vset.pattern.permute.xlu0 %v1910
    %1912 = vperm.xlu0 %1911, %v1588
    %v1913 = vpop.permute.xlu0 %1912
    %v1914 = vlaneseq
    %v1915 = vshrl.u32 %v1914, 7
    %v1916 = vadd.s32 %v1915, 88
    %1917 = vset.pattern.permute.xlu0 %v1916
    %1918 = vperm.xlu0 %1917, %v1588
    %v1919 = vpop.permute.xlu0 %1918
    %v1920 = vlaneseq
    %v1921 = vshrl.u32 %v1920, 7
    %v1922 = vadd.s32 %v1921, 80
    %1923 = vset.pattern.permute.xlu0 %v1922
    %1924 = vperm.xlu0 %1923, %v1601
    %v1925 = vpop.permute.xlu0 %1924
    %v1926 = vlaneseq
    %v1927 = vshrl.u32 %v1926, 7
    %v1928 = vadd.s32 %v1927, 88
    %1929 = vset.pattern.permute.xlu0 %v1928
    %1930 = vperm.xlu0 %1929, %v1601
    %v1931 = vpop.permute.xlu0 %1930
    %v1932 = vlaneseq
    %v1933 = vshrl.u32 %v1932, 7
    %v1934 = vadd.s32 %v1933, 80
    %1935 = vset.pattern.permute.xlu0 %v1934
    %1936 = vperm.xlu0 %1935, %v1614
    %v1937 = vpop.permute.xlu0 %1936
    %v1938 = vlaneseq
    %v1939 = vshrl.u32 %v1938, 7
    %v1940 = vadd.s32 %v1939, 88
    %1941 = vset.pattern.permute.xlu0 %v1940
    %1942 = vperm.xlu0 %1941, %v1614
    %v1943 = vpop.permute.xlu0 %1942
    %v1944 = vlaneseq
    %v1945 = vshrl.u32 %v1944, 7
    %v1946 = vadd.s32 %v1945, 80
    %1947 = vset.pattern.permute.xlu0 %v1946
    %1948 = vperm.xlu0 %1947, %v1627
    %v1949 = vpop.permute.xlu0 %1948
    %v1950 = vlaneseq
    %v1951 = vshrl.u32 %v1950, 7
    %v1952 = vadd.s32 %v1951, 88
    %1953 = vset.pattern.permute.xlu0 %v1952
    %1954 = vperm.xlu0 %1953, %v1627
    %v1955 = vpop.permute.xlu0 %1954
    %v1956 = vlaneseq
    %v1957 = vshrl.u32 %v1956, 7
    %v1958 = vadd.s32 %v1957, 80
    %1959 = vset.pattern.permute.xlu0 %v1958
    %1960 = vperm.xlu0 %1959, %v1640
    %v1961 = vpop.permute.xlu0 %1960
    %v1962 = vlaneseq
    %v1963 = vshrl.u32 %v1962, 7
    %v1964 = vadd.s32 %v1963, 88
    %1965 = vset.pattern.permute.xlu0 %v1964
    %1966 = vperm.xlu0 %1965, %v1640
    %v1967 = vpop.permute.xlu0 %1966
    %v1968 = vlaneseq
    %v1969 = vshrl.u32 %v1968, 7
    %v1970 = vadd.s32 %v1969, 80
    %1971 = vset.pattern.permute.xlu0 %v1970
    %1972 = vperm.xlu0 %1971, %v1653
    %v1973 = vpop.permute.xlu0 %1972
    %v1974 = vlaneseq
    %v1975 = vshrl.u32 %v1974, 7
    %v1976 = vadd.s32 %v1975, 88
    %1977 = vset.pattern.permute.xlu0 %v1976
    %1978 = vperm.xlu0 %1977, %v1653
    %v1979 = vpop.permute.xlu0 %1978
    %v1980 = vlaneseq
    %v1981 = vshrl.u32 %v1980, 7
    %v1982 = vadd.s32 %v1981, 80
    %1983 = vset.pattern.permute.xlu0 %v1982
    %1984 = vperm.xlu0 %1983, %v1666
    %v1985 = vpop.permute.xlu0 %1984
    %v1986 = vlaneseq
    %v1987 = vshrl.u32 %v1986, 7
    %v1988 = vadd.s32 %v1987, 88
    %1989 = vset.pattern.permute.xlu0 %v1988
    %1990 = vperm.xlu0 %1989, %v1666
    %v1991 = vpop.permute.xlu0 %1990
    %v1992 = vsel %vm185, %v1805, %v1901
    %v1993 = vsel %vm185, %v1811, %v1907
    %v1994 = vsel %vm185, %v1817, %v1913
    %v1995 = vsel %vm185, %v1823, %v1919
    %v1996 = vsel %vm185, %v1829, %v1925
    %v1997 = vsel %vm185, %v1835, %v1931
    %v1998 = vsel %vm185, %v1841, %v1937
    %v1999 = vsel %vm185, %v1847, %v1943
    %v2000 = vsel %vm185, %v1853, %v1949
    %v2001 = vsel %vm185, %v1859, %v1955
    %v2002 = vsel %vm185, %v1865, %v1961
    %v2003 = vsel %vm185, %v1871, %v1967
    %v2004 = vsel %vm185, %v1877, %v1973
    %v2005 = vsel %vm185, %v1883, %v1979
    %v2006 = vsel %vm185, %v1889, %v1985
    %v2007 = vsel %vm185, %v1895, %v1991
    %v2008 = vmul.f32 %v1992, %v1784
    %v2009 = vmul.f32 %v1993, %v1785
    %v2010 = vmul.f32 %v1994, %v1786
    %v2011 = vmul.f32 %v1995, %v1787
    %v2012 = vmul.f32 %v1996, %v1788
    %v2013 = vmul.f32 %v1997, %v1789
    %v2014 = vmul.f32 %v1998, %v1790
    %v2015 = vmul.f32 %v1999, %v1791
    %v2016 = vmul.f32 %v2000, %v1792
    %v2017 = vmul.f32 %v2001, %v1793
    %v2018 = vmul.f32 %v2002, %v1794
    %v2019 = vmul.f32 %v2003, %v1795
    %v2020 = vmul.f32 %v2004, %v1796
    %v2021 = vmul.f32 %v2005, %v1797
    %v2022 = vmul.f32 %v2006, %v1798
    %v2023 = vmul.f32 %v2007, %v1799
    %v2024 = vadd.f32 %v2008, %v2009
    %v2025 = vrot.slane %v2024, 4
    %v2026 = vadd.f32 %v2024, %v2025
    %v2027 = vrot.slane %v2026, 2
    %v2028 = vadd.f32 %v2026, %v2027
    %v2029 = vrot.slane %v2028, 1
    %v2030 = vadd.f32 %v2028, %v2029
    %v2031 = vadd.f32 %v2010, %v2011
    %v2032 = vrot.slane %v2031, 4
    %v2033 = vadd.f32 %v2031, %v2032
    %v2034 = vrot.slane %v2033, 2
    %v2035 = vadd.f32 %v2033, %v2034
    %v2036 = vrot.slane %v2035, 1
    %v2037 = vadd.f32 %v2035, %v2036
    %v2038 = vadd.f32 %v2012, %v2013
    %v2039 = vrot.slane %v2038, 4
    %v2040 = vadd.f32 %v2038, %v2039
    %v2041 = vrot.slane %v2040, 2
    %v2042 = vadd.f32 %v2040, %v2041
    %v2043 = vrot.slane %v2042, 1
    %v2044 = vadd.f32 %v2042, %v2043
    %v2045 = vadd.f32 %v2014, %v2015
    %v2046 = vrot.slane %v2045, 4
    %v2047 = vadd.f32 %v2045, %v2046
    %v2048 = vrot.slane %v2047, 2
    %v2049 = vadd.f32 %v2047, %v2048
    %v2050 = vrot.slane %v2049, 1
    %v2051 = vadd.f32 %v2049, %v2050
    %v2052 = vadd.f32 %v2016, %v2017
    %v2053 = vrot.slane %v2052, 4
    %v2054 = vadd.f32 %v2052, %v2053
    %v2055 = vrot.slane %v2054, 2
    %v2056 = vadd.f32 %v2054, %v2055
    %v2057 = vrot.slane %v2056, 1
    %v2058 = vadd.f32 %v2056, %v2057
    %v2059 = vadd.f32 %v2018, %v2019
    %v2060 = vrot.slane %v2059, 4
    %v2061 = vadd.f32 %v2059, %v2060
    %v2062 = vrot.slane %v2061, 2
    %v2063 = vadd.f32 %v2061, %v2062
    %v2064 = vrot.slane %v2063, 1
    %v2065 = vadd.f32 %v2063, %v2064
    %v2066 = vadd.f32 %v2020, %v2021
    %v2067 = vrot.slane %v2066, 4
    %v2068 = vadd.f32 %v2066, %v2067
    %v2069 = vrot.slane %v2068, 2
    %v2070 = vadd.f32 %v2068, %v2069
    %v2071 = vrot.slane %v2070, 1
    %v2072 = vadd.f32 %v2070, %v2071
    %v2073 = vadd.f32 %v2022, %v2023
    %v2074 = vrot.slane %v2073, 4
    %v2075 = vadd.f32 %v2073, %v2074
    %v2076 = vrot.slane %v2075, 2
    %v2077 = vadd.f32 %v2075, %v2076
    %v2078 = vrot.slane %v2077, 1
    %v2079 = vadd.f32 %v2077, %v2078
    %v2080 = vperm.slane %v1178, 0
    %v2081 = vmul.f32 %v2080, %v1368
    %v2083 = vrot.slane %v2081, 1
    %v2084 = vrot.slane %v2081, 2
    %v2085 = vrot.slane %v2081, 3
    %v2086 = vrot.slane %v2081, 4
    %v2087 = vrot.slane %v2081, 5
    %v2088 = vrot.slane %v2081, 6
    %v2089 = vrot.slane %v2081, 7
    %v2098 = vadd.f32 %v2030, %v2081
    %v2099 = vadd.f32 %v2037, %v2083
    %v2100 = vadd.f32 %v2044, %v2084
    %v2101 = vadd.f32 %v2051, %v2085
    %v2102 = vadd.f32 %v2058, %v2086
    %v2103 = vadd.f32 %v2065, %v2087
    %v2104 = vadd.f32 %v2072, %v2088
    %v2105 = vadd.f32 %v2079, %v2089
    %v2106 = vxor.u32 %v1373, 2147483648
    %v2107 = vmul.f32 %v2106, 1.442695
    %v2108 = vpow.pop %v2107
    %v2109 = vadd.f32 %v2108, 1.0
    %v2110 = vrcp.pop %v2109
    %v2111 = vmul.f32 %v2109, %v2110
    %v2112 = vsub.f32 1.0, %v2111
    %v2113 = vmul.f32 %v2110, %v2112
    %v2114 = vadd.f32 %v2110, %v2113
    %vm2115 = vweird.f32 %v2109
    %vm2116 = vweird.f32 %v2110
    %vm2117 = vmor %vm2115, %vm2116
    %v2118 = vsel %vm2117, %v2110, %v2114
    %v2119 = vand.u32 2147483647, %v2109
    %vm2120 = vcmp.eq.f32.partialorder %v2119, 8.507059e+37
    %v2121 = vand.u32 %v2109, 2147483648
    %v2122 = vor.u32 1.1754944e-38, %v2121
    %v2123 = vsel %vm2120, %v2122, %v2118
    %v2124 = vmul.f32 1.0, %v2123
    %v2125 = vmul.f32 %v1373, %v2124
    %v2127 = vrot.slane %v2125, 1
    %v2128 = vrot.slane %v2125, 2
    %v2129 = vrot.slane %v2125, 3
    %v2130 = vrot.slane %v2125, 4
    %v2131 = vrot.slane %v2125, 5
    %v2132 = vrot.slane %v2125, 6
    %v2133 = vrot.slane %v2125, 7
    %v2142 = vmul.f32 %v2098, %v2125
    %v2143 = vmul.f32 %v2099, %v2127
    %v2144 = vmul.f32 %v2100, %v2128
    %v2145 = vmul.f32 %v2101, %v2129
    %v2146 = vmul.f32 %v2102, %v2130
    %v2147 = vmul.f32 %v2103, %v2131
    %v2148 = vmul.f32 %v2104, %v2132
    %v2149 = vmul.f32 %v2105, %v2133
    %v2158 = vrot.slane %v2143, 7
    %v2159 = vsel %vm1087, %v2158, %v2142
    %v2160 = vrot.slane %v2144, 6
    %v2161 = vsel %vm1090, %v2160, %v2159
    %v2162 = vrot.slane %v2145, 5
    %v2163 = vsel %vm1093, %v2162, %v2161
    %v2164 = vrot.slane %v2146, 4
    %v2165 = vsel %vm1096, %v2164, %v2163
    %v2166 = vrot.slane %v2147, 3
    %v2167 = vsel %vm1099, %v2166, %v2165
    %v2168 = vrot.slane %v2148, 2
    %v2169 = vsel %vm1102, %v2168, %v2167
    %v2170 = vrot.slane %v2149, 1
    %v2171 = vsel %vm1105, %v2170, %v2169
    %2173 = vrot.lane.b32.xlu0 %v2171, 64
    %v2174 = vpop.permute.xlu0 %2173
    %v2176 = vpack.c.bf16 %v2174, %v2171
    %v2185 = vunpack.c.l.b16 %v1157
    %v2186 = vunpack.c.l.b16 %v1158
    %v2187 = vunpack.c.l.b16 %v1159
    %v2188 = vunpack.c.l.b16 %v1160
    %v2189 = vunpack.c.l.b16 %v1161
    %v2190 = vunpack.c.l.b16 %v1162
    %v2191 = vunpack.c.l.b16 %v1163
    %v2192 = vunpack.c.l.b16 %v1164
    %v2193 = vpack.c.b16 %v2186, %v2185
    %v2194 = vpack.c.b16 %v2188, %v2187
    %v2195 = vpack.c.b16 %v2190, %v2189
    %v2196 = vpack.c.b16 %v2192, %v2191
    %v2202 = vsel %vm185, %v2176, 0
    %2204 = vmatpush.bf16.msra.mxu0 0
    %2205 = vmatpush.bf16.msra.mxu0 0
    %2206 = vmatpush.bf16.msra.mxu0 0
    %2207 = vmatpush.bf16.msra.mxu0 0
    %2208 = vmatpush.bf16.msra.mxu0 %v2196
    %2209 = vmatpush.bf16.msra.mxu0 %v2195
    %2210 = vmatpush.bf16.msra.mxu0 %v2194
    %2211 = vmatpush.bf16.msra.mxu0 %v2193
    %2212 = vmatmul.bf16.gmra.mxu0 %v2202
    %v2213 = vpop.f32.mrf.mxu0
    %v2214 = vadd.f32 0.0, %v2213
    %v2215 = vpop.f32.mrf.mxu0
    %v2216 = vadd.f32 0.0, %v2215
    %2217 = vdwg.mxu0
    %v2218 = vld [vmem:[#allocation8 + $0xc0] sm:$0x1]
    %v2219 = vld [vmem:[#allocation8 + $0xc1] sm:$0x1]
    %v2220 = vadd.f32 %v2214, %v1181
    %v2221 = vadd.f32 %v2216, %v1182
    %v2222 = vsel %vm94, %v2220, 0.0
    %2223 = vadd.xlane.f32.xlu0 %v2222
    %v2224 = vpop.xlane.xlu0 %2223
    %v2225 = vsel %vm94, %v2221, 0.0
    %2226 = vadd.xlane.f32.xlu0 %v2225
    %v2227 = vpop.xlane.xlu0 %2226
    %v2228 = vmul.f32 %v2224, %v107
    %v2229 = vmul.f32 %v2227, %v107
    %v2230 = vsub.f32 %v2220, %v2228
    %v2231 = vsub.f32 %v2221, %v2229
    %v2232 = vmul.f32 %v2230, %v2230
    %v2233 = vmul.f32 %v2231, %v2231
    %v2234 = vsel %vm94, %v2232, 0.0
    %2235 = vadd.xlane.f32.xlu0 %v2234
    %v2236 = vpop.xlane.xlu0 %2235
    %v2237 = vsel %vm94, %v2233, 0.0
    %2238 = vadd.xlane.f32.xlu0 %v2237
    %v2239 = vpop.xlane.xlu0 %2238
    %v2240 = vmul.f32 %v2236, %v107
    %v2241 = vmul.f32 %v2239, %v107
    %v2242 = vadd.f32 %v2240, 1e-05
    %v2243 = vadd.f32 %v2241, 1e-05
    %v2244 = vrsqrt.pop %v2242
    %v2245 = vmul.f32 %v2244, %v2242
    %v2246 = vmul.f32 %v2245, %v2244
    %v2247 = vmul.f32 0.5, %v2246
    %v2248 = vsub.f32 1.5, %v2247
    %v2249 = vmul.f32 %v2244, %v2248
    %vm2250 = vweird.f32 %v2242
    %vm2251 = vweird.f32 %v2244
    %vm2252 = vmor %vm2250, %vm2251
    %v2253 = vsel %vm2252, %v2244, %v2249
    %v2254 = vrsqrt.pop %v2243
    %v2255 = vmul.f32 %v2254, %v2243
    %v2256 = vmul.f32 %v2255, %v2254
    %v2257 = vmul.f32 0.5, %v2256
    %v2258 = vsub.f32 1.5, %v2257
    %v2259 = vmul.f32 %v2254, %v2258
    %vm2260 = vweird.f32 %v2243
    %vm2261 = vweird.f32 %v2254
    %vm2262 = vmor %vm2260, %vm2261
    %v2263 = vsel %vm2262, %v2254, %v2259
    %v2264 = vmul.f32 %v2230, %v2253
    %v2265 = vmul.f32 %v2231, %v2263
    %v2266 = vperm.slane %v2218, 0
    %v2267 = vmul.f32 %v2264, %v2266
    %v2268 = vmul.f32 %v2265, %v2266
    %v2269 = vperm.slane %v2219, 0
    %v2270 = vadd.f32 %v2267, %v2269
    %v2271 = vadd.f32 %v2268, %v2269
    %2273 = vrot.lane.b32.xlu0 %v2271, 32
    %v2274 = vpop.permute.xlu0 %2273
    %v2276 = vsel %vm94, %v2270, %v2274
    %2277 = vst.msk [vmem:[%s3] sm:$0xff] %vm185, %v2276
    // Predicated region
    $region26: #{mixer_model_forward.1} parent=1 // pred_check
      _
    $region27: #{mixer_model_forward.1} parent=1 // pred_check_branch
      %2279 = sbr.rel (0) target = $region29
    $region28: #{mixer_model_forward.1} parent=1 // pred_region
      _
    $region29: #{mixer_model_forward.1} parent=1 // pred_fallthru
      _
    // Predicated region
    $region30: #{mixer_model_forward.1} parent=1 // pred_check
      _
    $region31: #{mixer_model_forward.1} parent=1 // pred_check_branch
      %2281 = sbr.rel (0) target = $region33
    $region32: #{mixer_model_forward.1} parent=1 // pred_region
      _
    $region33: #{mixer_model_forward.1} parent=1 // pred_fallthru
      _
    %2282 = vsyncpa [#allocation5], 1
    %2283 = vsyncpa [#allocation7], 1

</llo_original>
